<compile_context>
chip_gen: v7x
topology: tpu7x:2x2x1
jax: 0.10.0
libtpu: 0.0.40
codegen_flags: <defaults>
</compile_context>

<pallas_src>
import functools

import jax
import jax.numpy as jnp
from jax import lax
from jax.experimental import pallas as pl
from jax.experimental.pallas import tpu as pltpu

# ---------------- small BERT config (synthetic) ----------------
B, S, H = 2, 8, 32
NUM_HEADS, HEAD_DIM = 2, 16
INTERMEDIATE = 64
NUM_LAYERS = 2
VOCAB, TYPE_VOCAB, MAX_POS = 100, 2, 32
LN_EPS = 1e-12
PARAMS_PER_LAYER = 12  # wqkv, bqkv, wo, bo, ln1g, ln1b, w1, b1, w2, b2, ln2g, ln2b


# ---------------- in-kernel helpers ----------------
def _layernorm(x, gamma, beta):
    mu = jnp.mean(x, axis=-1, keepdims=True)
    var = jnp.mean(jnp.square(x - mu), axis=-1, keepdims=True)
    return (x - mu) * lax.rsqrt(var + LN_EPS) * gamma + beta


def _gelu(x):
    # TODO(synk): tanh-approx GELU; HuggingFace BERT default is erf-GELU (differs ~1e-3).
    c = 0.7978845608028654  # sqrt(2/pi)
    return 0.5 * x * (1.0 + jnp.tanh(c * (x + 0.044715 * x * x * x)))


# ---------------- fused whole-forward kernel (one batch element per grid step) ----------------
def bert_fused_kernel(x_ref, mask_ref, eg_ref, eb_ref, *rest,
                      num_layers, num_heads, head_dim):
    o_ref = rest[-1]
    layer_refs = rest[:-1]

    # Embedding LayerNorm for this batch element.
    hidden = _layernorm(x_ref[0], eg_ref[...], eb_ref[...])          # (S, H)

    # Additive attention mask, hoisted once: reused by every layer and every head.
    neg = jnp.broadcast_to((1.0 - mask_ref[0]) * -1e9, (S, S))       # (S, S)

    scale = 1.0 / (head_dim ** 0.5)
    dn = (((1,), (1,)), ((), ()))  # q @ k^T: contract last dims

    for li in range(num_layers):
        (wqkv, bqkv, wo, bo, ln1g, ln1b,
         w1, b1, w2, b2, ln2g, ln2b) = layer_refs[li * PARAMS_PER_LAYER:
                                                  (li + 1) * PARAMS_PER_LAYER]

        # Fused QKV projection: one (S,H) x (H,3H) MXU push instead of three.
        qkv = jnp.dot(hidden, wqkv[...], preferred_element_type=jnp.float32) + bqkv[...]
        q = qkv[:, 0:H] * scale
        k = qkv[:, H:2 * H]
        v = qkv[:, 2 * H:3 * H]

        wo_full = wo[...]
        attn = jnp.zeros((S, H), jnp.float32)
        for h in range(num_heads):                                   # static, small
            sl = slice(h * head_dim, (h + 1) * head_dim)
            s = lax.dot_general(q[:, sl], k[:, sl], dn,
                                preferred_element_type=jnp.float32) + neg
            s = s - jnp.max(s, axis=-1, keepdims=True)
            p = jnp.exp(s)
            p = p * pl.reciprocal(jnp.sum(p, axis=-1, keepdims=True), approx=True)
            ctx_h = jnp.dot(p, v[:, sl], preferred_element_type=jnp.float32)
            # Sum-of-dots output projection: avoids lane-offset concatenate of heads.
            attn = attn + jnp.dot(ctx_h, wo_full[sl, :],
                                  preferred_element_type=jnp.float32)

        h1 = _layernorm(hidden + attn + bo[...], ln1g[...], ln1b[...])

        ff = jnp.dot(h1, w1[...], preferred_element_type=jnp.float32) + b1[...]
        ff = _gelu(ff)
        ff = jnp.dot(ff, w2[...], preferred_element_type=jnp.float32) + b2[...]
        hidden = _layernorm(h1 + ff, ln2g[...], ln2b[...])

    # Last 4 tokens flattened into one lane-dense (1, 4*H) = (1, 128) row.
    for t in range(4):
        o_ref[0, :, t * H:(t + 1) * H] = hidden[S - 4 + t:S - 3 + t, :]


# ---------------- pallas_call wrapper ----------------
def _full_spec(shape):
    # whole array resident in VMEM, same block for every grid step
    return pl.BlockSpec(shape, lambda b, _n=len(shape): (0,) * _n)


def bert_forward_fused(emb, mask3, params):
    eg, eb = params["emb_ln"]
    flat = [p for layer in params["layers"] for p in layer]
    kern = functools.partial(bert_fused_kernel, num_layers=NUM_LAYERS,
                             num_heads=NUM_HEADS, head_dim=HEAD_DIM)
    weight_specs = [_full_spec(p.shape) for p in (eg, eb, *flat)]
    out = pl.pallas_call(
        kern,
        out_shape=jax.ShapeDtypeStruct((B, 1, 4 * H), jnp.float32),
        grid=(B,),
        in_specs=[pl.BlockSpec((1, S, H), lambda b: (b, 0, 0)),
                  pl.BlockSpec((1, 1, S), lambda b: (b, 0, 0))] + weight_specs,
        out_specs=pl.BlockSpec((1, 1, 4 * H), lambda b: (b, 0, 0)),
        compiler_params=pltpu.CompilerParams(
            dimension_semantics=("parallel",)),  # v7x: batch sharded across 2 TCs
    )(emb, mask3, eg, eb, *flat)
    return out.reshape(B, 4 * H)


# ---------------- parameter init (deterministic, synthetic) ----------------
def init_params(key):
    def nrm(k, shape):
        return 0.02 * jax.random.normal(k, shape, jnp.float32)

    keys = jax.random.split(key, 3 + NUM_LAYERS)
    emb = (nrm(keys[0], (VOCAB, H)),        # word embeddings
           nrm(keys[1], (MAX_POS, H)),      # position embeddings
           nrm(keys[2], (TYPE_VOCAB, H)))   # token-type embeddings
    emb_ln = (jnp.ones((1, H), jnp.float32), jnp.zeros((1, H), jnp.float32))

    layers = []
    for li in range(NUM_LAYERS):
        lk = jax.random.split(keys[3 + li], 6)
        wq, wk, wv = nrm(lk[0], (H, H)), nrm(lk[1], (H, H)), nrm(lk[2], (H, H))
        wqkv = jnp.concatenate([wq, wk, wv], axis=1)           # fused QKV (H, 3H) at init
        bqkv = jnp.zeros((1, 3 * H), jnp.float32)
        layers.append((
            wqkv, bqkv,
            nrm(lk[3], (H, H)), jnp.zeros((1, H), jnp.float32),            # Wo, bo
            jnp.ones((1, H), jnp.float32), jnp.zeros((1, H), jnp.float32), # LN1
            nrm(lk[4], (H, INTERMEDIATE)), jnp.zeros((1, INTERMEDIATE), jnp.float32),  # W1, b1
            nrm(lk[5], (INTERMEDIATE, H)), jnp.zeros((1, H), jnp.float32),             # W2, b2
            jnp.ones((1, H), jnp.float32), jnp.zeros((1, H), jnp.float32), # LN2
        ))
    return {"embeddings": emb, "emb_ln": emb_ln, "layers": layers}


# ---------------- my_bert_model.forward equivalent ----------------
def my_bert_model_forward(params, input_ids, attention_mask, token_type_ids):
    we, pe, te = params["embeddings"]
    pos_ids = jnp.arange(S)
    # TODO(synk): embedding lookup is a gather; done in plain JAX (no clean tiled Pallas form at this size).
    emb = (we[input_ids] + pe[pos_ids][None, :, :] + te[token_type_ids]).astype(jnp.float32)
    mask3 = attention_mask.astype(jnp.float32).reshape(B, 1, S)
    # outputs[0] == last hidden states; last 4 seq positions flattened -> (B, 4*H),
    # computed inside the fused kernel and written lane-dense.
    return bert_forward_fused(emb, mask3, params)


if __name__ == "__main__":
    key = jax.random.PRNGKey(0)
    pkey, ikey = jax.random.split(key)
    params = init_params(pkey)

    input_ids = jax.random.randint(ikey, (B, S), 0, VOCAB, dtype=jnp.int32)
    attention_mask = jnp.ones((B, S), jnp.int32).at[1, -2:].set(0)  # exercise masking
    token_type_ids = jnp.zeros((B, S), jnp.int32)

    out = my_bert_model_forward(params, input_ids, attention_mask, token_type_ids)
    out = jax.block_until_ready(out)
    assert out.shape == (B, 4 * H), out.shape
    assert bool(jnp.all(jnp.isfinite(out)))
    print("KERNEL_OK")
</pallas_src>

<mosaic_0001>
module attributes {stable_mosaic.version = 11 : i64} {
  func.func @bert_fused_kernel(%arg0: i32, %arg1: memref<1x8x32xf32, #tpu.memory_space<vmem>>, %arg2: memref<1x1x8xf32, #tpu.memory_space<vmem>>, %arg3: memref<1x32xf32, #tpu.memory_space<vmem>>, %arg4: memref<1x32xf32, #tpu.memory_space<vmem>>, %arg5: memref<32x96xf32, #tpu.memory_space<vmem>>, %arg6: memref<1x96xf32, #tpu.memory_space<vmem>>, %arg7: memref<32x32xf32, #tpu.memory_space<vmem>>, %arg8: memref<1x32xf32, #tpu.memory_space<vmem>>, %arg9: memref<1x32xf32, #tpu.memory_space<vmem>>, %arg10: memref<1x32xf32, #tpu.memory_space<vmem>>, %arg11: memref<32x64xf32, #tpu.memory_space<vmem>>, %arg12: memref<1x64xf32, #tpu.memory_space<vmem>>, %arg13: memref<64x32xf32, #tpu.memory_space<vmem>>, %arg14: memref<1x32xf32, #tpu.memory_space<vmem>>, %arg15: memref<1x32xf32, #tpu.memory_space<vmem>>, %arg16: memref<1x32xf32, #tpu.memory_space<vmem>>, %arg17: memref<32x96xf32, #tpu.memory_space<vmem>>, %arg18: memref<1x96xf32, #tpu.memory_space<vmem>>, %arg19: memref<32x32xf32, #tpu.memory_space<vmem>>, %arg20: memref<1x32xf32, #tpu.memory_space<vmem>>, %arg21: memref<1x32xf32, #tpu.memory_space<vmem>>, %arg22: memref<1x32xf32, #tpu.memory_space<vmem>>, %arg23: memref<32x64xf32, #tpu.memory_space<vmem>>, %arg24: memref<1x64xf32, #tpu.memory_space<vmem>>, %arg25: memref<64x32xf32, #tpu.memory_space<vmem>>, %arg26: memref<1x32xf32, #tpu.memory_space<vmem>>, %arg27: memref<1x32xf32, #tpu.memory_space<vmem>>, %arg28: memref<1x32xf32, #tpu.memory_space<vmem>>, %arg29: memref<1x1x128xf32, #tpu.memory_space<vmem>>) attributes {dimension_semantics = [#tpu.dimension_semantics<parallel>], iteration_bounds = array<i64: 2>, scalar_prefetch = 0 : i64, scratch_operands = 0 : i64, tpu.core_type = #tpu.core_type<tc>, window_params = [{transform_indices = @transform_0, window_bounds = array<i64: 1, 8, 32>}, {transform_indices = @transform_1, window_bounds = array<i64: 1, 1, 8>}, {pipeline_mode = #tpu.pipeline_mode<synchronous>, transform_indices = @transform_2, window_bounds = array<i64: 1, 32>}, {pipeline_mode = #tpu.pipeline_mode<synchronous>, transform_indices = @transform_3, window_bounds = array<i64: 1, 32>}, {pipeline_mode = #tpu.pipeline_mode<synchronous>, transform_indices = @transform_4, window_bounds = array<i64: 32, 96>}, {pipeline_mode = #tpu.pipeline_mode<synchronous>, transform_indices = @transform_5, window_bounds = array<i64: 1, 96>}, {pipeline_mode = #tpu.pipeline_mode<synchronous>, transform_indices = @transform_6, window_bounds = array<i64: 32, 32>}, {pipeline_mode = #tpu.pipeline_mode<synchronous>, transform_indices = @transform_7, window_bounds = array<i64: 1, 32>}, {pipeline_mode = #tpu.pipeline_mode<synchronous>, transform_indices = @transform_8, window_bounds = array<i64: 1, 32>}, {pipeline_mode = #tpu.pipeline_mode<synchronous>, transform_indices = @transform_9, window_bounds = array<i64: 1, 32>}, {pipeline_mode = #tpu.pipeline_mode<synchronous>, transform_indices = @transform_10, window_bounds = array<i64: 32, 64>}, {pipeline_mode = #tpu.pipeline_mode<synchronous>, transform_indices = @transform_11, window_bounds = array<i64: 1, 64>}, {pipeline_mode = #tpu.pipeline_mode<synchronous>, transform_indices = @transform_12, window_bounds = array<i64: 64, 32>}, {pipeline_mode = #tpu.pipeline_mode<synchronous>, transform_indices = @transform_13, window_bounds = array<i64: 1, 32>}, {pipeline_mode = #tpu.pipeline_mode<synchronous>, transform_indices = @transform_14, window_bounds = array<i64: 1, 32>}, {pipeline_mode = #tpu.pipeline_mode<synchronous>, transform_indices = @transform_15, window_bounds = array<i64: 1, 32>}, {pipeline_mode = #tpu.pipeline_mode<synchronous>, transform_indices = @transform_16, window_bounds = array<i64: 32, 96>}, {pipeline_mode = #tpu.pipeline_mode<synchronous>, transform_indices = @transform_17, window_bounds = array<i64: 1, 96>}, {pipeline_mode = #tpu.pipeline_mode<synchronous>, transform_indices = @transform_18, window_bounds = array<i64: 32, 32>}, {pipeline_mode = #tpu.pipeline_mode<synchronous>, transform_indices = @transform_19, window_bounds = array<i64: 1, 32>}, {pipeline_mode = #tpu.pipeline_mode<synchronous>, transform_indices = @transform_20, window_bounds = array<i64: 1, 32>}, {pipeline_mode = #tpu.pipeline_mode<synchronous>, transform_indices = @transform_21, window_bounds = array<i64: 1, 32>}, {pipeline_mode = #tpu.pipeline_mode<synchronous>, transform_indices = @transform_22, window_bounds = array<i64: 32, 64>}, {pipeline_mode = #tpu.pipeline_mode<synchronous>, transform_indices = @transform_23, window_bounds = array<i64: 1, 64>}, {pipeline_mode = #tpu.pipeline_mode<synchronous>, transform_indices = @transform_24, window_bounds = array<i64: 64, 32>}, {pipeline_mode = #tpu.pipeline_mode<synchronous>, transform_indices = @transform_25, window_bounds = array<i64: 1, 32>}, {pipeline_mode = #tpu.pipeline_mode<synchronous>, transform_indices = @transform_26, window_bounds = array<i64: 1, 32>}, {pipeline_mode = #tpu.pipeline_mode<synchronous>, transform_indices = @transform_27, window_bounds = array<i64: 1, 32>}, {transform_indices = @transform_28, window_bounds = array<i64: 1, 1, 128>}]} {
    %c0 = arith.constant 0 : index
    %c0_0 = arith.constant 0 : index
    %c0_1 = arith.constant 0 : index
    %0 = vector.load %arg1[%c0, %c0_0, %c0_1] : memref<1x8x32xf32, #tpu.memory_space<vmem>>, vector<1x8x32xf32>
    %1 = vector.shape_cast %0 : vector<1x8x32xf32> to vector<8x32xf32>
    %c0_2 = arith.constant 0 : index
    %c0_3 = arith.constant 0 : index
    %2 = vector.load %arg3[%c0_2, %c0_3] : memref<1x32xf32, #tpu.memory_space<vmem>>, vector<1x32xf32>
    %c0_4 = arith.constant 0 : index
    %c0_5 = arith.constant 0 : index
    %3 = vector.load %arg4[%c0_4, %c0_5] : memref<1x32xf32, #tpu.memory_space<vmem>>, vector<1x32xf32>
    %cst = arith.constant dense<0.000000e+00> : vector<8xf32>
    %4 = vector.multi_reduction <add>, %1, %cst [1] : vector<8x32xf32> to vector<8xf32>
    %5 = vector.shape_cast %4 : vector<8xf32> to vector<8x1xf32>
    %cst_6 = arith.constant 3.200000e+01 : f32
    %6 = vector.broadcast %cst_6 : f32 to vector<8x1xf32>
    %7 = arith.divf %5, %6 : vector<8x1xf32>
    %8 = vector.broadcast %7 : vector<8x1xf32> to vector<8x32xf32>
    %9 = arith.subf %1, %8 : vector<8x32xf32>
    %10 = arith.mulf %9, %9 : vector<8x32xf32>
    %cst_7 = arith.constant dense<0.000000e+00> : vector<8xf32>
    %11 = vector.multi_reduction <add>, %10, %cst_7 [1] : vector<8x32xf32> to vector<8xf32>
    %12 = vector.shape_cast %11 : vector<8xf32> to vector<8x1xf32>
    %cst_8 = arith.constant 3.200000e+01 : f32
    %13 = vector.broadcast %cst_8 : f32 to vector<8x1xf32>
    %14 = arith.divf %12, %13 : vector<8x1xf32>
    %15 = vector.broadcast %7 : vector<8x1xf32> to vector<8x32xf32>
    %16 = arith.subf %1, %15 : vector<8x32xf32>
    %cst_9 = arith.constant 9.99999996E-13 : f32
    %17 = vector.broadcast %cst_9 : f32 to vector<8x1xf32>
    %18 = arith.addf %14, %17 : vector<8x1xf32>
    %19 = math.rsqrt %18 : vector<8x1xf32>
    %20 = vector.broadcast %19 : vector<8x1xf32> to vector<8x32xf32>
    %21 = arith.mulf %16, %20 : vector<8x32xf32>
    %22 = vector.broadcast %2 : vector<1x32xf32> to vector<8x32xf32>
    %23 = arith.mulf %21, %22 : vector<8x32xf32>
    %24 = vector.broadcast %3 : vector<1x32xf32> to vector<8x32xf32>
    %25 = arith.addf %23, %24 : vector<8x32xf32>
    %c0_10 = arith.constant 0 : index
    %c0_11 = arith.constant 0 : index
    %c0_12 = arith.constant 0 : index
    %26 = vector.load %arg2[%c0_10, %c0_11, %c0_12] : memref<1x1x8xf32, #tpu.memory_space<vmem>>, vector<1x1x8xf32>
    %27 = vector.shape_cast %26 : vector<1x1x8xf32> to vector<1x8xf32>
    %cst_13 = arith.constant 1.000000e+00 : f32
    %28 = vector.broadcast %cst_13 : f32 to vector<1x8xf32>
    %29 = arith.subf %28, %27 : vector<1x8xf32>
    %cst_14 = arith.constant -1.000000e+09 : f32
    %30 = vector.broadcast %cst_14 : f32 to vector<1x8xf32>
    %31 = arith.mulf %29, %30 : vector<1x8xf32>
    %32 = vector.shape_cast %31 : vector<1x8xf32> to vector<1x8xf32>
    %33 = vector.broadcast %32 : vector<1x8xf32> to vector<8x8xf32>
    %c0_15 = arith.constant 0 : index
    %c0_16 = arith.constant 0 : index
    %34 = vector.load %arg5[%c0_15, %c0_16] : memref<32x96xf32, #tpu.memory_space<vmem>>, vector<32x96xf32>
    %cst_17 = arith.constant dense<0.000000e+00> : vector<8x96xf32>
    %35 = tpu.matmul %25, %34, %cst_17 {dimension_numbers = #tpu.dot_dimension_numbers<[1], [0], [0], [1], [0, 0, 1, 1], [], []>} : vector<8x32xf32>, vector<32x96xf32>, vector<8x96xf32> -> vector<8x96xf32>
    %c0_18 = arith.constant 0 : index
    %c0_19 = arith.constant 0 : index
    %36 = vector.load %arg6[%c0_18, %c0_19] : memref<1x96xf32, #tpu.memory_space<vmem>>, vector<1x96xf32>
    %37 = vector.broadcast %36 : vector<1x96xf32> to vector<8x96xf32>
    %38 = arith.addf %35, %37 : vector<8x96xf32>
    %39 = vector.extract_strided_slice %38 {offsets = [0, 0], sizes = [8, 32], strides = [1, 1]} : vector<8x96xf32> to vector<8x32xf32>
    %cst_20 = arith.constant 2.500000e-01 : f32
    %40 = vector.broadcast %cst_20 : f32 to vector<8x32xf32>
    %41 = arith.mulf %39, %40 : vector<8x32xf32>
    %42 = vector.extract_strided_slice %38 {offsets = [0, 32], sizes = [8, 32], strides = [1, 1]} : vector<8x96xf32> to vector<8x32xf32>
    %43 = vector.extract_strided_slice %38 {offsets = [0, 64], sizes = [8, 32], strides = [1, 1]} : vector<8x96xf32> to vector<8x32xf32>
    %c0_21 = arith.constant 0 : index
    %c0_22 = arith.constant 0 : index
    %44 = vector.load %arg7[%c0_21, %c0_22] : memref<32x32xf32, #tpu.memory_space<vmem>>, vector<32x32xf32>
    %cst_23 = arith.constant 0.000000e+00 : f32
    %45 = vector.broadcast %cst_23 : f32 to vector<8x32xf32>
    %46 = vector.extract_strided_slice %41 {offsets = [0, 0], sizes = [8, 16], strides = [1, 1]} : vector<8x32xf32> to vector<8x16xf32>
    %47 = vector.extract_strided_slice %42 {offsets = [0, 0], sizes = [8, 16], strides = [1, 1]} : vector<8x32xf32> to vector<8x16xf32>
    %cst_24 = arith.constant dense<0.000000e+00> : vector<8x8xf32>
    %48 = tpu.matmul %46, %47, %cst_24 {dimension_numbers = #tpu.dot_dimension_numbers<[1], [1], [0], [0], [0, 0, 1, 0], [], []>} : vector<8x16xf32>, vector<8x16xf32>, vector<8x8xf32> -> vector<8x8xf32>
    %49 = arith.addf %48, %33 : vector<8x8xf32>
    %cst_25 = arith.constant dense<0xFF800000> : vector<8xf32>
    %50 = vector.multi_reduction <maximumf>, %49, %cst_25 [1] : vector<8x8xf32> to vector<8xf32>
    %51 = vector.shape_cast %50 : vector<8xf32> to vector<8x1xf32>
    %52 = vector.broadcast %51 : vector<8x1xf32> to vector<8x8xf32>
    %53 = arith.subf %49, %52 : vector<8x8xf32>
    %54 = math.exp %53 : vector<8x8xf32>
    %cst_26 = arith.constant dense<0.000000e+00> : vector<8xf32>
    %55 = vector.multi_reduction <add>, %54, %cst_26 [1] : vector<8x8xf32> to vector<8xf32>
    %56 = vector.shape_cast %55 : vector<8xf32> to vector<8x1xf32>
    %57 = tpu.reciprocal %56 {approx = true} : vector<8x1xf32> -> vector<8x1xf32>
    %58 = vector.broadcast %57 : vector<8x1xf32> to vector<8x8xf32>
    %59 = arith.mulf %54, %58 : vector<8x8xf32>
    %60 = vector.extract_strided_slice %43 {offsets = [0, 0], sizes = [8, 16], strides = [1, 1]} : vector<8x32xf32> to vector<8x16xf32>
    %cst_27 = arith.constant dense<0.000000e+00> : vector<8x16xf32>
    %61 = tpu.matmul %59, %60, %cst_27 {dimension_numbers = #tpu.dot_dimension_numbers<[1], [0], [0], [1], [0, 0, 1, 1], [], []>} : vector<8x8xf32>, vector<8x16xf32>, vector<8x16xf32> -> vector<8x16xf32>
    %62 = vector.extract_strided_slice %44 {offsets = [0, 0], sizes = [16, 32], strides = [1, 1]} : vector<32x32xf32> to vector<16x32xf32>
    %cst_28 = arith.constant dense<0.000000e+00> : vector<8x32xf32>
    %63 = tpu.matmul %61, %62, %cst_28 {dimension_numbers = #tpu.dot_dimension_numbers<[1], [0], [0], [1], [0, 0, 1, 1], [], []>} : vector<8x16xf32>, vector<16x32xf32>, vector<8x32xf32> -> vector<8x32xf32>
    %64 = arith.addf %45, %63 : vector<8x32xf32>
    %65 = vector.extract_strided_slice %41 {offsets = [0, 16], sizes = [8, 16], strides = [1, 1]} : vector<8x32xf32> to vector<8x16xf32>
    %66 = vector.extract_strided_slice %42 {offsets = [0, 16], sizes = [8, 16], strides = [1, 1]} : vector<8x32xf32> to vector<8x16xf32>
    %cst_29 = arith.constant dense<0.000000e+00> : vector<8x8xf32>
    %67 = tpu.matmul %65, %66, %cst_29 {dimension_numbers = #tpu.dot_dimension_numbers<[1], [1], [0], [0], [0, 0, 1, 0], [], []>} : vector<8x16xf32>, vector<8x16xf32>, vector<8x8xf32> -> vector<8x8xf32>
    %68 = arith.addf %67, %33 : vector<8x8xf32>
    %cst_30 = arith.constant dense<0xFF800000> : vector<8xf32>
    %69 = vector.multi_reduction <maximumf>, %68, %cst_30 [1] : vector<8x8xf32> to vector<8xf32>
    %70 = vector.shape_cast %69 : vector<8xf32> to vector<8x1xf32>
    %71 = vector.broadcast %70 : vector<8x1xf32> to vector<8x8xf32>
    %72 = arith.subf %68, %71 : vector<8x8xf32>
    %73 = math.exp %72 : vector<8x8xf32>
    %cst_31 = arith.constant dense<0.000000e+00> : vector<8xf32>
    %74 = vector.multi_reduction <add>, %73, %cst_31 [1] : vector<8x8xf32> to vector<8xf32>
    %75 = vector.shape_cast %74 : vector<8xf32> to vector<8x1xf32>
    %76 = tpu.reciprocal %75 {approx = true} : vector<8x1xf32> -> vector<8x1xf32>
    %77 = vector.broadcast %76 : vector<8x1xf32> to vector<8x8xf32>
    %78 = arith.mulf %73, %77 : vector<8x8xf32>
    %79 = vector.extract_strided_slice %43 {offsets = [0, 16], sizes = [8, 16], strides = [1, 1]} : vector<8x32xf32> to vector<8x16xf32>
    %cst_32 = arith.constant dense<0.000000e+00> : vector<8x16xf32>
    %80 = tpu.matmul %78, %79, %cst_32 {dimension_numbers = #tpu.dot_dimension_numbers<[1], [0], [0], [1], [0, 0, 1, 1], [], []>} : vector<8x8xf32>, vector<8x16xf32>, vector<8x16xf32> -> vector<8x16xf32>
    %81 = vector.extract_strided_slice %44 {offsets = [16, 0], sizes = [16, 32], strides = [1, 1]} : vector<32x32xf32> to vector<16x32xf32>
    %cst_33 = arith.constant dense<0.000000e+00> : vector<8x32xf32>
    %82 = tpu.matmul %80, %81, %cst_33 {dimension_numbers = #tpu.dot_dimension_numbers<[1], [0], [0], [1], [0, 0, 1, 1], [], []>} : vector<8x16xf32>, vector<16x32xf32>, vector<8x32xf32> -> vector<8x32xf32>
    %83 = arith.addf %64, %82 : vector<8x32xf32>
    %84 = arith.addf %25, %83 : vector<8x32xf32>
    %c0_34 = arith.constant 0 : index
    %c0_35 = arith.constant 0 : index
    %85 = vector.load %arg8[%c0_34, %c0_35] : memref<1x32xf32, #tpu.memory_space<vmem>>, vector<1x32xf32>
    %86 = vector.broadcast %85 : vector<1x32xf32> to vector<8x32xf32>
    %87 = arith.addf %84, %86 : vector<8x32xf32>
    %c0_36 = arith.constant 0 : index
    %c0_37 = arith.constant 0 : index
    %88 = vector.load %arg9[%c0_36, %c0_37] : memref<1x32xf32, #tpu.memory_space<vmem>>, vector<1x32xf32>
    %c0_38 = arith.constant 0 : index
    %c0_39 = arith.constant 0 : index
    %89 = vector.load %arg10[%c0_38, %c0_39] : memref<1x32xf32, #tpu.memory_space<vmem>>, vector<1x32xf32>
    %cst_40 = arith.constant dense<0.000000e+00> : vector<8xf32>
    %90 = vector.multi_reduction <add>, %87, %cst_40 [1] : vector<8x32xf32> to vector<8xf32>
    %91 = vector.shape_cast %90 : vector<8xf32> to vector<8x1xf32>
    %cst_41 = arith.constant 3.200000e+01 : f32
    %92 = vector.broadcast %cst_41 : f32 to vector<8x1xf32>
    %93 = arith.divf %91, %92 : vector<8x1xf32>
    %94 = vector.broadcast %93 : vector<8x1xf32> to vector<8x32xf32>
    %95 = arith.subf %87, %94 : vector<8x32xf32>
    %96 = arith.mulf %95, %95 : vector<8x32xf32>
    %cst_42 = arith.constant dense<0.000000e+00> : vector<8xf32>
    %97 = vector.multi_reduction <add>, %96, %cst_42 [1] : vector<8x32xf32> to vector<8xf32>
    %98 = vector.shape_cast %97 : vector<8xf32> to vector<8x1xf32>
    %cst_43 = arith.constant 3.200000e+01 : f32
    %99 = vector.broadcast %cst_43 : f32 to vector<8x1xf32>
    %100 = arith.divf %98, %99 : vector<8x1xf32>
    %101 = vector.broadcast %93 : vector<8x1xf32> to vector<8x32xf32>
    %102 = arith.subf %87, %101 : vector<8x32xf32>
    %cst_44 = arith.constant 9.99999996E-13 : f32
    %103 = vector.broadcast %cst_44 : f32 to vector<8x1xf32>
    %104 = arith.addf %100, %103 : vector<8x1xf32>
    %105 = math.rsqrt %104 : vector<8x1xf32>
    %106 = vector.broadcast %105 : vector<8x1xf32> to vector<8x32xf32>
    %107 = arith.mulf %102, %106 : vector<8x32xf32>
    %108 = vector.broadcast %88 : vector<1x32xf32> to vector<8x32xf32>
    %109 = arith.mulf %107, %108 : vector<8x32xf32>
    %110 = vector.broadcast %89 : vector<1x32xf32> to vector<8x32xf32>
    %111 = arith.addf %109, %110 : vector<8x32xf32>
    %c0_45 = arith.constant 0 : index
    %c0_46 = arith.constant 0 : index
    %112 = vector.load %arg11[%c0_45, %c0_46] : memref<32x64xf32, #tpu.memory_space<vmem>>, vector<32x64xf32>
    %cst_47 = arith.constant dense<0.000000e+00> : vector<8x64xf32>
    %113 = tpu.matmul %111, %112, %cst_47 {dimension_numbers = #tpu.dot_dimension_numbers<[1], [0], [0], [1], [0, 0, 1, 1], [], []>} : vector<8x32xf32>, vector<32x64xf32>, vector<8x64xf32> -> vector<8x64xf32>
    %c0_48 = arith.constant 0 : index
    %c0_49 = arith.constant 0 : index
    %114 = vector.load %arg12[%c0_48, %c0_49] : memref<1x64xf32, #tpu.memory_space<vmem>>, vector<1x64xf32>
    %115 = vector.broadcast %114 : vector<1x64xf32> to vector<8x64xf32>
    %116 = arith.addf %113, %115 : vector<8x64xf32>
    %cst_50 = arith.constant 5.000000e-01 : f32
    %117 = vector.broadcast %cst_50 : f32 to vector<8x64xf32>
    %118 = arith.mulf %117, %116 : vector<8x64xf32>
    %cst_51 = arith.constant 4.471500e-02 : f32
    %119 = vector.broadcast %cst_51 : f32 to vector<8x64xf32>
    %120 = arith.mulf %119, %116 : vector<8x64xf32>
    %121 = arith.mulf %120, %116 : vector<8x64xf32>
    %122 = arith.mulf %121, %116 : vector<8x64xf32>
    %123 = arith.addf %116, %122 : vector<8x64xf32>
    %cst_52 = arith.constant 0.797884583 : f32
    %124 = vector.broadcast %cst_52 : f32 to vector<8x64xf32>
    %125 = arith.mulf %124, %123 : vector<8x64xf32>
    %126 = math.tanh %125 : vector<8x64xf32>
    %cst_53 = arith.constant 1.000000e+00 : f32
    %127 = vector.broadcast %cst_53 : f32 to vector<8x64xf32>
    %128 = arith.addf %127, %126 : vector<8x64xf32>
    %129 = arith.mulf %118, %128 : vector<8x64xf32>
    %c0_54 = arith.constant 0 : index
    %c0_55 = arith.constant 0 : index
    %130 = vector.load %arg13[%c0_54, %c0_55] : memref<64x32xf32, #tpu.memory_space<vmem>>, vector<64x32xf32>
    %cst_56 = arith.constant dense<0.000000e+00> : vector<8x32xf32>
    %131 = tpu.matmul %129, %130, %cst_56 {dimension_numbers = #tpu.dot_dimension_numbers<[1], [0], [0], [1], [0, 0, 1, 1], [], []>} : vector<8x64xf32>, vector<64x32xf32>, vector<8x32xf32> -> vector<8x32xf32>
    %c0_57 = arith.constant 0 : index
    %c0_58 = arith.constant 0 : index
    %132 = vector.load %arg14[%c0_57, %c0_58] : memref<1x32xf32, #tpu.memory_space<vmem>>, vector<1x32xf32>
    %133 = vector.broadcast %132 : vector<1x32xf32> to vector<8x32xf32>
    %134 = arith.addf %131, %133 : vector<8x32xf32>
    %135 = arith.addf %111, %134 : vector<8x32xf32>
    %c0_59 = arith.constant 0 : index
    %c0_60 = arith.constant 0 : index
    %136 = vector.load %arg15[%c0_59, %c0_60] : memref<1x32xf32, #tpu.memory_space<vmem>>, vector<1x32xf32>
    %c0_61 = arith.constant 0 : index
    %c0_62 = arith.constant 0 : index
    %137 = vector.load %arg16[%c0_61, %c0_62] : memref<1x32xf32, #tpu.memory_space<vmem>>, vector<1x32xf32>
    %cst_63 = arith.constant dense<0.000000e+00> : vector<8xf32>
    %138 = vector.multi_reduction <add>, %135, %cst_63 [1] : vector<8x32xf32> to vector<8xf32>
    %139 = vector.shape_cast %138 : vector<8xf32> to vector<8x1xf32>
    %cst_64 = arith.constant 3.200000e+01 : f32
    %140 = vector.broadcast %cst_64 : f32 to vector<8x1xf32>
    %141 = arith.divf %139, %140 : vector<8x1xf32>
    %142 = vector.broadcast %141 : vector<8x1xf32> to vector<8x32xf32>
    %143 = arith.subf %135, %142 : vector<8x32xf32>
    %144 = arith.mulf %143, %143 : vector<8x32xf32>
    %cst_65 = arith.constant dense<0.000000e+00> : vector<8xf32>
    %145 = vector.multi_reduction <add>, %144, %cst_65 [1] : vector<8x32xf32> to vector<8xf32>
    %146 = vector.shape_cast %145 : vector<8xf32> to vector<8x1xf32>
    %cst_66 = arith.constant 3.200000e+01 : f32
    %147 = vector.broadcast %cst_66 : f32 to vector<8x1xf32>
    %148 = arith.divf %146, %147 : vector<8x1xf32>
    %149 = vector.broadcast %141 : vector<8x1xf32> to vector<8x32xf32>
    %150 = arith.subf %135, %149 : vector<8x32xf32>
    %cst_67 = arith.constant 9.99999996E-13 : f32
    %151 = vector.broadcast %cst_67 : f32 to vector<8x1xf32>
    %152 = arith.addf %148, %151 : vector<8x1xf32>
    %153 = math.rsqrt %152 : vector<8x1xf32>
    %154 = vector.broadcast %153 : vector<8x1xf32> to vector<8x32xf32>
    %155 = arith.mulf %150, %154 : vector<8x32xf32>
    %156 = vector.broadcast %136 : vector<1x32xf32> to vector<8x32xf32>
    %157 = arith.mulf %155, %156 : vector<8x32xf32>
    %158 = vector.broadcast %137 : vector<1x32xf32> to vector<8x32xf32>
    %159 = arith.addf %157, %158 : vector<8x32xf32>
    %c0_68 = arith.constant 0 : index
    %c0_69 = arith.constant 0 : index
    %160 = vector.load %arg17[%c0_68, %c0_69] : memref<32x96xf32, #tpu.memory_space<vmem>>, vector<32x96xf32>
    %cst_70 = arith.constant dense<0.000000e+00> : vector<8x96xf32>
    %161 = tpu.matmul %159, %160, %cst_70 {dimension_numbers = #tpu.dot_dimension_numbers<[1], [0], [0], [1], [0, 0, 1, 1], [], []>} : vector<8x32xf32>, vector<32x96xf32>, vector<8x96xf32> -> vector<8x96xf32>
    %c0_71 = arith.constant 0 : index
    %c0_72 = arith.constant 0 : index
    %162 = vector.load %arg18[%c0_71, %c0_72] : memref<1x96xf32, #tpu.memory_space<vmem>>, vector<1x96xf32>
    %163 = vector.broadcast %162 : vector<1x96xf32> to vector<8x96xf32>
    %164 = arith.addf %161, %163 : vector<8x96xf32>
    %165 = vector.extract_strided_slice %164 {offsets = [0, 0], sizes = [8, 32], strides = [1, 1]} : vector<8x96xf32> to vector<8x32xf32>
    %cst_73 = arith.constant 2.500000e-01 : f32
    %166 = vector.broadcast %cst_73 : f32 to vector<8x32xf32>
    %167 = arith.mulf %165, %166 : vector<8x32xf32>
    %168 = vector.extract_strided_slice %164 {offsets = [0, 32], sizes = [8, 32], strides = [1, 1]} : vector<8x96xf32> to vector<8x32xf32>
    %169 = vector.extract_strided_slice %164 {offsets = [0, 64], sizes = [8, 32], strides = [1, 1]} : vector<8x96xf32> to vector<8x32xf32>
    %c0_74 = arith.constant 0 : index
    %c0_75 = arith.constant 0 : index
    %170 = vector.load %arg19[%c0_74, %c0_75] : memref<32x32xf32, #tpu.memory_space<vmem>>, vector<32x32xf32>
    %cst_76 = arith.constant 0.000000e+00 : f32
    %171 = vector.broadcast %cst_76 : f32 to vector<8x32xf32>
    %172 = vector.extract_strided_slice %167 {offsets = [0, 0], sizes = [8, 16], strides = [1, 1]} : vector<8x32xf32> to vector<8x16xf32>
    %173 = vector.extract_strided_slice %168 {offsets = [0, 0], sizes = [8, 16], strides = [1, 1]} : vector<8x32xf32> to vector<8x16xf32>
    %cst_77 = arith.constant dense<0.000000e+00> : vector<8x8xf32>
    %174 = tpu.matmul %172, %173, %cst_77 {dimension_numbers = #tpu.dot_dimension_numbers<[1], [1], [0], [0], [0, 0, 1, 0], [], []>} : vector<8x16xf32>, vector<8x16xf32>, vector<8x8xf32> -> vector<8x8xf32>
    %175 = arith.addf %174, %33 : vector<8x8xf32>
    %cst_78 = arith.constant dense<0xFF800000> : vector<8xf32>
    %176 = vector.multi_reduction <maximumf>, %175, %cst_78 [1] : vector<8x8xf32> to vector<8xf32>
    %177 = vector.shape_cast %176 : vector<8xf32> to vector<8x1xf32>
    %178 = vector.broadcast %177 : vector<8x1xf32> to vector<8x8xf32>
    %179 = arith.subf %175, %178 : vector<8x8xf32>
    %180 = math.exp %179 : vector<8x8xf32>
    %cst_79 = arith.constant dense<0.000000e+00> : vector<8xf32>
    %181 = vector.multi_reduction <add>, %180, %cst_79 [1] : vector<8x8xf32> to vector<8xf32>
    %182 = vector.shape_cast %181 : vector<8xf32> to vector<8x1xf32>
    %183 = tpu.reciprocal %182 {approx = true} : vector<8x1xf32> -> vector<8x1xf32>
    %184 = vector.broadcast %183 : vector<8x1xf32> to vector<8x8xf32>
    %185 = arith.mulf %180, %184 : vector<8x8xf32>
    %186 = vector.extract_strided_slice %169 {offsets = [0, 0], sizes = [8, 16], strides = [1, 1]} : vector<8x32xf32> to vector<8x16xf32>
    %cst_80 = arith.constant dense<0.000000e+00> : vector<8x16xf32>
    %187 = tpu.matmul %185, %186, %cst_80 {dimension_numbers = #tpu.dot_dimension_numbers<[1], [0], [0], [1], [0, 0, 1, 1], [], []>} : vector<8x8xf32>, vector<8x16xf32>, vector<8x16xf32> -> vector<8x16xf32>
    %188 = vector.extract_strided_slice %170 {offsets = [0, 0], sizes = [16, 32], strides = [1, 1]} : vector<32x32xf32> to vector<16x32xf32>
    %cst_81 = arith.constant dense<0.000000e+00> : vector<8x32xf32>
    %189 = tpu.matmul %187, %188, %cst_81 {dimension_numbers = #tpu.dot_dimension_numbers<[1], [0], [0], [1], [0, 0, 1, 1], [], []>} : vector<8x16xf32>, vector<16x32xf32>, vector<8x32xf32> -> vector<8x32xf32>
    %190 = arith.addf %171, %189 : vector<8x32xf32>
    %191 = vector.extract_strided_slice %167 {offsets = [0, 16], sizes = [8, 16], strides = [1, 1]} : vector<8x32xf32> to vector<8x16xf32>
    %192 = vector.extract_strided_slice %168 {offsets = [0, 16], sizes = [8, 16], strides = [1, 1]} : vector<8x32xf32> to vector<8x16xf32>
    %cst_82 = arith.constant dense<0.000000e+00> : vector<8x8xf32>
    %193 = tpu.matmul %191, %192, %cst_82 {dimension_numbers = #tpu.dot_dimension_numbers<[1], [1], [0], [0], [0, 0, 1, 0], [], []>} : vector<8x16xf32>, vector<8x16xf32>, vector<8x8xf32> -> vector<8x8xf32>
    %194 = arith.addf %193, %33 : vector<8x8xf32>
    %cst_83 = arith.constant dense<0xFF800000> : vector<8xf32>
    %195 = vector.multi_reduction <maximumf>, %194, %cst_83 [1] : vector<8x8xf32> to vector<8xf32>
    %196 = vector.shape_cast %195 : vector<8xf32> to vector<8x1xf32>
    %197 = vector.broadcast %196 : vector<8x1xf32> to vector<8x8xf32>
    %198 = arith.subf %194, %197 : vector<8x8xf32>
    %199 = math.exp %198 : vector<8x8xf32>
    %cst_84 = arith.constant dense<0.000000e+00> : vector<8xf32>
    %200 = vector.multi_reduction <add>, %199, %cst_84 [1] : vector<8x8xf32> to vector<8xf32>
    %201 = vector.shape_cast %200 : vector<8xf32> to vector<8x1xf32>
    %202 = tpu.reciprocal %201 {approx = true} : vector<8x1xf32> -> vector<8x1xf32>
    %203 = vector.broadcast %202 : vector<8x1xf32> to vector<8x8xf32>
    %204 = arith.mulf %199, %203 : vector<8x8xf32>
    %205 = vector.extract_strided_slice %169 {offsets = [0, 16], sizes = [8, 16], strides = [1, 1]} : vector<8x32xf32> to vector<8x16xf32>
    %cst_85 = arith.constant dense<0.000000e+00> : vector<8x16xf32>
    %206 = tpu.matmul %204, %205, %cst_85 {dimension_numbers = #tpu.dot_dimension_numbers<[1], [0], [0], [1], [0, 0, 1, 1], [], []>} : vector<8x8xf32>, vector<8x16xf32>, vector<8x16xf32> -> vector<8x16xf32>
    %207 = vector.extract_strided_slice %170 {offsets = [16, 0], sizes = [16, 32], strides = [1, 1]} : vector<32x32xf32> to vector<16x32xf32>
    %cst_86 = arith.constant dense<0.000000e+00> : vector<8x32xf32>
    %208 = tpu.matmul %206, %207, %cst_86 {dimension_numbers = #tpu.dot_dimension_numbers<[1], [0], [0], [1], [0, 0, 1, 1], [], []>} : vector<8x16xf32>, vector<16x32xf32>, vector<8x32xf32> -> vector<8x32xf32>
    %209 = arith.addf %190, %208 : vector<8x32xf32>
    %210 = arith.addf %159, %209 : vector<8x32xf32>
    %c0_87 = arith.constant 0 : index
    %c0_88 = arith.constant 0 : index
    %211 = vector.load %arg20[%c0_87, %c0_88] : memref<1x32xf32, #tpu.memory_space<vmem>>, vector<1x32xf32>
    %212 = vector.broadcast %211 : vector<1x32xf32> to vector<8x32xf32>
    %213 = arith.addf %210, %212 : vector<8x32xf32>
    %c0_89 = arith.constant 0 : index
    %c0_90 = arith.constant 0 : index
    %214 = vector.load %arg21[%c0_89, %c0_90] : memref<1x32xf32, #tpu.memory_space<vmem>>, vector<1x32xf32>
    %c0_91 = arith.constant 0 : index
    %c0_92 = arith.constant 0 : index
    %215 = vector.load %arg22[%c0_91, %c0_92] : memref<1x32xf32, #tpu.memory_space<vmem>>, vector<1x32xf32>
    %cst_93 = arith.constant dense<0.000000e+00> : vector<8xf32>
    %216 = vector.multi_reduction <add>, %213, %cst_93 [1] : vector<8x32xf32> to vector<8xf32>
    %217 = vector.shape_cast %216 : vector<8xf32> to vector<8x1xf32>
    %cst_94 = arith.constant 3.200000e+01 : f32
    %218 = vector.broadcast %cst_94 : f32 to vector<8x1xf32>
    %219 = arith.divf %217, %218 : vector<8x1xf32>
    %220 = vector.broadcast %219 : vector<8x1xf32> to vector<8x32xf32>
    %221 = arith.subf %213, %220 : vector<8x32xf32>
    %222 = arith.mulf %221, %221 : vector<8x32xf32>
    %cst_95 = arith.constant dense<0.000000e+00> : vector<8xf32>
    %223 = vector.multi_reduction <add>, %222, %cst_95 [1] : vector<8x32xf32> to vector<8xf32>
    %224 = vector.shape_cast %223 : vector<8xf32> to vector<8x1xf32>
    %cst_96 = arith.constant 3.200000e+01 : f32
    %225 = vector.broadcast %cst_96 : f32 to vector<8x1xf32>
    %226 = arith.divf %224, %225 : vector<8x1xf32>
    %227 = vector.broadcast %219 : vector<8x1xf32> to vector<8x32xf32>
    %228 = arith.subf %213, %227 : vector<8x32xf32>
    %cst_97 = arith.constant 9.99999996E-13 : f32
    %229 = vector.broadcast %cst_97 : f32 to vector<8x1xf32>
    %230 = arith.addf %226, %229 : vector<8x1xf32>
    %231 = math.rsqrt %230 : vector<8x1xf32>
    %232 = vector.broadcast %231 : vector<8x1xf32> to vector<8x32xf32>
    %233 = arith.mulf %228, %232 : vector<8x32xf32>
    %234 = vector.broadcast %214 : vector<1x32xf32> to vector<8x32xf32>
    %235 = arith.mulf %233, %234 : vector<8x32xf32>
    %236 = vector.broadcast %215 : vector<1x32xf32> to vector<8x32xf32>
    %237 = arith.addf %235, %236 : vector<8x32xf32>
    %c0_98 = arith.constant 0 : index
    %c0_99 = arith.constant 0 : index
    %238 = vector.load %arg23[%c0_98, %c0_99] : memref<32x64xf32, #tpu.memory_space<vmem>>, vector<32x64xf32>
    %cst_100 = arith.constant dense<0.000000e+00> : vector<8x64xf32>
    %239 = tpu.matmul %237, %238, %cst_100 {dimension_numbers = #tpu.dot_dimension_numbers<[1], [0], [0], [1], [0, 0, 1, 1], [], []>} : vector<8x32xf32>, vector<32x64xf32>, vector<8x64xf32> -> vector<8x64xf32>
    %c0_101 = arith.constant 0 : index
    %c0_102 = arith.constant 0 : index
    %240 = vector.load %arg24[%c0_101, %c0_102] : memref<1x64xf32, #tpu.memory_space<vmem>>, vector<1x64xf32>
    %241 = vector.broadcast %240 : vector<1x64xf32> to vector<8x64xf32>
    %242 = arith.addf %239, %241 : vector<8x64xf32>
    %cst_103 = arith.constant 5.000000e-01 : f32
    %243 = vector.broadcast %cst_103 : f32 to vector<8x64xf32>
    %244 = arith.mulf %243, %242 : vector<8x64xf32>
    %cst_104 = arith.constant 4.471500e-02 : f32
    %245 = vector.broadcast %cst_104 : f32 to vector<8x64xf32>
    %246 = arith.mulf %245, %242 : vector<8x64xf32>
    %247 = arith.mulf %246, %242 : vector<8x64xf32>
    %248 = arith.mulf %247, %242 : vector<8x64xf32>
    %249 = arith.addf %242, %248 : vector<8x64xf32>
    %cst_105 = arith.constant 0.797884583 : f32
    %250 = vector.broadcast %cst_105 : f32 to vector<8x64xf32>
    %251 = arith.mulf %250, %249 : vector<8x64xf32>
    %252 = math.tanh %251 : vector<8x64xf32>
    %cst_106 = arith.constant 1.000000e+00 : f32
    %253 = vector.broadcast %cst_106 : f32 to vector<8x64xf32>
    %254 = arith.addf %253, %252 : vector<8x64xf32>
    %255 = arith.mulf %244, %254 : vector<8x64xf32>
    %c0_107 = arith.constant 0 : index
    %c0_108 = arith.constant 0 : index
    %256 = vector.load %arg25[%c0_107, %c0_108] : memref<64x32xf32, #tpu.memory_space<vmem>>, vector<64x32xf32>
    %cst_109 = arith.constant dense<0.000000e+00> : vector<8x32xf32>
    %257 = tpu.matmul %255, %256, %cst_109 {dimension_numbers = #tpu.dot_dimension_numbers<[1], [0], [0], [1], [0, 0, 1, 1], [], []>} : vector<8x64xf32>, vector<64x32xf32>, vector<8x32xf32> -> vector<8x32xf32>
    %c0_110 = arith.constant 0 : index
    %c0_111 = arith.constant 0 : index
    %258 = vector.load %arg26[%c0_110, %c0_111] : memref<1x32xf32, #tpu.memory_space<vmem>>, vector<1x32xf32>
    %259 = vector.broadcast %258 : vector<1x32xf32> to vector<8x32xf32>
    %260 = arith.addf %257, %259 : vector<8x32xf32>
    %261 = arith.addf %237, %260 : vector<8x32xf32>
    %c0_112 = arith.constant 0 : index
    %c0_113 = arith.constant 0 : index
    %262 = vector.load %arg27[%c0_112, %c0_113] : memref<1x32xf32, #tpu.memory_space<vmem>>, vector<1x32xf32>
    %c0_114 = arith.constant 0 : index
    %c0_115 = arith.constant 0 : index
    %263 = vector.load %arg28[%c0_114, %c0_115] : memref<1x32xf32, #tpu.memory_space<vmem>>, vector<1x32xf32>
    %cst_116 = arith.constant dense<0.000000e+00> : vector<8xf32>
    %264 = vector.multi_reduction <add>, %261, %cst_116 [1] : vector<8x32xf32> to vector<8xf32>
    %265 = vector.shape_cast %264 : vector<8xf32> to vector<8x1xf32>
    %cst_117 = arith.constant 3.200000e+01 : f32
    %266 = vector.broadcast %cst_117 : f32 to vector<8x1xf32>
    %267 = arith.divf %265, %266 : vector<8x1xf32>
    %268 = vector.broadcast %267 : vector<8x1xf32> to vector<8x32xf32>
    %269 = arith.subf %261, %268 : vector<8x32xf32>
    %270 = arith.mulf %269, %269 : vector<8x32xf32>
    %cst_118 = arith.constant dense<0.000000e+00> : vector<8xf32>
    %271 = vector.multi_reduction <add>, %270, %cst_118 [1] : vector<8x32xf32> to vector<8xf32>
    %272 = vector.shape_cast %271 : vector<8xf32> to vector<8x1xf32>
    %cst_119 = arith.constant 3.200000e+01 : f32
    %273 = vector.broadcast %cst_119 : f32 to vector<8x1xf32>
    %274 = arith.divf %272, %273 : vector<8x1xf32>
    %275 = vector.broadcast %267 : vector<8x1xf32> to vector<8x32xf32>
    %276 = arith.subf %261, %275 : vector<8x32xf32>
    %cst_120 = arith.constant 9.99999996E-13 : f32
    %277 = vector.broadcast %cst_120 : f32 to vector<8x1xf32>
    %278 = arith.addf %274, %277 : vector<8x1xf32>
    %279 = math.rsqrt %278 : vector<8x1xf32>
    %280 = vector.broadcast %279 : vector<8x1xf32> to vector<8x32xf32>
    %281 = arith.mulf %276, %280 : vector<8x32xf32>
    %282 = vector.broadcast %262 : vector<1x32xf32> to vector<8x32xf32>
    %283 = arith.mulf %281, %282 : vector<8x32xf32>
    %284 = vector.broadcast %263 : vector<1x32xf32> to vector<8x32xf32>
    %285 = arith.addf %283, %284 : vector<8x32xf32>
    %286 = vector.extract_strided_slice %285 {offsets = [4, 0], sizes = [1, 32], strides = [1, 1]} : vector<8x32xf32> to vector<1x32xf32>
    %c0_121 = arith.constant 0 : index
    %c0_122 = arith.constant 0 : index
    %c0_123 = arith.constant 0 : index
    %287 = vector.load %arg29[%c0_121, %c0_122, %c0_123] : memref<1x1x128xf32, #tpu.memory_space<vmem>>, vector<1x1x32xf32>
    %288 = vector.shape_cast %287 : vector<1x1x32xf32> to vector<1x32xf32>
    %289 = vector.shape_cast %286 : vector<1x32xf32> to vector<1x1x32xf32>
    tpu.vector_store %arg29[%c0_121, %c0_122, %c0_123], %289 {strides = array<i32>} : memref<1x1x128xf32, #tpu.memory_space<vmem>>, vector<1x1x32xf32>,
    %290 = vector.extract_strided_slice %285 {offsets = [5, 0], sizes = [1, 32], strides = [1, 1]} : vector<8x32xf32> to vector<1x32xf32>
    %c0_124 = arith.constant 0 : index
    %c0_125 = arith.constant 0 : index
    %c32 = arith.constant 32 : index
    %291 = vector.load %arg29[%c0_124, %c0_125, %c32] : memref<1x1x128xf32, #tpu.memory_space<vmem>>, vector<1x1x32xf32>
    %292 = vector.shape_cast %291 : vector<1x1x32xf32> to vector<1x32xf32>
    %293 = vector.shape_cast %290 : vector<1x32xf32> to vector<1x1x32xf32>
    tpu.vector_store %arg29[%c0_124, %c0_125, %c32], %293 {strides = array<i32>} : memref<1x1x128xf32, #tpu.memory_space<vmem>>, vector<1x1x32xf32>,
    %294 = vector.extract_strided_slice %285 {offsets = [6, 0], sizes = [1, 32], strides = [1, 1]} : vector<8x32xf32> to vector<1x32xf32>
    %c0_126 = arith.constant 0 : index
    %c0_127 = arith.constant 0 : index
    %c64 = arith.constant 64 : index
    %295 = vector.load %arg29[%c0_126, %c0_127, %c64] : memref<1x1x128xf32, #tpu.memory_space<vmem>>, vector<1x1x32xf32>
    %296 = vector.shape_cast %295 : vector<1x1x32xf32> to vector<1x32xf32>
    %297 = vector.shape_cast %294 : vector<1x32xf32> to vector<1x1x32xf32>
    tpu.vector_store %arg29[%c0_126, %c0_127, %c64], %297 {strides = array<i32>} : memref<1x1x128xf32, #tpu.memory_space<vmem>>, vector<1x1x32xf32>,
    %298 = vector.extract_strided_slice %285 {offsets = [7, 0], sizes = [1, 32], strides = [1, 1]} : vector<8x32xf32> to vector<1x32xf32>
    %c0_128 = arith.constant 0 : index
    %c0_129 = arith.constant 0 : index
    %c96 = arith.constant 96 : index
    %299 = vector.load %arg29[%c0_128, %c0_129, %c96] : memref<1x1x128xf32, #tpu.memory_space<vmem>>, vector<1x1x32xf32>
    %300 = vector.shape_cast %299 : vector<1x1x32xf32> to vector<1x32xf32>
    %301 = vector.shape_cast %298 : vector<1x32xf32> to vector<1x1x32xf32>
    tpu.vector_store %arg29[%c0_128, %c0_129, %c96], %301 {strides = array<i32>} : memref<1x1x128xf32, #tpu.memory_space<vmem>>, vector<1x1x32xf32>,
    return
  }
  func.func @transform_0(%arg0: i32) -> (i32, i32, i32) {
    %c0_i32 = arith.constant 0 : i32
    %c0_i32_0 = arith.constant 0 : i32
    %c0_i32_1 = arith.constant 0 : i32
    return %arg0, %c0_i32, %c0_i32_0 : i32, i32, i32
  }
  func.func @transform_1(%arg0: i32) -> (i32, i32, i32) {
    %c0_i32 = arith.constant 0 : i32
    %c0_i32_0 = arith.constant 0 : i32
    %c0_i32_1 = arith.constant 0 : i32
    return %arg0, %c0_i32, %c0_i32_0 : i32, i32, i32
  }
  func.func @transform_2(%arg0: i32) -> (i32, i32) {
    %c0_i32 = arith.constant 0 : i32
    %c0_i32_0 = arith.constant 0 : i32
    %c0_i32_1 = arith.constant 0 : i32
    return %c0_i32, %c0_i32_0 : i32, i32
  }
  func.func @transform_3(%arg0: i32) -> (i32, i32) {
    %c0_i32 = arith.constant 0 : i32
    %c0_i32_0 = arith.constant 0 : i32
    %c0_i32_1 = arith.constant 0 : i32
    return %c0_i32, %c0_i32_0 : i32, i32
  }
  func.func @transform_4(%arg0: i32) -> (i32, i32) {
    %c0_i32 = arith.constant 0 : i32
    %c0_i32_0 = arith.constant 0 : i32
    %c0_i32_1 = arith.constant 0 : i32
    return %c0_i32, %c0_i32_0 : i32, i32
  }
  func.func @transform_5(%arg0: i32) -> (i32, i32) {
    %c0_i32 = arith.constant 0 : i32
    %c0_i32_0 = arith.constant 0 : i32
    %c0_i32_1 = arith.constant 0 : i32
    return %c0_i32, %c0_i32_0 : i32, i32
  }
  func.func @transform_6(%arg0: i32) -> (i32, i32) {
    %c0_i32 = arith.constant 0 : i32
    %c0_i32_0 = arith.constant 0 : i32
    %c0_i32_1 = arith.constant 0 : i32
    return %c0_i32, %c0_i32_0 : i32, i32
  }
  func.func @transform_7(%arg0: i32) -> (i32, i32) {
    %c0_i32 = arith.constant 0 : i32
    %c0_i32_0 = arith.constant 0 : i32
    %c0_i32_1 = arith.constant 0 : i32
    return %c0_i32, %c0_i32_0 : i32, i32
  }
  func.func @transform_8(%arg0: i32) -> (i32, i32) {
    %c0_i32 = arith.constant 0 : i32
    %c0_i32_0 = arith.constant 0 : i32
    %c0_i32_1 = arith.constant 0 : i32
    return %c0_i32, %c0_i32_0 : i32, i32
  }
  func.func @transform_9(%arg0: i32) -> (i32, i32) {
    %c0_i32 = arith.constant 0 : i32
    %c0_i32_0 = arith.constant 0 : i32
    %c0_i32_1 = arith.constant 0 : i32
    return %c0_i32, %c0_i32_0 : i32, i32
  }
  func.func @transform_10(%arg0: i32) -> (i32, i32) {
    %c0_i32 = arith.constant 0 : i32
    %c0_i32_0 = arith.constant 0 : i32
    %c0_i32_1 = arith.constant 0 : i32
    return %c0_i32, %c0_i32_0 : i32, i32
  }
  func.func @transform_11(%arg0: i32) -> (i32, i32) {
    %c0_i32 = arith.constant 0 : i32
    %c0_i32_0 = arith.constant 0 : i32
    %c0_i32_1 = arith.constant 0 : i32
    return %c0_i32, %c0_i32_0 : i32, i32
  }
  func.func @transform_12(%arg0: i32) -> (i32, i32) {
    %c0_i32 = arith.constant 0 : i32
    %c0_i32_0 = arith.constant 0 : i32
    %c0_i32_1 = arith.constant 0 : i32
    return %c0_i32, %c0_i32_0 : i32, i32
  }
  func.func @transform_13(%arg0: i32) -> (i32, i32) {
    %c0_i32 = arith.constant 0 : i32
    %c0_i32_0 = arith.constant 0 : i32
    %c0_i32_1 = arith.constant 0 : i32
    return %c0_i32, %c0_i32_0 : i32, i32
  }
  func.func @transform_14(%arg0: i32) -> (i32, i32) {
    %c0_i32 = arith.constant 0 : i32
    %c0_i32_0 = arith.constant 0 : i32
    %c0_i32_1 = arith.constant 0 : i32
    return %c0_i32, %c0_i32_0 : i32, i32
  }
  func.func @transform_15(%arg0: i32) -> (i32, i32) {
    %c0_i32 = arith.constant 0 : i32
    %c0_i32_0 = arith.constant 0 : i32
    %c0_i32_1 = arith.constant 0 : i32
    return %c0_i32, %c0_i32_0 : i32, i32
  }
  func.func @transform_16(%arg0: i32) -> (i32, i32) {
    %c0_i32 = arith.constant 0 : i32
    %c0_i32_0 = arith.constant 0 : i32
    %c0_i32_1 = arith.constant 0 : i32
    return %c0_i32, %c0_i32_0 : i32, i32
  }
  func.func @transform_17(%arg0: i32) -> (i32, i32) {
    %c0_i32 = arith.constant 0 : i32
    %c0_i32_0 = arith.constant 0 : i32
    %c0_i32_1 = arith.constant 0 : i32
    return %c0_i32, %c0_i32_0 : i32, i32
  }
  func.func @transform_18(%arg0: i32) -> (i32, i32) {
    %c0_i32 = arith.constant 0 : i32
    %c0_i32_0 = arith.constant 0 : i32
    %c0_i32_1 = arith.constant 0 : i32
    return %c0_i32, %c0_i32_0 : i32, i32
  }
  func.func @transform_19(%arg0: i32) -> (i32, i32) {
    %c0_i32 = arith.constant 0 : i32
    %c0_i32_0 = arith.constant 0 : i32
    %c0_i32_1 = arith.constant 0 : i32
    return %c0_i32, %c0_i32_0 : i32, i32
  }
  func.func @transform_20(%arg0: i32) -> (i32, i32) {
    %c0_i32 = arith.constant 0 : i32
    %c0_i32_0 = arith.constant 0 : i32
    %c0_i32_1 = arith.constant 0 : i32
    return %c0_i32, %c0_i32_0 : i32, i32
  }
  func.func @transform_21(%arg0: i32) -> (i32, i32) {
    %c0_i32 = arith.constant 0 : i32
    %c0_i32_0 = arith.constant 0 : i32
    %c0_i32_1 = arith.constant 0 : i32
    return %c0_i32, %c0_i32_0 : i32, i32
  }
  func.func @transform_22(%arg0: i32) -> (i32, i32) {
    %c0_i32 = arith.constant 0 : i32
    %c0_i32_0 = arith.constant 0 : i32
    %c0_i32_1 = arith.constant 0 : i32
    return %c0_i32, %c0_i32_0 : i32, i32
  }
  func.func @transform_23(%arg0: i32) -> (i32, i32) {
    %c0_i32 = arith.constant 0 : i32
    %c0_i32_0 = arith.constant 0 : i32
    %c0_i32_1 = arith.constant 0 : i32
    return %c0_i32, %c0_i32_0 : i32, i32
  }
  func.func @transform_24(%arg0: i32) -> (i32, i32) {
    %c0_i32 = arith.constant 0 : i32
    %c0_i32_0 = arith.constant 0 : i32
    %c0_i32_1 = arith.constant 0 : i32
    return %c0_i32, %c0_i32_0 : i32, i32
  }
  func.func @transform_25(%arg0: i32) -> (i32, i32) {
    %c0_i32 = arith.constant 0 : i32
    %c0_i32_0 = arith.constant 0 : i32
    %c0_i32_1 = arith.constant 0 : i32
    return %c0_i32, %c0_i32_0 : i32, i32
  }
  func.func @transform_26(%arg0: i32) -> (i32, i32) {
    %c0_i32 = arith.constant 0 : i32
    %c0_i32_0 = arith.constant 0 : i32
    %c0_i32_1 = arith.constant 0 : i32
    return %c0_i32, %c0_i32_0 : i32, i32
  }
  func.func @transform_27(%arg0: i32) -> (i32, i32) {
    %c0_i32 = arith.constant 0 : i32
    %c0_i32_0 = arith.constant 0 : i32
    %c0_i32_1 = arith.constant 0 : i32
    return %c0_i32, %c0_i32_0 : i32, i32
  }
  func.func @transform_28(%arg0: i32) -> (i32, i32, i32) {
    %c0_i32 = arith.constant 0 : i32
    %c0_i32_0 = arith.constant 0 : i32
    %c0_i32_1 = arith.constant 0 : i32
    return %arg0, %c0_i32, %c0_i32_0 : i32, i32, i32
  }
}

</mosaic_0001>

<llo_original>
// kernel: tpu_custom_call.1
$region0: #{tpu_custom_call.1}
  #allocation0 [shape = 'u32[]', space=smem, size = 0x4, offset = 0x4, fixed_abs, tag = 'smem constant byte address 0x4 - core index']
  #allocation1 [shape = 'u32[144,128]{1,0:T(1,128)}', space=vmem, size = 0x12000, scoped, tag = 'internal scratch']
  %s0 = inlined_call_operand.hbm [shape: f32[2,8,32], index: 0, kind: input, shape index: {}]
  %s1 = inlined_call_operand.hbm [shape: f32[2,1,8], index: 1, kind: input, shape index: {}]
  %s2 = inlined_call_operand.hbm [shape: f32[1,32], index: 2, kind: input, shape index: {}]
  %s3 = inlined_call_operand.hbm [shape: f32[1,32], index: 3, kind: input, shape index: {}]
  %s4 = inlined_call_operand.vmem [shape: f32[32,96], index: 4, kind: input, shape index: {}]
  %s5 = inlined_call_operand.hbm [shape: f32[1,96], index: 5, kind: input, shape index: {}]
  %s6 = inlined_call_operand.vmem [shape: f32[32,32], index: 6, kind: input, shape index: {}]
  %s7 = inlined_call_operand.hbm [shape: f32[1,32], index: 7, kind: input, shape index: {}]
  %s8 = inlined_call_operand.hbm [shape: f32[1,32], index: 8, kind: input, shape index: {}]
  %s9 = inlined_call_operand.hbm [shape: f32[1,32], index: 9, kind: input, shape index: {}]
  %s10 = inlined_call_operand.vmem [shape: f32[32,64], index: 10, kind: input, shape index: {}]
  %s11 = inlined_call_operand.hbm [shape: f32[1,64], index: 11, kind: input, shape index: {}]
  %s12 = inlined_call_operand.vmem [shape: f32[64,32], index: 12, kind: input, shape index: {}]
  %s13 = inlined_call_operand.hbm [shape: f32[1,32], index: 13, kind: input, shape index: {}]
  %s14 = inlined_call_operand.hbm [shape: f32[1,32], index: 14, kind: input, shape index: {}]
  %s15 = inlined_call_operand.hbm [shape: f32[1,32], index: 15, kind: input, shape index: {}]
  %s16 = inlined_call_operand.vmem [shape: f32[32,96], index: 16, kind: input, shape index: {}]
  %s17 = inlined_call_operand.hbm [shape: f32[1,96], index: 17, kind: input, shape index: {}]
  %s18 = inlined_call_operand.vmem [shape: f32[32,32], index: 18, kind: input, shape index: {}]
  %s19 = inlined_call_operand.vmem [shape: f32[1,32], index: 19, kind: input, shape index: {}]
  %s20 = inlined_call_operand.vmem [shape: f32[1,32], index: 20, kind: input, shape index: {}]
  %s21 = inlined_call_operand.vmem [shape: f32[1,32], index: 21, kind: input, shape index: {}]
  %s22 = inlined_call_operand.vmem [shape: f32[32,64], index: 22, kind: input, shape index: {}]
  %s23 = inlined_call_operand.vmem [shape: f32[1,64], index: 23, kind: input, shape index: {}]
  %s24 = inlined_call_operand.vmem [shape: f32[64,32], index: 24, kind: input, shape index: {}]
  %s25 = inlined_call_operand.vmem [shape: f32[1,32], index: 25, kind: input, shape index: {}]
  %s26 = inlined_call_operand.vmem [shape: f32[1,32], index: 26, kind: input, shape index: {}]
  %s27 = inlined_call_operand.vmem [shape: f32[1,32], index: 27, kind: input, shape index: {}]
  %s28 = inlined_call_operand.hbm [shape: f32[2,1,128], index: 28, kind: output, shape index: {}]
  %s29 = sld [smem:[#allocation0]]
  $region197: #{tpu_custom_call.1} parent=0
    _
  %s31 = ssub.s32 1, %s29
  %s32 = scalar_select 0, %s31, %s29
  $region1: #{tpu_custom_call.1} parent=0
    #allocation2 [shape = 'u8[8192]{0}', space=vmem, size = 0x2000, scoped, tag = 'input window, operand 0']
    #allocation3 [shape = 's32[2]{0}', space=sflag, size = 0x8, scoped, tag = 'scoped memory for tpu_custom_call.1']
    #allocation4 [shape = 's32[2]{0}', space=sflag, size = 0x8, scoped, tag = 'scoped memory for tpu_custom_call.1']
    #allocation5 [shape = 'u8[1024]{0}', space=vmem, size = 0x400, scoped, tag = 'input window, operand 1']
    #allocation6 [shape = 's32[2]{0}', space=sflag, size = 0x8, scoped, tag = 'scoped memory for tpu_custom_call.1']
    #allocation7 [shape = 'u8[512]{0}', space=vmem, size = 0x400, scoped, tag = 'input window, operand 2, single buffered']
    #allocation8 [shape = 'u8[512]{0}', space=vmem, size = 0x400, scoped, tag = 'input window, operand 3, single buffered']
    #allocation9 [shape = 's32[1]{0}', space=sflag, size = 0x4, scoped, tag = 'scoped memory for tpu_custom_call.1']
    #allocation10 [shape = 'u8[512]{0}', space=vmem, size = 0x400, scoped, tag = 'input window, operand 5, single buffered']
    #allocation11 [shape = 'u8[512]{0}', space=vmem, size = 0x400, scoped, tag = 'input window, operand 7, single buffered']
    #allocation12 [shape = 's32[1]{0}', space=sflag, size = 0x4, scoped, tag = 'scoped memory for tpu_custom_call.1']
    #allocation13 [shape = 'u8[512]{0}', space=vmem, size = 0x400, scoped, tag = 'input window, operand 8, single buffered']
    #allocation14 [shape = 'u8[512]{0}', space=vmem, size = 0x400, scoped, tag = 'input window, operand 9, single buffered']
    #allocation15 [shape = 's32[1]{0}', space=sflag, size = 0x4, scoped, tag = 'scoped memory for tpu_custom_call.1']
    #allocation16 [shape = 'u8[512]{0}', space=vmem, size = 0x400, scoped, tag = 'input window, operand 11, single buffered']
    #allocation17 [shape = 'u8[512]{0}', space=vmem, size = 0x400, scoped, tag = 'input window, operand 13, single buffered']
    #allocation18 [shape = 's32[1]{0}', space=sflag, size = 0x4, scoped, tag = 'scoped memory for tpu_custom_call.1']
    #allocation19 [shape = 'u8[512]{0}', space=vmem, size = 0x400, scoped, tag = 'input window, operand 14, single buffered']
    #allocation20 [shape = 'u8[512]{0}', space=vmem, size = 0x400, scoped, tag = 'input window, operand 15, single buffered']
    #allocation21 [shape = 's32[1]{0}', space=sflag, size = 0x4, scoped, tag = 'scoped memory for tpu_custom_call.1']
    #allocation22 [shape = 'u8[512]{0}', space=vmem, size = 0x400, scoped, tag = 'input window, operand 17, single buffered']
    #allocation23 [shape = 'u8[1024]{0}', space=vmem, size = 0x400, scoped, tag = 'output window, operand 0']
    %33 = vsyncpa [#allocation3], 0
    %s34 = scalar_lea.sflag [#allocation3], 1
    %35 = vsyncpa %s34, 0
    %36 = vsyncpa [#allocation6], 0
    %s37 = scalar_lea.sflag [#allocation6], 1
    %38 = vsyncpa %s37, 0
    %39 = vsyncpa [#allocation9], 0
    %40 = vsyncpa [#allocation12], 0
    %41 = vsyncpa [#allocation15], 0
    %42 = vsyncpa [#allocation18], 0
    %43 = vsyncpa [#allocation21], 0
    %44 = vsyncpa [#allocation4], 0
    %s45 = scalar_lea.sflag [#allocation4], 1
    %46 = vsyncpa %s45, 0
    loop: start=0, step=1, limit=4
    $region2: #{tpu_custom_call.1} parent=1 // loop_pre_header
      _
    $region3: #{tpu_custom_call.1} parent=1 // loop_header
      %s48 = sphi 0, %s52
      %p49 = scmp.ge.s32.totalorder %s48, 4
      %s58 = sphi 0, %s60
      %s61 = sphi 0, %s58
      %s62 = sphi 0, %s61
      %s78 = sphi 0, %s62
      %s84 = sphi 0, %s86
      %s87 = sphi 0, %s84
      %s88 = sphi 0, %s87
      %s104 = sphi 0, %s88
      %s108 = sphi 0, %s108
      %s110 = sphi 0, %s108
      %s111 = sphi 0, %s110
      %s125 = sphi 0, %s111
      %s129 = sphi 0, %s129
      %s131 = sphi 0, %s129
      %s132 = sphi 0, %s131
      %s146 = sphi 0, %s132
      %s150 = sphi 0, %s150
      %s152 = sphi 0, %s150
      %s153 = sphi 0, %s152
      %s167 = sphi 0, %s153
      %s171 = sphi 0, %s171
      %s173 = sphi 0, %s171
      %s174 = sphi 0, %s173
      %s188 = sphi 0, %s174
      %s192 = sphi 0, %s192
      %s194 = sphi 0, %s192
      %s195 = sphi 0, %s194
      %s209 = sphi 0, %s195
      %s213 = sphi 0, %s213
      %s215 = sphi 0, %s213
      %s216 = sphi 0, %s215
      %s230 = sphi 0, %s216
      %s234 = sphi 0, %s234
      %s236 = sphi 0, %s234
      %s237 = sphi 0, %s236
      %s251 = sphi 0, %s237
      %s255 = sphi 0, %s255
      %s257 = sphi 0, %s255
      %s258 = sphi 0, %s257
      %s272 = sphi 0, %s258
      %s276 = sphi 0, %s276
      %s278 = sphi 0, %s276
      %s279 = sphi 0, %s278
      %s293 = sphi 0, %s279
      %s297 = sphi 0, %s297
      %s299 = sphi 0, %s297
      %s300 = sphi 0, %s299
      %s314 = sphi 0, %s300
      %s318 = sphi 0, %s318
      %s320 = sphi 0, %s318
      %s321 = sphi 0, %s320
      %s335 = sphi 0, %s321
      %s339 = sphi 0, %s339
      %s341 = sphi 0, %s339
      %s342 = sphi 0, %s341
      %s356 = sphi 0, %s342
      %s360 = sphi 0, %s360
      %s362 = sphi 0, %s360
      %s363 = sphi 0, %s362
      %s377 = sphi 0, %s363
      %s381 = sphi 0, %s381
      %s383 = sphi 0, %s381
      %s384 = sphi 0, %s383
      %s398 = sphi 0, %s384
      %s402 = sphi 0, %s402
      %s404 = sphi 0, %s402
      %s405 = sphi 0, %s404
      %s419 = sphi 0, %s405
      %s423 = sphi 0, %s423
      %s425 = sphi 0, %s423
      %s426 = sphi 0, %s425
      %s440 = sphi 0, %s426
      %s444 = sphi 0, %s444
      %s446 = sphi 0, %s444
      %s447 = sphi 0, %s446
      %s461 = sphi 0, %s447
      %s465 = sphi 0, %s465
      %s467 = sphi 0, %s465
      %s468 = sphi 0, %s467
      %s482 = sphi 0, %s468
      %s486 = sphi 0, %s486
      %s488 = sphi 0, %s486
      %s489 = sphi 0, %s488
      %s503 = sphi 0, %s489
      %s507 = sphi 0, %s507
      %s509 = sphi 0, %s507
      %s510 = sphi 0, %s509
      %s524 = sphi 0, %s510
      %s528 = sphi 0, %s528
      %s530 = sphi 0, %s528
      %s531 = sphi 0, %s530
      %s545 = sphi 0, %s531
      %s549 = sphi 0, %s549
      %s551 = sphi 0, %s549
      %s552 = sphi 0, %s551
      %s566 = sphi 0, %s552
      %s570 = sphi 0, %s570
      %s572 = sphi 0, %s570
      %s573 = sphi 0, %s572
      %s587 = sphi 0, %s573
      %s591 = sphi 0, %s591
      %s593 = sphi 0, %s591
      %s594 = sphi 0, %s593
      %s608 = sphi 0, %s594
      %s612 = sphi 0, %s612
      %s614 = sphi 0, %s612
      %s615 = sphi 0, %s614
      %s629 = sphi 0, %s615
      %s633 = sphi 0, %s633
      %s635 = sphi 0, %s633
      %s636 = sphi 0, %s635
      %s650 = sphi 0, %s636
      %s656 = sphi 0, %s658
      %s659 = sphi 0, %s656
      %s660 = sphi 0, %s659
      %s676 = sphi 0, %s660
    $region4: #{tpu_custom_call.1} parent=1 // loop_header_branch
      %51 = sbr.rel (%p49) target = $region8
    $region5: #{tpu_custom_call.1} parent=1 // loop_body
      %s53 = ssub.s32 %s48, 1
      %s54 = ssub.s32 %s48, 2
      %s55 = sadd.s32 %s48, 1
      %s56 = ssub.s32 %s48, %s55
      %p57 = scmp.eq.s32.totalorder %s56, 0
      %s59 = sadd.s32 %s58, 1
      %s60 = scalar_select %p57, %s58, %s59
      %p63 = pneg %p57
      %p64 = scmp.eq.s32.totalorder %s48, 1
      %p65 = por %p63, %p64
      %p66 = scmp.ne.s32.totalorder %s58, %s61
      %p67 = scmp.eq.s32.totalorder %s48, 0
      %p68 = por %p66, %p67
      %p69 = scmp.ne.s32.totalorder %s58, %s61
      %p70 = scmp.eq.s32.totalorder %s53, 1
      %p71 = por %p69, %p70
      %p72 = scmp.ne.s32.totalorder %s61, %s62
      %p73 = scmp.eq.s32.totalorder %s53, 0
      %p74 = por %p72, %p73
      %p75 = scmp.ne.s32.totalorder %s61, %s62
      %p76 = scmp.eq.s32.totalorder %s54, 1
      %p77 = por %p75, %p76
      %p79 = scmp.ne.s32.totalorder %s62, %s78
      %p80 = scmp.eq.s32.totalorder %s54, 0
      %p81 = por %p79, %p80
      %s82 = ssub.s32 %s48, %s55
      %p83 = scmp.eq.s32.totalorder %s82, 0
      %s85 = sadd.s32 %s84, 1
      %s86 = scalar_select %p83, %s84, %s85
      %p89 = pneg %p83
      %p90 = scmp.eq.s32.totalorder %s48, 1
      %p91 = por %p89, %p90
      %p92 = scmp.ne.s32.totalorder %s84, %s87
      %p93 = scmp.eq.s32.totalorder %s48, 0
      %p94 = por %p92, %p93
      %p95 = scmp.ne.s32.totalorder %s84, %s87
      %p96 = scmp.eq.s32.totalorder %s53, 1
      %p97 = por %p95, %p96
      %p98 = scmp.ne.s32.totalorder %s87, %s88
      %p99 = scmp.eq.s32.totalorder %s53, 0
      %p100 = por %p98, %p99
      %p101 = scmp.ne.s32.totalorder %s87, %s88
      %p102 = scmp.eq.s32.totalorder %s54, 1
      %p103 = por %p101, %p102
      %p105 = scmp.ne.s32.totalorder %s88, %s104
      %p106 = scmp.eq.s32.totalorder %s54, 0
      %p107 = por %p105, %p106
      %s109 = sadd.s32 %s108, 1
      %p112 = scmp.eq.s32.totalorder %s48, 1
      %p113 = scmp.ne.s32.totalorder %s108, %s110
      %p114 = scmp.eq.s32.totalorder %s48, 0
      %p115 = por %p113, %p114
      %p116 = scmp.ne.s32.totalorder %s108, %s110
      %p117 = scmp.eq.s32.totalorder %s53, 1
      %p118 = por %p116, %p117
      %p119 = scmp.ne.s32.totalorder %s110, %s111
      %p120 = scmp.eq.s32.totalorder %s53, 0
      %p121 = por %p119, %p120
      %p122 = scmp.ne.s32.totalorder %s110, %s111
      %p123 = scmp.eq.s32.totalorder %s54, 1
      %p124 = por %p122, %p123
      %p126 = scmp.ne.s32.totalorder %s111, %s125
      %p127 = scmp.eq.s32.totalorder %s54, 0
      %p128 = por %p126, %p127
      %s130 = sadd.s32 %s129, 1
      %p133 = scmp.eq.s32.totalorder %s48, 1
      %p134 = scmp.ne.s32.totalorder %s129, %s131
      %p135 = scmp.eq.s32.totalorder %s48, 0
      %p136 = por %p134, %p135
      %p137 = scmp.ne.s32.totalorder %s129, %s131
      %p138 = scmp.eq.s32.totalorder %s53, 1
      %p139 = por %p137, %p138
      %p140 = scmp.ne.s32.totalorder %s131, %s132
      %p141 = scmp.eq.s32.totalorder %s53, 0
      %p142 = por %p140, %p141
      %p143 = scmp.ne.s32.totalorder %s131, %s132
      %p144 = scmp.eq.s32.totalorder %s54, 1
      %p145 = por %p143, %p144
      %p147 = scmp.ne.s32.totalorder %s132, %s146
      %p148 = scmp.eq.s32.totalorder %s54, 0
      %p149 = por %p147, %p148
      %s151 = sadd.s32 %s150, 1
      %p154 = scmp.eq.s32.totalorder %s48, 1
      %p155 = scmp.ne.s32.totalorder %s150, %s152
      %p156 = scmp.eq.s32.totalorder %s48, 0
      %p157 = por %p155, %p156
      %p158 = scmp.ne.s32.totalorder %s150, %s152
      %p159 = scmp.eq.s32.totalorder %s53, 1
      %p160 = por %p158, %p159
      %p161 = scmp.ne.s32.totalorder %s152, %s153
      %p162 = scmp.eq.s32.totalorder %s53, 0
      %p163 = por %p161, %p162
      %p164 = scmp.ne.s32.totalorder %s152, %s153
      %p165 = scmp.eq.s32.totalorder %s54, 1
      %p166 = por %p164, %p165
      %p168 = scmp.ne.s32.totalorder %s153, %s167
      %p169 = scmp.eq.s32.totalorder %s54, 0
      %p170 = por %p168, %p169
      %s172 = sadd.s32 %s171, 1
      %p175 = scmp.eq.s32.totalorder %s48, 1
      %p176 = scmp.ne.s32.totalorder %s171, %s173
      %p177 = scmp.eq.s32.totalorder %s48, 0
      %p178 = por %p176, %p177
      %p179 = scmp.ne.s32.totalorder %s171, %s173
      %p180 = scmp.eq.s32.totalorder %s53, 1
      %p181 = por %p179, %p180
      %p182 = scmp.ne.s32.totalorder %s173, %s174
      %p183 = scmp.eq.s32.totalorder %s53, 0
      %p184 = por %p182, %p183
      %p185 = scmp.ne.s32.totalorder %s173, %s174
      %p186 = scmp.eq.s32.totalorder %s54, 1
      %p187 = por %p185, %p186
      %p189 = scmp.ne.s32.totalorder %s174, %s188
      %p190 = scmp.eq.s32.totalorder %s54, 0
      %p191 = por %p189, %p190
      %s193 = sadd.s32 %s192, 1
      %p196 = scmp.eq.s32.totalorder %s48, 1
      %p197 = scmp.ne.s32.totalorder %s192, %s194
      %p198 = scmp.eq.s32.totalorder %s48, 0
      %p199 = por %p197, %p198
      %p200 = scmp.ne.s32.totalorder %s192, %s194
      %p201 = scmp.eq.s32.totalorder %s53, 1
      %p202 = por %p200, %p201
      %p203 = scmp.ne.s32.totalorder %s194, %s195
      %p204 = scmp.eq.s32.totalorder %s53, 0
      %p205 = por %p203, %p204
      %p206 = scmp.ne.s32.totalorder %s194, %s195
      %p207 = scmp.eq.s32.totalorder %s54, 1
      %p208 = por %p206, %p207
      %p210 = scmp.ne.s32.totalorder %s195, %s209
      %p211 = scmp.eq.s32.totalorder %s54, 0
      %p212 = por %p210, %p211
      %s214 = sadd.s32 %s213, 1
      %p217 = scmp.eq.s32.totalorder %s48, 1
      %p218 = scmp.ne.s32.totalorder %s213, %s215
      %p219 = scmp.eq.s32.totalorder %s48, 0
      %p220 = por %p218, %p219
      %p221 = scmp.ne.s32.totalorder %s213, %s215
      %p222 = scmp.eq.s32.totalorder %s53, 1
      %p223 = por %p221, %p222
      %p224 = scmp.ne.s32.totalorder %s215, %s216
      %p225 = scmp.eq.s32.totalorder %s53, 0
      %p226 = por %p224, %p225
      %p227 = scmp.ne.s32.totalorder %s215, %s216
      %p228 = scmp.eq.s32.totalorder %s54, 1
      %p229 = por %p227, %p228
      %p231 = scmp.ne.s32.totalorder %s216, %s230
      %p232 = scmp.eq.s32.totalorder %s54, 0
      %p233 = por %p231, %p232
      %s235 = sadd.s32 %s234, 1
      %p238 = scmp.eq.s32.totalorder %s48, 1
      %p239 = scmp.ne.s32.totalorder %s234, %s236
      %p240 = scmp.eq.s32.totalorder %s48, 0
      %p241 = por %p239, %p240
      %p242 = scmp.ne.s32.totalorder %s234, %s236
      %p243 = scmp.eq.s32.totalorder %s53, 1
      %p244 = por %p242, %p243
      %p245 = scmp.ne.s32.totalorder %s236, %s237
      %p246 = scmp.eq.s32.totalorder %s53, 0
      %p247 = por %p245, %p246
      %p248 = scmp.ne.s32.totalorder %s236, %s237
      %p249 = scmp.eq.s32.totalorder %s54, 1
      %p250 = por %p248, %p249
      %p252 = scmp.ne.s32.totalorder %s237, %s251
      %p253 = scmp.eq.s32.totalorder %s54, 0
      %p254 = por %p252, %p253
      %s256 = sadd.s32 %s255, 1
      %p259 = scmp.eq.s32.totalorder %s48, 1
      %p260 = scmp.ne.s32.totalorder %s255, %s257
      %p261 = scmp.eq.s32.totalorder %s48, 0
      %p262 = por %p260, %p261
      %p263 = scmp.ne.s32.totalorder %s255, %s257
      %p264 = scmp.eq.s32.totalorder %s53, 1
      %p265 = por %p263, %p264
      %p266 = scmp.ne.s32.totalorder %s257, %s258
      %p267 = scmp.eq.s32.totalorder %s53, 0
      %p268 = por %p266, %p267
      %p269 = scmp.ne.s32.totalorder %s257, %s258
      %p270 = scmp.eq.s32.totalorder %s54, 1
      %p271 = por %p269, %p270
      %p273 = scmp.ne.s32.totalorder %s258, %s272
      %p274 = scmp.eq.s32.totalorder %s54, 0
      %p275 = por %p273, %p274
      %s277 = sadd.s32 %s276, 1
      %p280 = scmp.eq.s32.totalorder %s48, 1
      %p281 = scmp.ne.s32.totalorder %s276, %s278
      %p282 = scmp.eq.s32.totalorder %s48, 0
      %p283 = por %p281, %p282
      %p284 = scmp.ne.s32.totalorder %s276, %s278
      %p285 = scmp.eq.s32.totalorder %s53, 1
      %p286 = por %p284, %p285
      %p287 = scmp.ne.s32.totalorder %s278, %s279
      %p288 = scmp.eq.s32.totalorder %s53, 0
      %p289 = por %p287, %p288
      %p290 = scmp.ne.s32.totalorder %s278, %s279
      %p291 = scmp.eq.s32.totalorder %s54, 1
      %p292 = por %p290, %p291
      %p294 = scmp.ne.s32.totalorder %s279, %s293
      %p295 = scmp.eq.s32.totalorder %s54, 0
      %p296 = por %p294, %p295
      %s298 = sadd.s32 %s297, 1
      %p301 = scmp.eq.s32.totalorder %s48, 1
      %p302 = scmp.ne.s32.totalorder %s297, %s299
      %p303 = scmp.eq.s32.totalorder %s48, 0
      %p304 = por %p302, %p303
      %p305 = scmp.ne.s32.totalorder %s297, %s299
      %p306 = scmp.eq.s32.totalorder %s53, 1
      %p307 = por %p305, %p306
      %p308 = scmp.ne.s32.totalorder %s299, %s300
      %p309 = scmp.eq.s32.totalorder %s53, 0
      %p310 = por %p308, %p309
      %p311 = scmp.ne.s32.totalorder %s299, %s300
      %p312 = scmp.eq.s32.totalorder %s54, 1
      %p313 = por %p311, %p312
      %p315 = scmp.ne.s32.totalorder %s300, %s314
      %p316 = scmp.eq.s32.totalorder %s54, 0
      %p317 = por %p315, %p316
      %s319 = sadd.s32 %s318, 1
      %p322 = scmp.eq.s32.totalorder %s48, 1
      %p323 = scmp.ne.s32.totalorder %s318, %s320
      %p324 = scmp.eq.s32.totalorder %s48, 0
      %p325 = por %p323, %p324
      %p326 = scmp.ne.s32.totalorder %s318, %s320
      %p327 = scmp.eq.s32.totalorder %s53, 1
      %p328 = por %p326, %p327
      %p329 = scmp.ne.s32.totalorder %s320, %s321
      %p330 = scmp.eq.s32.totalorder %s53, 0
      %p331 = por %p329, %p330
      %p332 = scmp.ne.s32.totalorder %s320, %s321
      %p333 = scmp.eq.s32.totalorder %s54, 1
      %p334 = por %p332, %p333
      %p336 = scmp.ne.s32.totalorder %s321, %s335
      %p337 = scmp.eq.s32.totalorder %s54, 0
      %p338 = por %p336, %p337
      %s340 = sadd.s32 %s339, 1
      %p343 = scmp.eq.s32.totalorder %s48, 1
      %p344 = scmp.ne.s32.totalorder %s339, %s341
      %p345 = scmp.eq.s32.totalorder %s48, 0
      %p346 = por %p344, %p345
      %p347 = scmp.ne.s32.totalorder %s339, %s341
      %p348 = scmp.eq.s32.totalorder %s53, 1
      %p349 = por %p347, %p348
      %p350 = scmp.ne.s32.totalorder %s341, %s342
      %p351 = scmp.eq.s32.totalorder %s53, 0
      %p352 = por %p350, %p351
      %p353 = scmp.ne.s32.totalorder %s341, %s342
      %p354 = scmp.eq.s32.totalorder %s54, 1
      %p355 = por %p353, %p354
      %p357 = scmp.ne.s32.totalorder %s342, %s356
      %p358 = scmp.eq.s32.totalorder %s54, 0
      %p359 = por %p357, %p358
      %s361 = sadd.s32 %s360, 1
      %p364 = scmp.eq.s32.totalorder %s48, 1
      %p365 = scmp.ne.s32.totalorder %s360, %s362
      %p366 = scmp.eq.s32.totalorder %s48, 0
      %p367 = por %p365, %p366
      %p368 = scmp.ne.s32.totalorder %s360, %s362
      %p369 = scmp.eq.s32.totalorder %s53, 1
      %p370 = por %p368, %p369
      %p371 = scmp.ne.s32.totalorder %s362, %s363
      %p372 = scmp.eq.s32.totalorder %s53, 0
      %p373 = por %p371, %p372
      %p374 = scmp.ne.s32.totalorder %s362, %s363
      %p375 = scmp.eq.s32.totalorder %s54, 1
      %p376 = por %p374, %p375
      %p378 = scmp.ne.s32.totalorder %s363, %s377
      %p379 = scmp.eq.s32.totalorder %s54, 0
      %p380 = por %p378, %p379
      %s382 = sadd.s32 %s381, 1
      %p385 = scmp.eq.s32.totalorder %s48, 1
      %p386 = scmp.ne.s32.totalorder %s381, %s383
      %p387 = scmp.eq.s32.totalorder %s48, 0
      %p388 = por %p386, %p387
      %p389 = scmp.ne.s32.totalorder %s381, %s383
      %p390 = scmp.eq.s32.totalorder %s53, 1
      %p391 = por %p389, %p390
      %p392 = scmp.ne.s32.totalorder %s383, %s384
      %p393 = scmp.eq.s32.totalorder %s53, 0
      %p394 = por %p392, %p393
      %p395 = scmp.ne.s32.totalorder %s383, %s384
      %p396 = scmp.eq.s32.totalorder %s54, 1
      %p397 = por %p395, %p396
      %p399 = scmp.ne.s32.totalorder %s384, %s398
      %p400 = scmp.eq.s32.totalorder %s54, 0
      %p401 = por %p399, %p400
      %s403 = sadd.s32 %s402, 1
      %p406 = scmp.eq.s32.totalorder %s48, 1
      %p407 = scmp.ne.s32.totalorder %s402, %s404
      %p408 = scmp.eq.s32.totalorder %s48, 0
      %p409 = por %p407, %p408
      %p410 = scmp.ne.s32.totalorder %s402, %s404
      %p411 = scmp.eq.s32.totalorder %s53, 1
      %p412 = por %p410, %p411
      %p413 = scmp.ne.s32.totalorder %s404, %s405
      %p414 = scmp.eq.s32.totalorder %s53, 0
      %p415 = por %p413, %p414
      %p416 = scmp.ne.s32.totalorder %s404, %s405
      %p417 = scmp.eq.s32.totalorder %s54, 1
      %p418 = por %p416, %p417
      %p420 = scmp.ne.s32.totalorder %s405, %s419
      %p421 = scmp.eq.s32.totalorder %s54, 0
      %p422 = por %p420, %p421
      %s424 = sadd.s32 %s423, 1
      %p427 = scmp.eq.s32.totalorder %s48, 1
      %p428 = scmp.ne.s32.totalorder %s423, %s425
      %p429 = scmp.eq.s32.totalorder %s48, 0
      %p430 = por %p428, %p429
      %p431 = scmp.ne.s32.totalorder %s423, %s425
      %p432 = scmp.eq.s32.totalorder %s53, 1
      %p433 = por %p431, %p432
      %p434 = scmp.ne.s32.totalorder %s425, %s426
      %p435 = scmp.eq.s32.totalorder %s53, 0
      %p436 = por %p434, %p435
      %p437 = scmp.ne.s32.totalorder %s425, %s426
      %p438 = scmp.eq.s32.totalorder %s54, 1
      %p439 = por %p437, %p438
      %p441 = scmp.ne.s32.totalorder %s426, %s440
      %p442 = scmp.eq.s32.totalorder %s54, 0
      %p443 = por %p441, %p442
      %s445 = sadd.s32 %s444, 1
      %p448 = scmp.eq.s32.totalorder %s48, 1
      %p449 = scmp.ne.s32.totalorder %s444, %s446
      %p450 = scmp.eq.s32.totalorder %s48, 0
      %p451 = por %p449, %p450
      %p452 = scmp.ne.s32.totalorder %s444, %s446
      %p453 = scmp.eq.s32.totalorder %s53, 1
      %p454 = por %p452, %p453
      %p455 = scmp.ne.s32.totalorder %s446, %s447
      %p456 = scmp.eq.s32.totalorder %s53, 0
      %p457 = por %p455, %p456
      %p458 = scmp.ne.s32.totalorder %s446, %s447
      %p459 = scmp.eq.s32.totalorder %s54, 1
      %p460 = por %p458, %p459
      %p462 = scmp.ne.s32.totalorder %s447, %s461
      %p463 = scmp.eq.s32.totalorder %s54, 0
      %p464 = por %p462, %p463
      %s466 = sadd.s32 %s465, 1
      %p469 = scmp.eq.s32.totalorder %s48, 1
      %p470 = scmp.ne.s32.totalorder %s465, %s467
      %p471 = scmp.eq.s32.totalorder %s48, 0
      %p472 = por %p470, %p471
      %p473 = scmp.ne.s32.totalorder %s465, %s467
      %p474 = scmp.eq.s32.totalorder %s53, 1
      %p475 = por %p473, %p474
      %p476 = scmp.ne.s32.totalorder %s467, %s468
      %p477 = scmp.eq.s32.totalorder %s53, 0
      %p478 = por %p476, %p477
      %p479 = scmp.ne.s32.totalorder %s467, %s468
      %p480 = scmp.eq.s32.totalorder %s54, 1
      %p481 = por %p479, %p480
      %p483 = scmp.ne.s32.totalorder %s468, %s482
      %p484 = scmp.eq.s32.totalorder %s54, 0
      %p485 = por %p483, %p484
      %s487 = sadd.s32 %s486, 1
      %p490 = scmp.eq.s32.totalorder %s48, 1
      %p491 = scmp.ne.s32.totalorder %s486, %s488
      %p492 = scmp.eq.s32.totalorder %s48, 0
      %p493 = por %p491, %p492
      %p494 = scmp.ne.s32.totalorder %s486, %s488
      %p495 = scmp.eq.s32.totalorder %s53, 1
      %p496 = por %p494, %p495
      %p497 = scmp.ne.s32.totalorder %s488, %s489
      %p498 = scmp.eq.s32.totalorder %s53, 0
      %p499 = por %p497, %p498
      %p500 = scmp.ne.s32.totalorder %s488, %s489
      %p501 = scmp.eq.s32.totalorder %s54, 1
      %p502 = por %p500, %p501
      %p504 = scmp.ne.s32.totalorder %s489, %s503
      %p505 = scmp.eq.s32.totalorder %s54, 0
      %p506 = por %p504, %p505
      %s508 = sadd.s32 %s507, 1
      %p511 = scmp.eq.s32.totalorder %s48, 1
      %p512 = scmp.ne.s32.totalorder %s507, %s509
      %p513 = scmp.eq.s32.totalorder %s48, 0
      %p514 = por %p512, %p513
      %p515 = scmp.ne.s32.totalorder %s507, %s509
      %p516 = scmp.eq.s32.totalorder %s53, 1
      %p517 = por %p515, %p516
      %p518 = scmp.ne.s32.totalorder %s509, %s510
      %p519 = scmp.eq.s32.totalorder %s53, 0
      %p520 = por %p518, %p519
      %p521 = scmp.ne.s32.totalorder %s509, %s510
      %p522 = scmp.eq.s32.totalorder %s54, 1
      %p523 = por %p521, %p522
      %p525 = scmp.ne.s32.totalorder %s510, %s524
      %p526 = scmp.eq.s32.totalorder %s54, 0
      %p527 = por %p525, %p526
      %s529 = sadd.s32 %s528, 1
      %p532 = scmp.eq.s32.totalorder %s48, 1
      %p533 = scmp.ne.s32.totalorder %s528, %s530
      %p534 = scmp.eq.s32.totalorder %s48, 0
      %p535 = por %p533, %p534
      %p536 = scmp.ne.s32.totalorder %s528, %s530
      %p537 = scmp.eq.s32.totalorder %s53, 1
      %p538 = por %p536, %p537
      %p539 = scmp.ne.s32.totalorder %s530, %s531
      %p540 = scmp.eq.s32.totalorder %s53, 0
      %p541 = por %p539, %p540
      %p542 = scmp.ne.s32.totalorder %s530, %s531
      %p543 = scmp.eq.s32.totalorder %s54, 1
      %p544 = por %p542, %p543
      %p546 = scmp.ne.s32.totalorder %s531, %s545
      %p547 = scmp.eq.s32.totalorder %s54, 0
      %p548 = por %p546, %p547
      %s550 = sadd.s32 %s549, 1
      %p553 = scmp.eq.s32.totalorder %s48, 1
      %p554 = scmp.ne.s32.totalorder %s549, %s551
      %p555 = scmp.eq.s32.totalorder %s48, 0
      %p556 = por %p554, %p555
      %p557 = scmp.ne.s32.totalorder %s549, %s551
      %p558 = scmp.eq.s32.totalorder %s53, 1
      %p559 = por %p557, %p558
      %p560 = scmp.ne.s32.totalorder %s551, %s552
      %p561 = scmp.eq.s32.totalorder %s53, 0
      %p562 = por %p560, %p561
      %p563 = scmp.ne.s32.totalorder %s551, %s552
      %p564 = scmp.eq.s32.totalorder %s54, 1
      %p565 = por %p563, %p564
      %p567 = scmp.ne.s32.totalorder %s552, %s566
      %p568 = scmp.eq.s32.totalorder %s54, 0
      %p569 = por %p567, %p568
      %s571 = sadd.s32 %s570, 1
      %p574 = scmp.eq.s32.totalorder %s48, 1
      %p575 = scmp.ne.s32.totalorder %s570, %s572
      %p576 = scmp.eq.s32.totalorder %s48, 0
      %p577 = por %p575, %p576
      %p578 = scmp.ne.s32.totalorder %s570, %s572
      %p579 = scmp.eq.s32.totalorder %s53, 1
      %p580 = por %p578, %p579
      %p581 = scmp.ne.s32.totalorder %s572, %s573
      %p582 = scmp.eq.s32.totalorder %s53, 0
      %p583 = por %p581, %p582
      %p584 = scmp.ne.s32.totalorder %s572, %s573
      %p585 = scmp.eq.s32.totalorder %s54, 1
      %p586 = por %p584, %p585
      %p588 = scmp.ne.s32.totalorder %s573, %s587
      %p589 = scmp.eq.s32.totalorder %s54, 0
      %p590 = por %p588, %p589
      %s592 = sadd.s32 %s591, 1
      %p595 = scmp.eq.s32.totalorder %s48, 1
      %p596 = scmp.ne.s32.totalorder %s591, %s593
      %p597 = scmp.eq.s32.totalorder %s48, 0
      %p598 = por %p596, %p597
      %p599 = scmp.ne.s32.totalorder %s591, %s593
      %p600 = scmp.eq.s32.totalorder %s53, 1
      %p601 = por %p599, %p600
      %p602 = scmp.ne.s32.totalorder %s593, %s594
      %p603 = scmp.eq.s32.totalorder %s53, 0
      %p604 = por %p602, %p603
      %p605 = scmp.ne.s32.totalorder %s593, %s594
      %p606 = scmp.eq.s32.totalorder %s54, 1
      %p607 = por %p605, %p606
      %p609 = scmp.ne.s32.totalorder %s594, %s608
      %p610 = scmp.eq.s32.totalorder %s54, 0
      %p611 = por %p609, %p610
      %s613 = sadd.s32 %s612, 1
      %p616 = scmp.eq.s32.totalorder %s48, 1
      %p617 = scmp.ne.s32.totalorder %s612, %s614
      %p618 = scmp.eq.s32.totalorder %s48, 0
      %p619 = por %p617, %p618
      %p620 = scmp.ne.s32.totalorder %s612, %s614
      %p621 = scmp.eq.s32.totalorder %s53, 1
      %p622 = por %p620, %p621
      %p623 = scmp.ne.s32.totalorder %s614, %s615
      %p624 = scmp.eq.s32.totalorder %s53, 0
      %p625 = por %p623, %p624
      %p626 = scmp.ne.s32.totalorder %s614, %s615
      %p627 = scmp.eq.s32.totalorder %s54, 1
      %p628 = por %p626, %p627
      %p630 = scmp.ne.s32.totalorder %s615, %s629
      %p631 = scmp.eq.s32.totalorder %s54, 0
      %p632 = por %p630, %p631
      %s634 = sadd.s32 %s633, 1
      %p637 = scmp.eq.s32.totalorder %s48, 1
      %p638 = scmp.ne.s32.totalorder %s633, %s635
      %p639 = scmp.eq.s32.totalorder %s48, 0
      %p640 = por %p638, %p639
      %p641 = scmp.ne.s32.totalorder %s633, %s635
      %p642 = scmp.eq.s32.totalorder %s53, 1
      %p643 = por %p641, %p642
      %p644 = scmp.ne.s32.totalorder %s635, %s636
      %p645 = scmp.eq.s32.totalorder %s53, 0
      %p646 = por %p644, %p645
      %p647 = scmp.ne.s32.totalorder %s635, %s636
      %p648 = scmp.eq.s32.totalorder %s54, 1
      %p649 = por %p647, %p648
      %p651 = scmp.ne.s32.totalorder %s636, %s650
      %p652 = scmp.eq.s32.totalorder %s54, 0
      %p653 = por %p651, %p652
      %s654 = ssub.s32 %s48, %s55
      %p655 = scmp.eq.s32.totalorder %s654, 0
      %s657 = sadd.s32 %s656, 1
      %s658 = scalar_select %p655, %s656, %s657
      %p661 = pneg %p655
      %p662 = scmp.eq.s32.totalorder %s48, 1
      %p663 = por %p661, %p662
      %p664 = scmp.ne.s32.totalorder %s656, %s659
      %p665 = scmp.eq.s32.totalorder %s48, 0
      %p666 = por %p664, %p665
      %p667 = scmp.ne.s32.totalorder %s656, %s659
      %p668 = scmp.eq.s32.totalorder %s53, 1
      %p669 = por %p667, %p668
      %p670 = scmp.ne.s32.totalorder %s659, %s660
      %p671 = scmp.eq.s32.totalorder %s53, 0
      %p672 = por %p670, %p671
      %p673 = scmp.ne.s32.totalorder %s659, %s660
      %p674 = scmp.eq.s32.totalorder %s54, 1
      %p675 = por %p673, %p674
      %p677 = scmp.ne.s32.totalorder %s660, %s676
      %p678 = scmp.eq.s32.totalorder %s54, 0
      %p679 = por %p677, %p678
      %p680 = scmp.le.s32.totalorder 1, %s48
      %p681 = scmp.lt.s32.totalorder %s48, 3
      %p682 = pnand %p680, %p681
      %p683 = pneg %p682
      // Predicated region
      $region9: #{tpu_custom_call.1} parent=5 // pred_check
        _
      $region10: #{tpu_custom_call.1} parent=5 // pred_check_branch
        %685 = sbr.rel (%p682) target = $region12
      $region11: #{tpu_custom_call.1} parent=5 // pred_region
        %s686 = ssub.s32 %s48, 1
        // Predicated region
        $region13: #{tpu_custom_call.1} parent=11 // pred_check
          %p687 = pneg %p121
        $region14: #{tpu_custom_call.1} parent=11 // pred_check_branch
          %689 = sbr.rel (%p687) target = $region16
        $region15: #{tpu_custom_call.1} parent=11 // pred_region
          %s691 = ssub.s32 16, 16
          %692 = vsyncadd [#allocation6], %s691
          %s694 = sshll.u32 [#allocation7], 4
          %s695 = int_to_ptr.vmem [resolvable:$true] %s694
          %697 = dma.hbm_to_vmem [thread:$0]  %s2, 16, %s695, [#allocation6]
        $region16: #{tpu_custom_call.1} parent=11 // pred_fallthru
          _
        // Predicated region
        $region17: #{tpu_custom_call.1} parent=11 // pred_check
          %p698 = pneg %p142
        $region18: #{tpu_custom_call.1} parent=11 // pred_check_branch
          %700 = sbr.rel (%p698) target = $region20
        $region19: #{tpu_custom_call.1} parent=11 // pred_region
          %s702 = ssub.s32 16, 16
          %703 = vsyncadd [#allocation9], %s702
          %s705 = sshll.u32 [#allocation8], 4
          %s706 = int_to_ptr.vmem [resolvable:$true] %s705
          %708 = dma.hbm_to_vmem [thread:$0]  %s3, 16, %s706, [#allocation9]
        $region20: #{tpu_custom_call.1} parent=11 // pred_fallthru
          _
        // Predicated region
        $region21: #{tpu_custom_call.1} parent=11 // pred_check
          %p709 = pneg %p163
        $region22: #{tpu_custom_call.1} parent=11 // pred_check_branch
          %711 = sbr.rel (%p709) target = $region24
        $region23: #{tpu_custom_call.1} parent=11 // pred_region
          _
        $region24: #{tpu_custom_call.1} parent=11 // pred_fallthru
          _
        // Predicated region
        $region25: #{tpu_custom_call.1} parent=11 // pred_check
          %p712 = pneg %p184
        $region26: #{tpu_custom_call.1} parent=11 // pred_check_branch
          %714 = sbr.rel (%p712) target = $region28
        $region27: #{tpu_custom_call.1} parent=11 // pred_region
          %s716 = ssub.s32 16, 16
          %717 = vsyncadd [#allocation9], %s716
          %s719 = sshll.u32 [#allocation10], 4
          %s720 = int_to_ptr.vmem [resolvable:$true] %s719
          %722 = dma.hbm_to_vmem [thread:$0]  %s5, 16, %s720, [#allocation9]
        $region28: #{tpu_custom_call.1} parent=11 // pred_fallthru
          _
        // Predicated region
        $region29: #{tpu_custom_call.1} parent=11 // pred_check
          %p723 = pneg %p205
        $region30: #{tpu_custom_call.1} parent=11 // pred_check_branch
          %725 = sbr.rel (%p723) target = $region32
        $region31: #{tpu_custom_call.1} parent=11 // pred_region
          _
        $region32: #{tpu_custom_call.1} parent=11 // pred_fallthru
          _
        // Predicated region
        $region33: #{tpu_custom_call.1} parent=11 // pred_check
          %p726 = pneg %p226
        $region34: #{tpu_custom_call.1} parent=11 // pred_check_branch
          %728 = sbr.rel (%p726) target = $region36
        $region35: #{tpu_custom_call.1} parent=11 // pred_region
          %s730 = ssub.s32 16, 16
          %731 = vsyncadd [#allocation12], %s730
          %s733 = sshll.u32 [#allocation11], 4
          %s734 = int_to_ptr.vmem [resolvable:$true] %s733
          %736 = dma.hbm_to_vmem [thread:$0]  %s7, 16, %s734, [#allocation12]
        $region36: #{tpu_custom_call.1} parent=11 // pred_fallthru
          _
        // Predicated region
        $region37: #{tpu_custom_call.1} parent=11 // pred_check
          %p737 = pneg %p247
        $region38: #{tpu_custom_call.1} parent=11 // pred_check_branch
          %739 = sbr.rel (%p737) target = $region40
        $region39: #{tpu_custom_call.1} parent=11 // pred_region
          %s741 = ssub.s32 16, 16
          %742 = vsyncadd [#allocation12], %s741
          %s744 = sshll.u32 [#allocation13], 4
          %s745 = int_to_ptr.vmem [resolvable:$true] %s744
          %747 = dma.hbm_to_vmem [thread:$0]  %s8, 16, %s745, [#allocation12]
        $region40: #{tpu_custom_call.1} parent=11 // pred_fallthru
          _
        // Predicated region
        $region41: #{tpu_custom_call.1} parent=11 // pred_check
          %p748 = pneg %p268
        $region42: #{tpu_custom_call.1} parent=11 // pred_check_branch
          %750 = sbr.rel (%p748) target = $region44
        $region43: #{tpu_custom_call.1} parent=11 // pred_region
          %s752 = ssub.s32 16, 16
          %753 = vsyncadd [#allocation15], %s752
          %s755 = sshll.u32 [#allocation14], 4
          %s756 = int_to_ptr.vmem [resolvable:$true] %s755
          %758 = dma.hbm_to_vmem [thread:$0]  %s9, 16, %s756, [#allocation15]
        $region44: #{tpu_custom_call.1} parent=11 // pred_fallthru
          _
        // Predicated region
        $region45: #{tpu_custom_call.1} parent=11 // pred_check
          %p759 = pneg %p289
        $region46: #{tpu_custom_call.1} parent=11 // pred_check_branch
          %761 = sbr.rel (%p759) target = $region48
        $region47: #{tpu_custom_call.1} parent=11 // pred_region
          _
        $region48: #{tpu_custom_call.1} parent=11 // pred_fallthru
          _
        // Predicated region
        $region49: #{tpu_custom_call.1} parent=11 // pred_check
          %p762 = pneg %p310
        $region50: #{tpu_custom_call.1} parent=11 // pred_check_branch
          %764 = sbr.rel (%p762) target = $region52
        $region51: #{tpu_custom_call.1} parent=11 // pred_region
          %s766 = ssub.s32 16, 16
          %767 = vsyncadd [#allocation15], %s766
          %s769 = sshll.u32 [#allocation16], 4
          %s770 = int_to_ptr.vmem [resolvable:$true] %s769
          %772 = dma.hbm_to_vmem [thread:$0]  %s11, 16, %s770, [#allocation15]
        $region52: #{tpu_custom_call.1} parent=11 // pred_fallthru
          _
        // Predicated region
        $region53: #{tpu_custom_call.1} parent=11 // pred_check
          %p773 = pneg %p331
        $region54: #{tpu_custom_call.1} parent=11 // pred_check_branch
          %775 = sbr.rel (%p773) target = $region56
        $region55: #{tpu_custom_call.1} parent=11 // pred_region
          _
        $region56: #{tpu_custom_call.1} parent=11 // pred_fallthru
          _
        // Predicated region
        $region57: #{tpu_custom_call.1} parent=11 // pred_check
          %p776 = pneg %p352
        $region58: #{tpu_custom_call.1} parent=11 // pred_check_branch
          %778 = sbr.rel (%p776) target = $region60
        $region59: #{tpu_custom_call.1} parent=11 // pred_region
          %s780 = ssub.s32 16, 16
          %781 = vsyncadd [#allocation18], %s780
          %s783 = sshll.u32 [#allocation17], 4
          %s784 = int_to_ptr.vmem [resolvable:$true] %s783
          %786 = dma.hbm_to_vmem [thread:$0]  %s13, 16, %s784, [#allocation18]
        $region60: #{tpu_custom_call.1} parent=11 // pred_fallthru
          _
        // Predicated region
        $region61: #{tpu_custom_call.1} parent=11 // pred_check
          %p787 = pneg %p373
        $region62: #{tpu_custom_call.1} parent=11 // pred_check_branch
          %789 = sbr.rel (%p787) target = $region64
        $region63: #{tpu_custom_call.1} parent=11 // pred_region
          %s791 = ssub.s32 16, 16
          %792 = vsyncadd [#allocation18], %s791
          %s794 = sshll.u32 [#allocation19], 4
          %s795 = int_to_ptr.vmem [resolvable:$true] %s794
          %797 = dma.hbm_to_vmem [thread:$0]  %s14, 16, %s795, [#allocation18]
        $region64: #{tpu_custom_call.1} parent=11 // pred_fallthru
          _
        // Predicated region
        $region65: #{tpu_custom_call.1} parent=11 // pred_check
          %p798 = pneg %p394
        $region66: #{tpu_custom_call.1} parent=11 // pred_check_branch
          %800 = sbr.rel (%p798) target = $region68
        $region67: #{tpu_custom_call.1} parent=11 // pred_region
          %s802 = ssub.s32 16, 16
          %803 = vsyncadd [#allocation21], %s802
          %s805 = sshll.u32 [#allocation20], 4
          %s806 = int_to_ptr.vmem [resolvable:$true] %s805
          %808 = dma.hbm_to_vmem [thread:$0]  %s15, 16, %s806, [#allocation21]
        $region68: #{tpu_custom_call.1} parent=11 // pred_fallthru
          _
        // Predicated region
        $region69: #{tpu_custom_call.1} parent=11 // pred_check
          %p809 = pneg %p415
        $region70: #{tpu_custom_call.1} parent=11 // pred_check_branch
          %811 = sbr.rel (%p809) target = $region72
        $region71: #{tpu_custom_call.1} parent=11 // pred_region
          _
        $region72: #{tpu_custom_call.1} parent=11 // pred_fallthru
          _
        // Predicated region
        $region73: #{tpu_custom_call.1} parent=11 // pred_check
          %p812 = pneg %p436
        $region74: #{tpu_custom_call.1} parent=11 // pred_check_branch
          %814 = sbr.rel (%p812) target = $region76
        $region75: #{tpu_custom_call.1} parent=11 // pred_region
          %s816 = ssub.s32 16, 16
          %817 = vsyncadd [#allocation21], %s816
          %s819 = sshll.u32 [#allocation22], 4
          %s820 = int_to_ptr.vmem [resolvable:$true] %s819
          %822 = dma.hbm_to_vmem [thread:$0]  %s17, 16, %s820, [#allocation21]
        $region76: #{tpu_custom_call.1} parent=11 // pred_fallthru
          _
        // Predicated region
        $region77: #{tpu_custom_call.1} parent=11 // pred_check
          %p823 = pneg %p457
        $region78: #{tpu_custom_call.1} parent=11 // pred_check_branch
          %825 = sbr.rel (%p823) target = $region80
        $region79: #{tpu_custom_call.1} parent=11 // pred_region
          _
        $region80: #{tpu_custom_call.1} parent=11 // pred_fallthru
          _
        // Predicated region
        $region81: #{tpu_custom_call.1} parent=11 // pred_check
          %p826 = pneg %p478
        $region82: #{tpu_custom_call.1} parent=11 // pred_check_branch
          %828 = sbr.rel (%p826) target = $region84
        $region83: #{tpu_custom_call.1} parent=11 // pred_region
          _
        $region84: #{tpu_custom_call.1} parent=11 // pred_fallthru
          _
        // Predicated region
        $region85: #{tpu_custom_call.1} parent=11 // pred_check
          %p829 = pneg %p499
        $region86: #{tpu_custom_call.1} parent=11 // pred_check_branch
          %831 = sbr.rel (%p829) target = $region88
        $region87: #{tpu_custom_call.1} parent=11 // pred_region
          _
        $region88: #{tpu_custom_call.1} parent=11 // pred_fallthru
          _
        // Predicated region
        $region89: #{tpu_custom_call.1} parent=11 // pred_check
          %p832 = pneg %p520
        $region90: #{tpu_custom_call.1} parent=11 // pred_check_branch
          %834 = sbr.rel (%p832) target = $region92
        $region91: #{tpu_custom_call.1} parent=11 // pred_region
          _
        $region92: #{tpu_custom_call.1} parent=11 // pred_fallthru
          _
        // Predicated region
        $region93: #{tpu_custom_call.1} parent=11 // pred_check
          %p835 = pneg %p541
        $region94: #{tpu_custom_call.1} parent=11 // pred_check_branch
          %837 = sbr.rel (%p835) target = $region96
        $region95: #{tpu_custom_call.1} parent=11 // pred_region
          _
        $region96: #{tpu_custom_call.1} parent=11 // pred_fallthru
          _
        // Predicated region
        $region97: #{tpu_custom_call.1} parent=11 // pred_check
          %p838 = pneg %p562
        $region98: #{tpu_custom_call.1} parent=11 // pred_check_branch
          %840 = sbr.rel (%p838) target = $region100
        $region99: #{tpu_custom_call.1} parent=11 // pred_region
          _
        $region100: #{tpu_custom_call.1} parent=11 // pred_fallthru
          _
        // Predicated region
        $region101: #{tpu_custom_call.1} parent=11 // pred_check
          %p841 = pneg %p583
        $region102: #{tpu_custom_call.1} parent=11 // pred_check_branch
          %843 = sbr.rel (%p841) target = $region104
        $region103: #{tpu_custom_call.1} parent=11 // pred_region
          _
        $region104: #{tpu_custom_call.1} parent=11 // pred_fallthru
          _
        // Predicated region
        $region105: #{tpu_custom_call.1} parent=11 // pred_check
          %p844 = pneg %p604
        $region106: #{tpu_custom_call.1} parent=11 // pred_check_branch
          %846 = sbr.rel (%p844) target = $region108
        $region107: #{tpu_custom_call.1} parent=11 // pred_region
          _
        $region108: #{tpu_custom_call.1} parent=11 // pred_fallthru
          _
        // Predicated region
        $region109: #{tpu_custom_call.1} parent=11 // pred_check
          %p847 = pneg %p625
        $region110: #{tpu_custom_call.1} parent=11 // pred_check_branch
          %849 = sbr.rel (%p847) target = $region112
        $region111: #{tpu_custom_call.1} parent=11 // pred_region
          _
        $region112: #{tpu_custom_call.1} parent=11 // pred_fallthru
          _
        // Predicated region
        $region113: #{tpu_custom_call.1} parent=11 // pred_check
          %p850 = pneg %p646
        $region114: #{tpu_custom_call.1} parent=11 // pred_check_branch
          %852 = sbr.rel (%p850) target = $region116
        $region115: #{tpu_custom_call.1} parent=11 // pred_region
          _
        $region116: #{tpu_custom_call.1} parent=11 // pred_fallthru
          _
      $region12: #{tpu_custom_call.1} parent=5 // pred_fallthru
        _
      %p853 = scmp.lt.s32.totalorder %s48, 2
      // Predicated region
      $region117: #{tpu_custom_call.1} parent=5 // pred_check
        %p854 = pneg %p853
      $region118: #{tpu_custom_call.1} parent=5 // pred_check_branch
        %856 = sbr.rel (%p854) target = $region120
      $region119: #{tpu_custom_call.1} parent=5 // pred_region
        // Predicated region
        $region121: #{tpu_custom_call.1} parent=119 // pred_check
          %p857 = pneg %p68
        $region122: #{tpu_custom_call.1} parent=119 // pred_check_branch
          %859 = sbr.rel (%p857) target = $region124
        $region123: #{tpu_custom_call.1} parent=119 // pred_region
          %s860 = sand.u32 %s58, 1
          %s861 = scalar_lea.sflag [#allocation3], %s860
          %s862 = sand.u32 %s58, 1
          %s863 = smul.addr %s862, 8
          %s864 = scalar_lea.vmem [#allocation2], %s863
          %s866 = ssub.s32 128, 128
          %867 = vsyncadd %s861, %s866
          %s868 = smul.addr %s48, 128
          %s869 = scalar_lea.hbm %s0, %s868
          %s871 = sshll.u32 %s864, 4
          %s872 = int_to_ptr.vmem [resolvable:$true] %s871
          %874 = dma.hbm_to_vmem [thread:$0]  %s869, 128, %s872, %s861
        $region124: #{tpu_custom_call.1} parent=119 // pred_fallthru
          _
        // Predicated region
        $region125: #{tpu_custom_call.1} parent=119 // pred_check
          %p875 = pneg %p94
        $region126: #{tpu_custom_call.1} parent=119 // pred_check_branch
          %877 = sbr.rel (%p875) target = $region128
        $region127: #{tpu_custom_call.1} parent=119 // pred_region
          %s878 = sand.u32 %s48, 1
          %s879 = scalar_lea.sflag [#allocation6], %s878
          %s880 = sand.u32 %s84, 1
          %s881 = scalar_lea.vmem [#allocation5], %s880
          %s883 = ssub.s32 16, 16
          %884 = vsyncadd %s879, %s883
          %s885 = smul.addr %s48, 16
          %s886 = scalar_lea.hbm %s1, %s885
          %s888 = sshll.u32 %s881, 4
          %s889 = int_to_ptr.vmem [resolvable:$true] %s888
          %891 = dma.hbm_to_vmem [thread:$0]  %s886, 16, %s889, %s879
        $region128: #{tpu_custom_call.1} parent=119 // pred_fallthru
          _
      $region120: #{tpu_custom_call.1} parent=5 // pred_fallthru
        _
      %p892 = scmp.le.s32.totalorder 1, %s48
      %p893 = scmp.lt.s32.totalorder %s48, 3
      %p894 = pnand %p892, %p893
      %p895 = pneg %p894
      // Predicated region
      $region129: #{tpu_custom_call.1} parent=5 // pred_check
        _
      $region130: #{tpu_custom_call.1} parent=5 // pred_check_branch
        %897 = sbr.rel (%p894) target = $region132
      $region131: #{tpu_custom_call.1} parent=5 // pred_region
        %s898 = ssub.s32 %s48, 1
        %s899 = sand.u32 %s61, 1
        %s900 = scalar_lea.sflag [#allocation3], %s899
        %s901 = sand.u32 %s61, 1
        %s902 = smul.addr %s901, 8
        %s903 = scalar_lea.vmem [#allocation2], %s902
        // Predicated region
        $region133: #{tpu_custom_call.1} parent=131 // pred_check
          %p904 = pneg %p74
        $region134: #{tpu_custom_call.1} parent=131 // pred_check_branch
          %906 = sbr.rel (%p904) target = $region136
        $region135: #{tpu_custom_call.1} parent=131 // pred_region
          %907 = dma.done %s900, 128
        $region136: #{tpu_custom_call.1} parent=131 // pred_fallthru
          _
        %s908 = sand.u32 %s53, 1
        %s909 = scalar_lea.sflag [#allocation6], %s908
        %s910 = sand.u32 %s87, 1
        %s911 = scalar_lea.vmem [#allocation5], %s910
        // Predicated region
        $region137: #{tpu_custom_call.1} parent=131 // pred_check
          %p912 = pneg %p100
        $region138: #{tpu_custom_call.1} parent=131 // pred_check_branch
          %914 = sbr.rel (%p912) target = $region140
        $region139: #{tpu_custom_call.1} parent=131 // pred_region
          %915 = dma.done %s909, 16
        $region140: #{tpu_custom_call.1} parent=131 // pred_fallthru
          _
        // Predicated region
        $region141: #{tpu_custom_call.1} parent=131 // pred_check
          %p916 = pneg %p121
        $region142: #{tpu_custom_call.1} parent=131 // pred_check_branch
          %918 = sbr.rel (%p916) target = $region144
        $region143: #{tpu_custom_call.1} parent=131 // pred_region
          %919 = dma.done [#allocation6], 16
        $region144: #{tpu_custom_call.1} parent=131 // pred_fallthru
          _
        // Predicated region
        $region145: #{tpu_custom_call.1} parent=131 // pred_check
          %p920 = pneg %p142
        $region146: #{tpu_custom_call.1} parent=131 // pred_check_branch
          %922 = sbr.rel (%p920) target = $region148
        $region147: #{tpu_custom_call.1} parent=131 // pred_region
          %923 = dma.done [#allocation9], 16
        $region148: #{tpu_custom_call.1} parent=131 // pred_fallthru
          _
        // Predicated region
        $region149: #{tpu_custom_call.1} parent=131 // pred_check
          %p924 = pneg %p184
        $region150: #{tpu_custom_call.1} parent=131 // pred_check_branch
          %926 = sbr.rel (%p924) target = $region152
        $region151: #{tpu_custom_call.1} parent=131 // pred_region
          %927 = dma.done [#allocation9], 16
        $region152: #{tpu_custom_call.1} parent=131 // pred_fallthru
          _
        // Predicated region
        $region153: #{tpu_custom_call.1} parent=131 // pred_check
          %p928 = pneg %p226
        $region154: #{tpu_custom_call.1} parent=131 // pred_check_branch
          %930 = sbr.rel (%p928) target = $region156
        $region155: #{tpu_custom_call.1} parent=131 // pred_region
          %931 = dma.done [#allocation12], 16
        $region156: #{tpu_custom_call.1} parent=131 // pred_fallthru
          _
        // Predicated region
        $region157: #{tpu_custom_call.1} parent=131 // pred_check
          %p932 = pneg %p247
        $region158: #{tpu_custom_call.1} parent=131 // pred_check_branch
          %934 = sbr.rel (%p932) target = $region160
        $region159: #{tpu_custom_call.1} parent=131 // pred_region
          %935 = dma.done [#allocation12], 16
        $region160: #{tpu_custom_call.1} parent=131 // pred_fallthru
          _
        // Predicated region
        $region161: #{tpu_custom_call.1} parent=131 // pred_check
          %p936 = pneg %p268
        $region162: #{tpu_custom_call.1} parent=131 // pred_check_branch
          %938 = sbr.rel (%p936) target = $region164
        $region163: #{tpu_custom_call.1} parent=131 // pred_region
          %939 = dma.done [#allocation15], 16
        $region164: #{tpu_custom_call.1} parent=131 // pred_fallthru
          _
        // Predicated region
        $region165: #{tpu_custom_call.1} parent=131 // pred_check
          %p940 = pneg %p310
        $region166: #{tpu_custom_call.1} parent=131 // pred_check_branch
          %942 = sbr.rel (%p940) target = $region168
        $region167: #{tpu_custom_call.1} parent=131 // pred_region
          %943 = dma.done [#allocation15], 16
        $region168: #{tpu_custom_call.1} parent=131 // pred_fallthru
          _
        // Predicated region
        $region169: #{tpu_custom_call.1} parent=131 // pred_check
          %p944 = pneg %p352
        $region170: #{tpu_custom_call.1} parent=131 // pred_check_branch
          %946 = sbr.rel (%p944) target = $region172
        $region171: #{tpu_custom_call.1} parent=131 // pred_region
          %947 = dma.done [#allocation18], 16
        $region172: #{tpu_custom_call.1} parent=131 // pred_fallthru
          _
        // Predicated region
        $region173: #{tpu_custom_call.1} parent=131 // pred_check
          %p948 = pneg %p373
        $region174: #{tpu_custom_call.1} parent=131 // pred_check_branch
          %950 = sbr.rel (%p948) target = $region176
        $region175: #{tpu_custom_call.1} parent=131 // pred_region
          %951 = dma.done [#allocation18], 16
        $region176: #{tpu_custom_call.1} parent=131 // pred_fallthru
          _
        // Predicated region
        $region177: #{tpu_custom_call.1} parent=131 // pred_check
          %p952 = pneg %p394
        $region178: #{tpu_custom_call.1} parent=131 // pred_check_branch
          %954 = sbr.rel (%p952) target = $region180
        $region179: #{tpu_custom_call.1} parent=131 // pred_region
          %955 = dma.done [#allocation21], 16
        $region180: #{tpu_custom_call.1} parent=131 // pred_fallthru
          _
        // Predicated region
        $region181: #{tpu_custom_call.1} parent=131 // pred_check
          %p956 = pneg %p436
        $region182: #{tpu_custom_call.1} parent=131 // pred_check_branch
          %958 = sbr.rel (%p956) target = $region184
        $region183: #{tpu_custom_call.1} parent=131 // pred_region
          %959 = dma.done [#allocation21], 16
        $region184: #{tpu_custom_call.1} parent=131 // pred_fallthru
          _
        %s960 = sand.u32 %s61, 1
        %s961 = scalar_lea.sflag [#allocation3], %s960
        %s962 = sand.u32 %s61, 1
        %s963 = smul.addr %s962, 8
        %s964 = scalar_lea.vmem [#allocation2], %s963
        %p965 = pneg %p74
        %p966 = pneg %p71
        %s967 = sand.u32 %s53, 1
        %s968 = scalar_lea.sflag [#allocation6], %s967
        %s969 = sand.u32 %s87, 1
        %s970 = scalar_lea.vmem [#allocation5], %s969
        %p971 = pneg %p100
        %p972 = pneg %p97
        %p973 = pneg %p121
        %p974 = pneg %p118
        %p975 = pneg %p142
        %p976 = pneg %p139
        %p977 = pneg %p163
        %p978 = pneg %p160
        %p979 = pneg %p184
        %p980 = pneg %p181
        %p981 = pneg %p205
        %p982 = pneg %p202
        %p983 = pneg %p226
        %p984 = pneg %p223
        %p985 = pneg %p247
        %p986 = pneg %p244
        %p987 = pneg %p268
        %p988 = pneg %p265
        %p989 = pneg %p289
        %p990 = pneg %p286
        %p991 = pneg %p310
        %p992 = pneg %p307
        %p993 = pneg %p331
        %p994 = pneg %p328
        %p995 = pneg %p352
        %p996 = pneg %p349
        %p997 = pneg %p373
        %p998 = pneg %p370
        %p999 = pneg %p394
        %p1000 = pneg %p391
        %p1001 = pneg %p415
        %p1002 = pneg %p412
        %p1003 = pneg %p436
        %p1004 = pneg %p433
        %p1005 = pneg %p457
        %p1006 = pneg %p454
        %p1007 = pneg %p478
        %p1008 = pneg %p475
        %p1009 = pneg %p499
        %p1010 = pneg %p496
        %p1011 = pneg %p520
        %p1012 = pneg %p517
        %p1013 = pneg %p541
        %p1014 = pneg %p538
        %p1015 = pneg %p562
        %p1016 = pneg %p559
        %p1017 = pneg %p583
        %p1018 = pneg %p580
        %p1019 = pneg %p604
        %p1020 = pneg %p601
        %p1021 = pneg %p625
        %p1022 = pneg %p622
        %p1023 = pneg %p646
        %p1024 = pneg %p643
        %p1025 = pneg %p672
        %p1026 = pneg %p669
        %s1027 = sand.u32 %s659, 1
        %s1028 = scalar_lea.sflag [#allocation4], %s1027
        %s1029 = sand.u32 %s659, 1
        %s1030 = scalar_lea.vmem [#allocation23], %s1029
        %v1031 = vld [vmem:[%s903] sm:$0xff]
        %v1032 = vld [vmem:[#allocation7] sm:$0x1]
        %v1033 = vld [vmem:[#allocation8] sm:$0x1]
        %vm1034 = vcmask 261120
        %v1035 = vsel %vm1034, %v1031, 0.0
        %1036 = vadd.xlane.f32.xlu0 %v1035
        %v1037 = vpop.xlane.xlu0 %1036
        %v1038 = vrcp.pop 32.0
        %v1039 = vmul.f32 %v1037, %v1038
        %v1040 = vsub.f32 %v1031, %v1039
        %v1041 = vmul.f32 %v1040, %v1040
        %v1042 = vsel %vm1034, %v1041, 0.0
        %1043 = vadd.xlane.f32.xlu0 %v1042
        %v1044 = vpop.xlane.xlu0 %1043
        %v1045 = vmul.f32 %v1044, %v1038
        %v1046 = vadd.f32 %v1045, 1e-12
        %v1047 = vrsqrt.pop %v1046
        %v1048 = vmul.f32 %v1040, %v1047
        %v1050 = vlaneseq
        %v1051 = vshrl.u32 %v1050, 7
        %v1052 = vsub.s32 0, %v1051
        %v1053 = vrot.slane %v1032, %v1052
        %v1055 = vmul.f32 %v1048, %v1053
        %v1057 = vlaneseq
        %v1058 = vshrl.u32 %v1057, 7
        %v1059 = vsub.s32 0, %v1058
        %v1060 = vrot.slane %v1033, %v1059
        %v1062 = vadd.f32 %v1055, %v1060
        %v1063 = vld [vmem:[%s911] sm:$0x1]
        %v1064 = vsub.f32 1.0, %v1063
        %v1065 = vmul.f32 %v1064, -1e+09
        %v1067 = vlaneseq
        %v1068 = vshrl.u32 %v1067, 7
        %v1069 = vsub.s32 0, %v1068
        %v1070 = vrot.slane %v1065, %v1069
        %v1072 = vld [vmem:[%s4] sm:$0xff]
        %v1073 = vld [vmem:[%s4 + $0x8] sm:$0xff]
        %v1074 = vld [vmem:[%s4 + $0x10] sm:$0xff]
        %v1075 = vld [vmem:[%s4 + $0x18] sm:$0xff]
        %v1076 = vld [vmem:[#allocation10] sm:$0x1]
        %v1078 = vlaneseq
        %v1079 = vshrl.u32 %v1078, 7
        %v1080 = vsub.s32 0, %v1079
        %v1081 = vrot.slane %v1076, %v1080
        %v1084 = vsel %vm1034, %v1062, 0
        %1086 = vmatprep.subr.mxu0 0.0
        %1087 = vmatpush1.msra.mxu0 %v1072
        %1088 = vmatprep.subr.mxu0 0.0
        %1089 = vmatpush1.msra.mxu0 %v1073
        %1090 = vmatprep.subr.mxu0 0.0
        %1091 = vmatpush1.msra.mxu0 %v1074
        %1092 = vmatprep.subr.mxu0 0.0
        %1093 = vmatpush1.msra.mxu0 %v1075
        %1094 = vmatprep.subr.mxu0 0.0
        %1095 = vmatpush1.msra.mxu0 0.0
        %1096 = vmatprep.subr.mxu0 0.0
        %1097 = vmatpush1.msra.mxu0 0.0
        %1098 = vmatprep.subr.mxu0 0.0
        %1099 = vmatpush1.msra.mxu0 0.0
        %1100 = vmatprep.subr.mxu0 0.0
        %1101 = vmatpush1.msra.mxu0 0.0
        %1102 = vmatprep.subr.mxu0 0.0
        %1103 = vmatpush1.msra.mxu0 0.0
        %1104 = vmatprep.subr.mxu0 0.0
        %1105 = vmatpush1.msra.mxu0 0.0
        %1106 = vmatprep.subr.mxu0 0.0
        %1107 = vmatpush1.msra.mxu0 0.0
        %1108 = vmatprep.subr.mxu0 0.0
        %1109 = vmatpush1.msra.mxu0 0.0
        %1110 = vmatprep.subr.mxu0 0.0
        %1111 = vmatpush1.msra.mxu0 0.0
        %1112 = vmatprep.subr.mxu0 0.0
        %1113 = vmatpush1.msra.mxu0 0.0
        %1114 = vmatprep.subr.mxu0 0.0
        %1115 = vmatpush1.msra.mxu0 0.0
        %1116 = vmatprep.subr.mxu0 0.0
        %1117 = vmatpush1.msra.mxu0 0.0
        %1118 = vmatprep.subr.mxu0 0.0
        %1119 = vmatpush1.msra.mxu0 0.0
        %1120 = vmatprep.subr.mxu0 0.0
        %1121 = vmatpush1.msra.mxu0 0.0
        %1122 = vmatprep.subr.mxu0 0.0
        %1123 = vmatpush1.msra.mxu0 0.0
        %1124 = vmatprep.subr.mxu0 0.0
        %1125 = vmatpush1.msra.mxu0 0.0
        %1126 = vmatprep.subr.mxu0 0.0
        %1127 = vmatpush1.msra.mxu0 0.0
        %1128 = vmatprep.subr.mxu0 0.0
        %1129 = vmatpush1.msra.mxu0 0.0
        %1130 = vmatprep.subr.mxu0 0.0
        %1131 = vmatpush1.msra.mxu0 0.0
        %1132 = vmatprep.subr.mxu0 0.0
        %1133 = vmatpush1.msra.mxu0 0.0
        %1134 = vmatprep.subr.mxu0 0.0
        %1135 = vmatpush1.msra.mxu0 0.0
        %1136 = vmatprep.subr.mxu0 0.0
        %1137 = vmatpush1.msra.mxu0 0.0
        %1138 = vmatprep.subr.mxu0 0.0
        %1139 = vmatpush1.msra.mxu0 0.0
        %1140 = vmatprep.subr.mxu0 0.0
        %1141 = vmatpush1.msra.mxu0 0.0
        %1142 = vmatprep.subr.mxu0 0.0
        %1143 = vmatpush1.msra.mxu0 0.0
        %1144 = vmatprep.subr.mxu0 0.0
        %1145 = vmatpush1.msra.mxu0 0.0
        %1146 = vmatprep.subr.mxu0 0.0
        %1147 = vmatpush1.msra.mxu0 0.0
        %1148 = vmatprep.subr.mxu0 0.0
        %1149 = vmatpush1.msra.mxu0 0.0
        %1150 = vmatprep.mubr.f32.mxu0 0.0
        %1151 = vmatmul.mubr.f32.gmra.mrb[0].mxu0 %v1084
        %v1152 = vpop.f32.mrb[0].mxu0
        %v1153 = vadd.f32 %v1081, %v1152
        %v1154 = vpop.f32.mrb[0].mxu0
        %1155 = vdwg.mxu0
        %v1156 = vmul.f32 %v1153, 0.25
        %v1157 = vld [vmem:[%s6] sm:$0xff]
        %v1158 = vld [vmem:[%s6 + $0x8] sm:$0xff]
        %v1159 = vld [vmem:[%s6 + $0x10] sm:$0xff]
        %v1160 = vld [vmem:[%s6 + $0x18] sm:$0xff]
        %1162 = vrot.lane.b32.xlu0 %v1153, 96
        %v1163 = vpop.permute.xlu0 %1162
        %vm1164 = vcmask 130048
        %v1166 = vsel %vm1164, %v1156, 0
        %v1168 = vsel %vm1164, %v1163, 0
        %1170 = vmatprep.subr.mxu0 0.0
        %1171 = vmatpush1.xpose.msra.mxu0 %v1168
        %1172 = vmatprep.subr.mxu0 0.0
        %1173 = vmatpush1.xpose.msra.mxu0 0.0
        %1174 = vmatprep.subr.mxu0 0.0
        %1175 = vmatpush1.xpose.msra.mxu0 0.0
        %1176 = vmatprep.subr.mxu0 0.0
        %1177 = vmatpush1.xpose.msra.mxu0 0.0
        %1178 = vmatprep.subr.mxu0 0.0
        %1179 = vmatpush1.xpose.msra.mxu0 0.0
        %1180 = vmatprep.subr.mxu0 0.0
        %1181 = vmatpush1.xpose.msra.mxu0 0.0
        %1182 = vmatprep.subr.mxu0 0.0
        %1183 = vmatpush1.xpose.msra.mxu0 0.0
        %1184 = vmatprep.subr.mxu0 0.0
        %1185 = vmatpush1.xpose.msra.mxu0 0.0
        %1186 = vmatprep.subr.mxu0 0.0
        %1187 = vmatpush1.xpose.msra.mxu0 0.0
        %1188 = vmatprep.subr.mxu0 0.0
        %1189 = vmatpush1.xpose.msra.mxu0 0.0
        %1190 = vmatprep.subr.mxu0 0.0
        %1191 = vmatpush1.xpose.msra.mxu0 0.0
        %1192 = vmatprep.subr.mxu0 0.0
        %1193 = vmatpush1.xpose.msra.mxu0 0.0
        %1194 = vmatprep.subr.mxu0 0.0
        %1195 = vmatpush1.xpose.msra.mxu0 0.0
        %1196 = vmatprep.subr.mxu0 0.0
        %1197 = vmatpush1.xpose.msra.mxu0 0.0
        %1198 = vmatprep.subr.mxu0 0.0
        %1199 = vmatpush1.xpose.msra.mxu0 0.0
        %1200 = vmatprep.subr.mxu0 0.0
        %1201 = vmatpush1.xpose.msra.mxu0 0.0
        %1202 = vmatprep.subr.mxu0 0.0
        %1203 = vmatpush1.xpose.msra.mxu0 0.0
        %1204 = vmatprep.subr.mxu0 0.0
        %1205 = vmatpush1.xpose.msra.mxu0 0.0
        %1206 = vmatprep.subr.mxu0 0.0
        %1207 = vmatpush1.xpose.msra.mxu0 0.0
        %1208 = vmatprep.subr.mxu0 0.0
        %1209 = vmatpush1.xpose.msra.mxu0 0.0
        %1210 = vmatprep.subr.mxu0 0.0
        %1211 = vmatpush1.xpose.msra.mxu0 0.0
        %1212 = vmatprep.subr.mxu0 0.0
        %1213 = vmatpush1.xpose.msra.mxu0 0.0
        %1214 = vmatprep.subr.mxu0 0.0
        %1215 = vmatpush1.xpose.msra.mxu0 0.0
        %1216 = vmatprep.subr.mxu0 0.0
        %1217 = vmatpush1.xpose.msra.mxu0 0.0
        %1218 = vmatprep.subr.mxu0 0.0
        %1219 = vmatpush1.xpose.msra.mxu0 0.0
        %1220 = vmatprep.subr.mxu0 0.0
        %1221 = vmatpush1.xpose.msra.mxu0 0.0
        %1222 = vmatprep.subr.mxu0 0.0
        %1223 = vmatpush1.xpose.msra.mxu0 0.0
        %1224 = vmatprep.subr.mxu0 0.0
        %1225 = vmatpush1.xpose.msra.mxu0 0.0
        %1226 = vmatprep.subr.mxu0 0.0
        %1227 = vmatpush1.xpose.msra.mxu0 0.0
        %1228 = vmatprep.subr.mxu0 0.0
        %1229 = vmatpush1.xpose.msra.mxu0 0.0
        %1230 = vmatprep.subr.mxu0 0.0
        %1231 = vmatpush1.xpose.msra.mxu0 0.0
        %1232 = vmatprep.subr.mxu0 0.0
        %1233 = vmatpush1.xpose.msra.mxu0 0.0
        %1234 = vmatprep.mubr.f32.mxu0 0.0
        %1235 = vmatmul.mubr.f32.gmra.mrb[0].mxu0 %v1166
        %v1236 = vpop.f32.mrb[0].mxu0
        %v1237 = vadd.f32 %v1070, %v1236
        %v1238 = vpop.f32.mrb[0].mxu0
        %1239 = vdwg.mxu0
        %vm1240 = vcmask 64512
        %v1241 = vsel %vm1240, %v1237, -inf
        %1242 = vmax.xlane.f32.xlu0 %v1241
        %v1243 = vpop.xlane.xlu0 %1242
        %v1244 = vsub.f32 %v1237, %v1243
        %v1245 = vmul.f32 %v1244, 1.442695
        %v1246 = vpow.pop %v1245
        %v1247 = vsel %vm1240, %v1246, 0.0
        %1248 = vadd.xlane.f32.xlu0 %v1247
        %v1249 = vpop.xlane.xlu0 %1248
        %v1250 = vrcp.pop %v1249
        %v1251 = vmul.f32 %v1246, %v1250
        %1252 = vrot.lane.b32.xlu0 %v1153, 64
        %v1253 = vpop.permute.xlu0 %1252
        %v1256 = vsel %vm1240, %v1251, 0
        %1258 = vmatprep.subr.mxu0 0.0
        %1259 = vmatpush1.msra.mxu0 %v1253
        %1260 = vmatprep.subr.mxu0 0.0
        %1261 = vmatpush1.msra.mxu0 0.0
        %1262 = vmatprep.subr.mxu0 0.0
        %1263 = vmatpush1.msra.mxu0 0.0
        %1264 = vmatprep.subr.mxu0 0.0
        %1265 = vmatpush1.msra.mxu0 0.0
        %1266 = vmatprep.subr.mxu0 0.0
        %1267 = vmatpush1.msra.mxu0 0.0
        %1268 = vmatprep.subr.mxu0 0.0
        %1269 = vmatpush1.msra.mxu0 0.0
        %1270 = vmatprep.subr.mxu0 0.0
        %1271 = vmatpush1.msra.mxu0 0.0
        %1272 = vmatprep.subr.mxu0 0.0
        %1273 = vmatpush1.msra.mxu0 0.0
        %1274 = vmatprep.subr.mxu0 0.0
        %1275 = vmatpush1.msra.mxu0 0.0
        %1276 = vmatprep.subr.mxu0 0.0
        %1277 = vmatpush1.msra.mxu0 0.0
        %1278 = vmatprep.subr.mxu0 0.0
        %1279 = vmatpush1.msra.mxu0 0.0
        %1280 = vmatprep.subr.mxu0 0.0
        %1281 = vmatpush1.msra.mxu0 0.0
        %1282 = vmatprep.subr.mxu0 0.0
        %1283 = vmatpush1.msra.mxu0 0.0
        %1284 = vmatprep.subr.mxu0 0.0
        %1285 = vmatpush1.msra.mxu0 0.0
        %1286 = vmatprep.subr.mxu0 0.0
        %1287 = vmatpush1.msra.mxu0 0.0
        %1288 = vmatprep.subr.mxu0 0.0
        %1289 = vmatpush1.msra.mxu0 0.0
        %1290 = vmatprep.subr.mxu0 0.0
        %1291 = vmatpush1.msra.mxu0 0.0
        %1292 = vmatprep.subr.mxu0 0.0
        %1293 = vmatpush1.msra.mxu0 0.0
        %1294 = vmatprep.subr.mxu0 0.0
        %1295 = vmatpush1.msra.mxu0 0.0
        %1296 = vmatprep.subr.mxu0 0.0
        %1297 = vmatpush1.msra.mxu0 0.0
        %1298 = vmatprep.subr.mxu0 0.0
        %1299 = vmatpush1.msra.mxu0 0.0
        %1300 = vmatprep.subr.mxu0 0.0
        %1301 = vmatpush1.msra.mxu0 0.0
        %1302 = vmatprep.subr.mxu0 0.0
        %1303 = vmatpush1.msra.mxu0 0.0
        %1304 = vmatprep.subr.mxu0 0.0
        %1305 = vmatpush1.msra.mxu0 0.0
        %1306 = vmatprep.subr.mxu0 0.0
        %1307 = vmatpush1.msra.mxu0 0.0
        %1308 = vmatprep.subr.mxu0 0.0
        %1309 = vmatpush1.msra.mxu0 0.0
        %1310 = vmatprep.subr.mxu0 0.0
        %1311 = vmatpush1.msra.mxu0 0.0
        %1312 = vmatprep.subr.mxu0 0.0
        %1313 = vmatpush1.msra.mxu0 0.0
        %1314 = vmatprep.subr.mxu0 0.0
        %1315 = vmatpush1.msra.mxu0 0.0
        %1316 = vmatprep.subr.mxu0 0.0
        %1317 = vmatpush1.msra.mxu0 0.0
        %1318 = vmatprep.subr.mxu0 0.0
        %1319 = vmatpush1.msra.mxu0 0.0
        %1320 = vmatprep.subr.mxu0 0.0
        %1321 = vmatpush1.msra.mxu0 0.0
        %1322 = vmatprep.mubr.f32.mxu0 0.0
        %1323 = vmatmul.mubr.f32.gmra.mrb[0].mxu0 %v1256
        %v1324 = vpop.f32.mrb[0].mxu0
        %v1325 = vadd.f32 0.0, %v1324
        %v1326 = vpop.f32.mrb[0].mxu0
        %1327 = vdwg.mxu0
        %1328 = vrot.lane.b32.xlu0 %v1156, 112
        %v1329 = vpop.permute.xlu0 %1328
        %1330 = vrot.lane.b32.xlu0 %v1153, 80
        %v1331 = vpop.permute.xlu0 %1330
        %v1332 = vsel %vm1164, %v1329, 0
        %v1334 = vsel %vm1164, %v1331, 0
        %1336 = vmatprep.subr.mxu0 0.0
        %1337 = vmatpush1.xpose.msra.mxu0 %v1334
        %1338 = vmatprep.subr.mxu0 0.0
        %1339 = vmatpush1.xpose.msra.mxu0 0.0
        %1340 = vmatprep.subr.mxu0 0.0
        %1341 = vmatpush1.xpose.msra.mxu0 0.0
        %1342 = vmatprep.subr.mxu0 0.0
        %1343 = vmatpush1.xpose.msra.mxu0 0.0
        %1344 = vmatprep.subr.mxu0 0.0
        %1345 = vmatpush1.xpose.msra.mxu0 0.0
        %1346 = vmatprep.subr.mxu0 0.0
        %1347 = vmatpush1.xpose.msra.mxu0 0.0
        %1348 = vmatprep.subr.mxu0 0.0
        %1349 = vmatpush1.xpose.msra.mxu0 0.0
        %1350 = vmatprep.subr.mxu0 0.0
        %1351 = vmatpush1.xpose.msra.mxu0 0.0
        %1352 = vmatprep.subr.mxu0 0.0
        %1353 = vmatpush1.xpose.msra.mxu0 0.0
        %1354 = vmatprep.subr.mxu0 0.0
        %1355 = vmatpush1.xpose.msra.mxu0 0.0
        %1356 = vmatprep.subr.mxu0 0.0
        %1357 = vmatpush1.xpose.msra.mxu0 0.0
        %1358 = vmatprep.subr.mxu0 0.0
        %1359 = vmatpush1.xpose.msra.mxu0 0.0
        %1360 = vmatprep.subr.mxu0 0.0
        %1361 = vmatpush1.xpose.msra.mxu0 0.0
        %1362 = vmatprep.subr.mxu0 0.0
        %1363 = vmatpush1.xpose.msra.mxu0 0.0
        %1364 = vmatprep.subr.mxu0 0.0
        %1365 = vmatpush1.xpose.msra.mxu0 0.0
        %1366 = vmatprep.subr.mxu0 0.0
        %1367 = vmatpush1.xpose.msra.mxu0 0.0
        %1368 = vmatprep.subr.mxu0 0.0
        %1369 = vmatpush1.xpose.msra.mxu0 0.0
        %1370 = vmatprep.subr.mxu0 0.0
        %1371 = vmatpush1.xpose.msra.mxu0 0.0
        %1372 = vmatprep.subr.mxu0 0.0
        %1373 = vmatpush1.xpose.msra.mxu0 0.0
        %1374 = vmatprep.subr.mxu0 0.0
        %1375 = vmatpush1.xpose.msra.mxu0 0.0
        %1376 = vmatprep.subr.mxu0 0.0
        %1377 = vmatpush1.xpose.msra.mxu0 0.0
        %1378 = vmatprep.subr.mxu0 0.0
        %1379 = vmatpush1.xpose.msra.mxu0 0.0
        %1380 = vmatprep.subr.mxu0 0.0
        %1381 = vmatpush1.xpose.msra.mxu0 0.0
        %1382 = vmatprep.subr.mxu0 0.0
        %1383 = vmatpush1.xpose.msra.mxu0 0.0
        %1384 = vmatprep.subr.mxu0 0.0
        %1385 = vmatpush1.xpose.msra.mxu0 0.0
        %1386 = vmatprep.subr.mxu0 0.0
        %1387 = vmatpush1.xpose.msra.mxu0 0.0
        %1388 = vmatprep.subr.mxu0 0.0
        %1389 = vmatpush1.xpose.msra.mxu0 0.0
        %1390 = vmatprep.subr.mxu0 0.0
        %1391 = vmatpush1.xpose.msra.mxu0 0.0
        %1392 = vmatprep.subr.mxu0 0.0
        %1393 = vmatpush1.xpose.msra.mxu0 0.0
        %1394 = vmatprep.subr.mxu0 0.0
        %1395 = vmatpush1.xpose.msra.mxu0 0.0
        %1396 = vmatprep.subr.mxu0 0.0
        %1397 = vmatpush1.xpose.msra.mxu0 0.0
        %1398 = vmatprep.subr.mxu0 0.0
        %1399 = vmatpush1.xpose.msra.mxu0 0.0
        %1400 = vmatprep.mubr.f32.mxu0 0.0
        %1401 = vmatmul.mubr.f32.gmra.mrb[0].mxu0 %v1332
        %v1402 = vpop.f32.mrb[0].mxu0
        %v1403 = vadd.f32 %v1070, %v1402
        %v1404 = vpop.f32.mrb[0].mxu0
        %1405 = vdwg.mxu0
        %v1406 = vsel %vm1240, %v1403, -inf
        %1407 = vmax.xlane.f32.xlu0 %v1406
        %v1408 = vpop.xlane.xlu0 %1407
        %v1409 = vsub.f32 %v1403, %v1408
        %v1410 = vmul.f32 %v1409, 1.442695
        %v1411 = vpow.pop %v1410
        %v1412 = vsel %vm1240, %v1411, 0.0
        %1413 = vadd.xlane.f32.xlu0 %v1412
        %v1414 = vpop.xlane.xlu0 %1413
        %v1415 = vrcp.pop %v1414
        %v1416 = vmul.f32 %v1411, %v1415
        %1417 = vrot.lane.b32.xlu0 %v1153, 48
        %v1418 = vpop.permute.xlu0 %1417
        %v1421 = vsel %vm1240, %v1416, 0
        %1423 = vmatprep.subr.mxu0 0.0
        %1424 = vmatpush1.msra.mxu0 %v1418
        %1425 = vmatprep.subr.mxu0 0.0
        %1426 = vmatpush1.msra.mxu0 0.0
        %1427 = vmatprep.subr.mxu0 0.0
        %1428 = vmatpush1.msra.mxu0 0.0
        %1429 = vmatprep.subr.mxu0 0.0
        %1430 = vmatpush1.msra.mxu0 0.0
        %1431 = vmatprep.subr.mxu0 0.0
        %1432 = vmatpush1.msra.mxu0 0.0
        %1433 = vmatprep.subr.mxu0 0.0
        %1434 = vmatpush1.msra.mxu0 0.0
        %1435 = vmatprep.subr.mxu0 0.0
        %1436 = vmatpush1.msra.mxu0 0.0
        %1437 = vmatprep.subr.mxu0 0.0
        %1438 = vmatpush1.msra.mxu0 0.0
        %1439 = vmatprep.subr.mxu0 0.0
        %1440 = vmatpush1.msra.mxu0 0.0
        %1441 = vmatprep.subr.mxu0 0.0
        %1442 = vmatpush1.msra.mxu0 0.0
        %1443 = vmatprep.subr.mxu0 0.0
        %1444 = vmatpush1.msra.mxu0 0.0
        %1445 = vmatprep.subr.mxu0 0.0
        %1446 = vmatpush1.msra.mxu0 0.0
        %1447 = vmatprep.subr.mxu0 0.0
        %1448 = vmatpush1.msra.mxu0 0.0
        %1449 = vmatprep.subr.mxu0 0.0
        %1450 = vmatpush1.msra.mxu0 0.0
        %1451 = vmatprep.subr.mxu0 0.0
        %1452 = vmatpush1.msra.mxu0 0.0
        %1453 = vmatprep.subr.mxu0 0.0
        %1454 = vmatpush1.msra.mxu0 0.0
        %1455 = vmatprep.subr.mxu0 0.0
        %1456 = vmatpush1.msra.mxu0 0.0
        %1457 = vmatprep.subr.mxu0 0.0
        %1458 = vmatpush1.msra.mxu0 0.0
        %1459 = vmatprep.subr.mxu0 0.0
        %1460 = vmatpush1.msra.mxu0 0.0
        %1461 = vmatprep.subr.mxu0 0.0
        %1462 = vmatpush1.msra.mxu0 0.0
        %1463 = vmatprep.subr.mxu0 0.0
        %1464 = vmatpush1.msra.mxu0 0.0
        %1465 = vmatprep.subr.mxu0 0.0
        %1466 = vmatpush1.msra.mxu0 0.0
        %1467 = vmatprep.subr.mxu0 0.0
        %1468 = vmatpush1.msra.mxu0 0.0
        %1469 = vmatprep.subr.mxu0 0.0
        %1470 = vmatpush1.msra.mxu0 0.0
        %1471 = vmatprep.subr.mxu0 0.0
        %1472 = vmatpush1.msra.mxu0 0.0
        %1473 = vmatprep.subr.mxu0 0.0
        %1474 = vmatpush1.msra.mxu0 0.0
        %1475 = vmatprep.subr.mxu0 0.0
        %1476 = vmatpush1.msra.mxu0 0.0
        %1477 = vmatprep.subr.mxu0 0.0
        %1478 = vmatpush1.msra.mxu0 0.0
        %1479 = vmatprep.subr.mxu0 0.0
        %1480 = vmatpush1.msra.mxu0 0.0
        %1481 = vmatprep.subr.mxu0 0.0
        %1482 = vmatpush1.msra.mxu0 0.0
        %1483 = vmatprep.subr.mxu0 0.0
        %1484 = vmatpush1.msra.mxu0 0.0
        %1485 = vmatprep.subr.mxu0 0.0
        %1486 = vmatpush1.msra.mxu0 0.0
        %1487 = vmatprep.mubr.f32.mxu0 0.0
        %1488 = vmatmul.mubr.f32.gmra.mrb[0].mxu0 %v1421
        %v1489 = vpop.f32.mrb[0].mxu0
        %v1490 = vadd.f32 0.0, %v1489
        %v1491 = vpop.f32.mrb[0].mxu0
        %1492 = vdwg.mxu0
        %v1494 = vsel %vm1164, %v1490, 0
        %1496 = vmatprep.subr.mxu0 0.0
        %1497 = vmatpush1.msra.mxu0 %v1159
        %1498 = vmatprep.subr.mxu0 0.0
        %1499 = vmatpush1.msra.mxu0 %v1160
        %1500 = vmatprep.subr.mxu0 0.0
        %1501 = vmatpush1.msra.mxu0 0.0
        %1502 = vmatprep.subr.mxu0 0.0
        %1503 = vmatpush1.msra.mxu0 0.0
        %1504 = vmatprep.subr.mxu0 0.0
        %1505 = vmatpush1.msra.mxu0 0.0
        %1506 = vmatprep.subr.mxu0 0.0
        %1507 = vmatpush1.msra.mxu0 0.0
        %1508 = vmatprep.subr.mxu0 0.0
        %1509 = vmatpush1.msra.mxu0 0.0
        %1510 = vmatprep.subr.mxu0 0.0
        %1511 = vmatpush1.msra.mxu0 0.0
        %1512 = vmatprep.subr.mxu0 0.0
        %1513 = vmatpush1.msra.mxu0 0.0
        %1514 = vmatprep.subr.mxu0 0.0
        %1515 = vmatpush1.msra.mxu0 0.0
        %1516 = vmatprep.subr.mxu0 0.0
        %1517 = vmatpush1.msra.mxu0 0.0
        %1518 = vmatprep.subr.mxu0 0.0
        %1519 = vmatpush1.msra.mxu0 0.0
        %1520 = vmatprep.subr.mxu0 0.0
        %1521 = vmatpush1.msra.mxu0 0.0
        %1522 = vmatprep.subr.mxu0 0.0
        %1523 = vmatpush1.msra.mxu0 0.0
        %1524 = vmatprep.subr.mxu0 0.0
        %1525 = vmatpush1.msra.mxu0 0.0
        %1526 = vmatprep.subr.mxu0 0.0
        %1527 = vmatpush1.msra.mxu0 0.0
        %1528 = vmatprep.subr.mxu0 0.0
        %1529 = vmatpush1.msra.mxu0 0.0
        %1530 = vmatprep.subr.mxu0 0.0
        %1531 = vmatpush1.msra.mxu0 0.0
        %1532 = vmatprep.subr.mxu0 0.0
        %1533 = vmatpush1.msra.mxu0 0.0
        %1534 = vmatprep.subr.mxu0 0.0
        %1535 = vmatpush1.msra.mxu0 0.0
        %1536 = vmatprep.subr.mxu0 0.0
        %1537 = vmatpush1.msra.mxu0 0.0
        %1538 = vmatprep.subr.mxu0 0.0
        %1539 = vmatpush1.msra.mxu0 0.0
        %1540 = vmatprep.subr.mxu0 0.0
        %1541 = vmatpush1.msra.mxu0 0.0
        %1542 = vmatprep.subr.mxu0 0.0
        %1543 = vmatpush1.msra.mxu0 0.0
        %1544 = vmatprep.subr.mxu0 0.0
        %1545 = vmatpush1.msra.mxu0 0.0
        %1546 = vmatprep.subr.mxu0 0.0
        %1547 = vmatpush1.msra.mxu0 0.0
        %1548 = vmatprep.subr.mxu0 0.0
        %1549 = vmatpush1.msra.mxu0 0.0
        %1550 = vmatprep.subr.mxu0 0.0
        %1551 = vmatpush1.msra.mxu0 0.0
        %1552 = vmatprep.subr.mxu0 0.0
        %1553 = vmatpush1.msra.mxu0 0.0
        %1554 = vmatprep.subr.mxu0 0.0
        %1555 = vmatpush1.msra.mxu0 0.0
        %1556 = vmatprep.subr.mxu0 0.0
        %1557 = vmatpush1.msra.mxu0 0.0
        %1558 = vmatprep.subr.mxu0 0.0
        %1559 = vmatpush1.msra.mxu0 0.0
        %1560 = vmatprep.mubr.f32.mxu0 0.0
        %1561 = vmatmul.mubr.f32.gmra.mrb[0].mxu0 %v1494
        %v1562 = vpop.f32.mrb[0].mxu0
        %v1563 = vadd.f32 0.0, %v1562
        %v1564 = vpop.f32.mrb[0].mxu0
        %1565 = vdwg.mxu0
        %v1567 = vsel %vm1164, %v1325, 0
        %1569 = vmatprep.subr.mxu0 0.0
        %1570 = vmatpush1.msra.mxu0 %v1157
        %1571 = vmatprep.subr.mxu0 0.0
        %1572 = vmatpush1.msra.mxu0 %v1158
        %1573 = vmatprep.subr.mxu0 0.0
        %1574 = vmatpush1.msra.mxu0 0.0
        %1575 = vmatprep.subr.mxu0 0.0
        %1576 = vmatpush1.msra.mxu0 0.0
        %1577 = vmatprep.subr.mxu0 0.0
        %1578 = vmatpush1.msra.mxu0 0.0
        %1579 = vmatprep.subr.mxu0 0.0
        %1580 = vmatpush1.msra.mxu0 0.0
        %1581 = vmatprep.subr.mxu0 0.0
        %1582 = vmatpush1.msra.mxu0 0.0
        %1583 = vmatprep.subr.mxu0 0.0
        %1584 = vmatpush1.msra.mxu0 0.0
        %1585 = vmatprep.subr.mxu0 0.0
        %1586 = vmatpush1.msra.mxu0 0.0
        %1587 = vmatprep.subr.mxu0 0.0
        %1588 = vmatpush1.msra.mxu0 0.0
        %1589 = vmatprep.subr.mxu0 0.0
        %1590 = vmatpush1.msra.mxu0 0.0
        %1591 = vmatprep.subr.mxu0 0.0
        %1592 = vmatpush1.msra.mxu0 0.0
        %1593 = vmatprep.subr.mxu0 0.0
        %1594 = vmatpush1.msra.mxu0 0.0
        %1595 = vmatprep.subr.mxu0 0.0
        %1596 = vmatpush1.msra.mxu0 0.0
        %1597 = vmatprep.subr.mxu0 0.0
        %1598 = vmatpush1.msra.mxu0 0.0
        %1599 = vmatprep.subr.mxu0 0.0
        %1600 = vmatpush1.msra.mxu0 0.0
        %1601 = vmatprep.subr.mxu0 0.0
        %1602 = vmatpush1.msra.mxu0 0.0
        %1603 = vmatprep.subr.mxu0 0.0
        %1604 = vmatpush1.msra.mxu0 0.0
        %1605 = vmatprep.subr.mxu0 0.0
        %1606 = vmatpush1.msra.mxu0 0.0
        %1607 = vmatprep.subr.mxu0 0.0
        %1608 = vmatpush1.msra.mxu0 0.0
        %1609 = vmatprep.subr.mxu0 0.0
        %1610 = vmatpush1.msra.mxu0 0.0
        %1611 = vmatprep.subr.mxu0 0.0
        %1612 = vmatpush1.msra.mxu0 0.0
        %1613 = vmatprep.subr.mxu0 0.0
        %1614 = vmatpush1.msra.mxu0 0.0
        %1615 = vmatprep.subr.mxu0 0.0
        %1616 = vmatpush1.msra.mxu0 0.0
        %1617 = vmatprep.subr.mxu0 0.0
        %1618 = vmatpush1.msra.mxu0 0.0
        %1619 = vmatprep.subr.mxu0 0.0
        %1620 = vmatpush1.msra.mxu0 0.0
        %1621 = vmatprep.subr.mxu0 0.0
        %1622 = vmatpush1.msra.mxu0 0.0
        %1623 = vmatprep.subr.mxu0 0.0
        %1624 = vmatpush1.msra.mxu0 0.0
        %1625 = vmatprep.subr.mxu0 0.0
        %1626 = vmatpush1.msra.mxu0 0.0
        %1627 = vmatprep.subr.mxu0 0.0
        %1628 = vmatpush1.msra.mxu0 0.0
        %1629 = vmatprep.subr.mxu0 0.0
        %1630 = vmatpush1.msra.mxu0 0.0
        %1631 = vmatprep.subr.mxu0 0.0
        %1632 = vmatpush1.msra.mxu0 0.0
        %1633 = vmatprep.mubr.f32.mxu0 0.0
        %1634 = vmatmul.mubr.f32.gmra.mrb[0].mxu0 %v1567
        %v1635 = vpop.f32.mrb[0].mxu0
        %v1636 = vadd.f32 %v1563, %v1635
        %v1637 = vpop.f32.mrb[0].mxu0
        %1638 = vdwg.mxu0
        %v1639 = vadd.f32 %v1062, %v1636
        %v1640 = vld [vmem:[#allocation11] sm:$0x1]
        %v1642 = vlaneseq
        %v1643 = vshrl.u32 %v1642, 7
        %v1644 = vsub.s32 0, %v1643
        %v1645 = vrot.slane %v1640, %v1644
        %v1647 = vadd.f32 %v1639, %v1645
        %v1648 = vld [vmem:[#allocation13] sm:$0x1]
        %v1649 = vld [vmem:[#allocation14] sm:$0x1]
        %v1650 = vsel %vm1034, %v1647, 0.0
        %1651 = vadd.xlane.f32.xlu0 %v1650
        %v1652 = vpop.xlane.xlu0 %1651
        %v1653 = vmul.f32 %v1652, %v1038
        %v1654 = vsub.f32 %v1647, %v1653
        %v1655 = vmul.f32 %v1654, %v1654
        %v1656 = vsel %vm1034, %v1655, 0.0
        %1657 = vadd.xlane.f32.xlu0 %v1656
        %v1658 = vpop.xlane.xlu0 %1657
        %v1659 = vmul.f32 %v1658, %v1038
        %v1660 = vadd.f32 %v1659, 1e-12
        %v1661 = vrsqrt.pop %v1660
        %v1662 = vmul.f32 %v1654, %v1661
        %v1664 = vlaneseq
        %v1665 = vshrl.u32 %v1664, 7
        %v1666 = vsub.s32 0, %v1665
        %v1667 = vrot.slane %v1648, %v1666
        %v1669 = vmul.f32 %v1662, %v1667
        %v1671 = vlaneseq
        %v1672 = vshrl.u32 %v1671, 7
        %v1673 = vsub.s32 0, %v1672
        %v1674 = vrot.slane %v1649, %v1673
        %v1676 = vadd.f32 %v1669, %v1674
        %v1677 = vld [vmem:[%s10] sm:$0xff]
        %v1678 = vld [vmem:[%s10 + $0x8] sm:$0xff]
        %v1679 = vld [vmem:[%s10 + $0x10] sm:$0xff]
        %v1680 = vld [vmem:[%s10 + $0x18] sm:$0xff]
        %v1681 = vld [vmem:[#allocation16] sm:$0x1]
        %v1683 = vlaneseq
        %v1684 = vshrl.u32 %v1683, 7
        %v1685 = vsub.s32 0, %v1684
        %v1686 = vrot.slane %v1681, %v1685
        %v1689 = vsel %vm1034, %v1676, 0
        %1691 = vmatprep.subr.mxu0 0.0
        %1692 = vmatpush1.msra.mxu0 %v1677
        %1693 = vmatprep.subr.mxu0 0.0
        %1694 = vmatpush1.msra.mxu0 %v1678
        %1695 = vmatprep.subr.mxu0 0.0
        %1696 = vmatpush1.msra.mxu0 %v1679
        %1697 = vmatprep.subr.mxu0 0.0
        %1698 = vmatpush1.msra.mxu0 %v1680
        %1699 = vmatprep.subr.mxu0 0.0
        %1700 = vmatpush1.msra.mxu0 0.0
        %1701 = vmatprep.subr.mxu0 0.0
        %1702 = vmatpush1.msra.mxu0 0.0
        %1703 = vmatprep.subr.mxu0 0.0
        %1704 = vmatpush1.msra.mxu0 0.0
        %1705 = vmatprep.subr.mxu0 0.0
        %1706 = vmatpush1.msra.mxu0 0.0
        %1707 = vmatprep.subr.mxu0 0.0
        %1708 = vmatpush1.msra.mxu0 0.0
        %1709 = vmatprep.subr.mxu0 0.0
        %1710 = vmatpush1.msra.mxu0 0.0
        %1711 = vmatprep.subr.mxu0 0.0
        %1712 = vmatpush1.msra.mxu0 0.0
        %1713 = vmatprep.subr.mxu0 0.0
        %1714 = vmatpush1.msra.mxu0 0.0
        %1715 = vmatprep.subr.mxu0 0.0
        %1716 = vmatpush1.msra.mxu0 0.0
        %1717 = vmatprep.subr.mxu0 0.0
        %1718 = vmatpush1.msra.mxu0 0.0
        %1719 = vmatprep.subr.mxu0 0.0
        %1720 = vmatpush1.msra.mxu0 0.0
        %1721 = vmatprep.subr.mxu0 0.0
        %1722 = vmatpush1.msra.mxu0 0.0
        %1723 = vmatprep.subr.mxu0 0.0
        %1724 = vmatpush1.msra.mxu0 0.0
        %1725 = vmatprep.subr.mxu0 0.0
        %1726 = vmatpush1.msra.mxu0 0.0
        %1727 = vmatprep.subr.mxu0 0.0
        %1728 = vmatpush1.msra.mxu0 0.0
        %1729 = vmatprep.subr.mxu0 0.0
        %1730 = vmatpush1.msra.mxu0 0.0
        %1731 = vmatprep.subr.mxu0 0.0
        %1732 = vmatpush1.msra.mxu0 0.0
        %1733 = vmatprep.subr.mxu0 0.0
        %1734 = vmatpush1.msra.mxu0 0.0
        %1735 = vmatprep.subr.mxu0 0.0
        %1736 = vmatpush1.msra.mxu0 0.0
        %1737 = vmatprep.subr.mxu0 0.0
        %1738 = vmatpush1.msra.mxu0 0.0
        %1739 = vmatprep.subr.mxu0 0.0
        %1740 = vmatpush1.msra.mxu0 0.0
        %1741 = vmatprep.subr.mxu0 0.0
        %1742 = vmatpush1.msra.mxu0 0.0
        %1743 = vmatprep.subr.mxu0 0.0
        %1744 = vmatpush1.msra.mxu0 0.0
        %1745 = vmatprep.subr.mxu0 0.0
        %1746 = vmatpush1.msra.mxu0 0.0
        %1747 = vmatprep.subr.mxu0 0.0
        %1748 = vmatpush1.msra.mxu0 0.0
        %1749 = vmatprep.subr.mxu0 0.0
        %1750 = vmatpush1.msra.mxu0 0.0
        %1751 = vmatprep.subr.mxu0 0.0
        %1752 = vmatpush1.msra.mxu0 0.0
        %1753 = vmatprep.subr.mxu0 0.0
        %1754 = vmatpush1.msra.mxu0 0.0
        %1755 = vmatprep.mubr.f32.mxu0 0.0
        %1756 = vmatmul.mubr.f32.gmra.mrb[0].mxu0 %v1689
        %v1757 = vpop.f32.mrb[0].mxu0
        %v1758 = vadd.f32 %v1686, %v1757
        %v1759 = vpop.f32.mrb[0].mxu0
        %1760 = vdwg.mxu0
        %v1761 = vmul.f32 %v1758, 0.5
        %v1762 = vmul.f32 %v1758, 0.044715
        %v1763 = vmul.f32 %v1762, %v1758
        %v1764 = vmul.f32 %v1763, %v1758
        %v1765 = vadd.f32 %v1758, %v1764
        %v1766 = vmul.f32 %v1765, 0.7978846
        %v1767 = vtanh.pop %v1766
        %v1768 = vadd.f32 %v1767, 1.0
        %v1769 = vmul.f32 %v1761, %v1768
        %v1770 = vld [vmem:[%s12] sm:$0xff]
        %v1771 = vld [vmem:[%s12 + $0x8] sm:$0xff]
        %v1772 = vld [vmem:[%s12 + $0x10] sm:$0xff]
        %v1773 = vld [vmem:[%s12 + $0x18] sm:$0xff]
        %v1774 = vld [vmem:[%s12 + $0x20] sm:$0xff]
        %v1775 = vld [vmem:[%s12 + $0x28] sm:$0xff]
        %v1776 = vld [vmem:[%s12 + $0x30] sm:$0xff]
        %v1777 = vld [vmem:[%s12 + $0x38] sm:$0xff]
        %v1778 = vld [vmem:[#allocation17] sm:$0x1]
        %v1780 = vlaneseq
        %v1781 = vshrl.u32 %v1780, 7
        %v1782 = vsub.s32 0, %v1781
        %v1783 = vrot.slane %v1778, %v1782
        %vm1785 = vcmask 523264
        %v1787 = vsel %vm1785, %v1769, 0
        %1789 = vmatprep.subr.mxu0 0.0
        %1790 = vmatpush1.msra.mxu0 %v1770
        %1791 = vmatprep.subr.mxu0 0.0
        %1792 = vmatpush1.msra.mxu0 %v1771
        %1793 = vmatprep.subr.mxu0 0.0
        %1794 = vmatpush1.msra.mxu0 %v1772
        %1795 = vmatprep.subr.mxu0 0.0
        %1796 = vmatpush1.msra.mxu0 %v1773
        %1797 = vmatprep.subr.mxu0 0.0
        %1798 = vmatpush1.msra.mxu0 %v1774
        %1799 = vmatprep.subr.mxu0 0.0
        %1800 = vmatpush1.msra.mxu0 %v1775
        %1801 = vmatprep.subr.mxu0 0.0
        %1802 = vmatpush1.msra.mxu0 %v1776
        %1803 = vmatprep.subr.mxu0 0.0
        %1804 = vmatpush1.msra.mxu0 %v1777
        %1805 = vmatprep.subr.mxu0 0.0
        %1806 = vmatpush1.msra.mxu0 0.0
        %1807 = vmatprep.subr.mxu0 0.0
        %1808 = vmatpush1.msra.mxu0 0.0
        %1809 = vmatprep.subr.mxu0 0.0
        %1810 = vmatpush1.msra.mxu0 0.0
        %1811 = vmatprep.subr.mxu0 0.0
        %1812 = vmatpush1.msra.mxu0 0.0
        %1813 = vmatprep.subr.mxu0 0.0
        %1814 = vmatpush1.msra.mxu0 0.0
        %1815 = vmatprep.subr.mxu0 0.0
        %1816 = vmatpush1.msra.mxu0 0.0
        %1817 = vmatprep.subr.mxu0 0.0
        %1818 = vmatpush1.msra.mxu0 0.0
        %1819 = vmatprep.subr.mxu0 0.0
        %1820 = vmatpush1.msra.mxu0 0.0
        %1821 = vmatprep.subr.mxu0 0.0
        %1822 = vmatpush1.msra.mxu0 0.0
        %1823 = vmatprep.subr.mxu0 0.0
        %1824 = vmatpush1.msra.mxu0 0.0
        %1825 = vmatprep.subr.mxu0 0.0
        %1826 = vmatpush1.msra.mxu0 0.0
        %1827 = vmatprep.subr.mxu0 0.0
        %1828 = vmatpush1.msra.mxu0 0.0
        %1829 = vmatprep.subr.mxu0 0.0
        %1830 = vmatpush1.msra.mxu0 0.0
        %1831 = vmatprep.subr.mxu0 0.0
        %1832 = vmatpush1.msra.mxu0 0.0
        %1833 = vmatprep.subr.mxu0 0.0
        %1834 = vmatpush1.msra.mxu0 0.0
        %1835 = vmatprep.subr.mxu0 0.0
        %1836 = vmatpush1.msra.mxu0 0.0
        %1837 = vmatprep.subr.mxu0 0.0
        %1838 = vmatpush1.msra.mxu0 0.0
        %1839 = vmatprep.subr.mxu0 0.0
        %1840 = vmatpush1.msra.mxu0 0.0
        %1841 = vmatprep.subr.mxu0 0.0
        %1842 = vmatpush1.msra.mxu0 0.0
        %1843 = vmatprep.subr.mxu0 0.0
        %1844 = vmatpush1.msra.mxu0 0.0
        %1845 = vmatprep.subr.mxu0 0.0
        %1846 = vmatpush1.msra.mxu0 0.0
        %1847 = vmatprep.subr.mxu0 0.0
        %1848 = vmatpush1.msra.mxu0 0.0
        %1849 = vmatprep.subr.mxu0 0.0
        %1850 = vmatpush1.msra.mxu0 0.0
        %1851 = vmatprep.subr.mxu0 0.0
        %1852 = vmatpush1.msra.mxu0 0.0
        %1853 = vmatprep.mubr.f32.mxu0 0.0
        %1854 = vmatmul.mubr.f32.gmra.mrb[0].mxu0 %v1787
        %v1855 = vpop.f32.mrb[0].mxu0
        %v1856 = vadd.f32 %v1783, %v1855
        %v1857 = vpop.f32.mrb[0].mxu0
        %1858 = vdwg.mxu0
        %v1859 = vadd.f32 %v1676, %v1856
        %v1860 = vld [vmem:[#allocation19] sm:$0x1]
        %v1861 = vld [vmem:[#allocation20] sm:$0x1]
        %v1862 = vsel %vm1034, %v1859, 0.0
        %1863 = vadd.xlane.f32.xlu0 %v1862
        %v1864 = vpop.xlane.xlu0 %1863
        %v1865 = vmul.f32 %v1864, %v1038
        %v1866 = vsub.f32 %v1859, %v1865
        %v1867 = vmul.f32 %v1866, %v1866
        %v1868 = vsel %vm1034, %v1867, 0.0
        %1869 = vadd.xlane.f32.xlu0 %v1868
        %v1870 = vpop.xlane.xlu0 %1869
        %v1871 = vmul.f32 %v1870, %v1038
        %v1872 = vadd.f32 %v1871, 1e-12
        %v1873 = vrsqrt.pop %v1872
        %v1874 = vmul.f32 %v1866, %v1873
        %v1876 = vlaneseq
        %v1877 = vshrl.u32 %v1876, 7
        %v1878 = vsub.s32 0, %v1877
        %v1879 = vrot.slane %v1860, %v1878
        %v1881 = vmul.f32 %v1874, %v1879
        %v1883 = vlaneseq
        %v1884 = vshrl.u32 %v1883, 7
        %v1885 = vsub.s32 0, %v1884
        %v1886 = vrot.slane %v1861, %v1885
        %v1888 = vadd.f32 %v1881, %v1886
        %v1889 = vld [vmem:[%s16] sm:$0xff]
        %v1890 = vld [vmem:[%s16 + $0x8] sm:$0xff]
        %v1891 = vld [vmem:[%s16 + $0x10] sm:$0xff]
        %v1892 = vld [vmem:[%s16 + $0x18] sm:$0xff]
        %v1893 = vld [vmem:[#allocation22] sm:$0x1]
        %v1895 = vlaneseq
        %v1896 = vshrl.u32 %v1895, 7
        %v1897 = vsub.s32 0, %v1896
        %v1898 = vrot.slane %v1893, %v1897
        %v1901 = vsel %vm1034, %v1888, 0
        %1903 = vmatprep.subr.mxu0 0.0
        %1904 = vmatpush1.msra.mxu0 %v1889
        %1905 = vmatprep.subr.mxu0 0.0
        %1906 = vmatpush1.msra.mxu0 %v1890
        %1907 = vmatprep.subr.mxu0 0.0
        %1908 = vmatpush1.msra.mxu0 %v1891
        %1909 = vmatprep.subr.mxu0 0.0
        %1910 = vmatpush1.msra.mxu0 %v1892
        %1911 = vmatprep.subr.mxu0 0.0
        %1912 = vmatpush1.msra.mxu0 0.0
        %1913 = vmatprep.subr.mxu0 0.0
        %1914 = vmatpush1.msra.mxu0 0.0
        %1915 = vmatprep.subr.mxu0 0.0
        %1916 = vmatpush1.msra.mxu0 0.0
        %1917 = vmatprep.subr.mxu0 0.0
        %1918 = vmatpush1.msra.mxu0 0.0
        %1919 = vmatprep.subr.mxu0 0.0
        %1920 = vmatpush1.msra.mxu0 0.0
        %1921 = vmatprep.subr.mxu0 0.0
        %1922 = vmatpush1.msra.mxu0 0.0
        %1923 = vmatprep.subr.mxu0 0.0
        %1924 = vmatpush1.msra.mxu0 0.0
        %1925 = vmatprep.subr.mxu0 0.0
        %1926 = vmatpush1.msra.mxu0 0.0
        %1927 = vmatprep.subr.mxu0 0.0
        %1928 = vmatpush1.msra.mxu0 0.0
        %1929 = vmatprep.subr.mxu0 0.0
        %1930 = vmatpush1.msra.mxu0 0.0
        %1931 = vmatprep.subr.mxu0 0.0
        %1932 = vmatpush1.msra.mxu0 0.0
        %1933 = vmatprep.subr.mxu0 0.0
        %1934 = vmatpush1.msra.mxu0 0.0
        %1935 = vmatprep.subr.mxu0 0.0
        %1936 = vmatpush1.msra.mxu0 0.0
        %1937 = vmatprep.subr.mxu0 0.0
        %1938 = vmatpush1.msra.mxu0 0.0
        %1939 = vmatprep.subr.mxu0 0.0
        %1940 = vmatpush1.msra.mxu0 0.0
        %1941 = vmatprep.subr.mxu0 0.0
        %1942 = vmatpush1.msra.mxu0 0.0
        %1943 = vmatprep.subr.mxu0 0.0
        %1944 = vmatpush1.msra.mxu0 0.0
        %1945 = vmatprep.subr.mxu0 0.0
        %1946 = vmatpush1.msra.mxu0 0.0
        %1947 = vmatprep.subr.mxu0 0.0
        %1948 = vmatpush1.msra.mxu0 0.0
        %1949 = vmatprep.subr.mxu0 0.0
        %1950 = vmatpush1.msra.mxu0 0.0
        %1951 = vmatprep.subr.mxu0 0.0
        %1952 = vmatpush1.msra.mxu0 0.0
        %1953 = vmatprep.subr.mxu0 0.0
        %1954 = vmatpush1.msra.mxu0 0.0
        %1955 = vmatprep.subr.mxu0 0.0
        %1956 = vmatpush1.msra.mxu0 0.0
        %1957 = vmatprep.subr.mxu0 0.0
        %1958 = vmatpush1.msra.mxu0 0.0
        %1959 = vmatprep.subr.mxu0 0.0
        %1960 = vmatpush1.msra.mxu0 0.0
        %1961 = vmatprep.subr.mxu0 0.0
        %1962 = vmatpush1.msra.mxu0 0.0
        %1963 = vmatprep.subr.mxu0 0.0
        %1964 = vmatpush1.msra.mxu0 0.0
        %1965 = vmatprep.subr.mxu0 0.0
        %1966 = vmatpush1.msra.mxu0 0.0
        %1967 = vmatprep.mubr.f32.mxu0 0.0
        %1968 = vmatmul.mubr.f32.gmra.mrb[0].mxu0 %v1901
        %v1969 = vpop.f32.mrb[0].mxu0
        %v1970 = vadd.f32 %v1898, %v1969
        %v1971 = vpop.f32.mrb[0].mxu0
        %1972 = vdwg.mxu0
        %v1973 = vmul.f32 %v1970, 0.25
        %v1974 = vld [vmem:[%s18] sm:$0xff]
        %v1975 = vld [vmem:[%s18 + $0x8] sm:$0xff]
        %v1976 = vld [vmem:[%s18 + $0x10] sm:$0xff]
        %v1977 = vld [vmem:[%s18 + $0x18] sm:$0xff]
        %1979 = vrot.lane.b32.xlu0 %v1970, 96
        %v1980 = vpop.permute.xlu0 %1979
        %v1982 = vsel %vm1164, %v1973, 0
        %v1984 = vsel %vm1164, %v1980, 0
        %1986 = vmatprep.subr.mxu0 0.0
        %1987 = vmatpush1.xpose.msra.mxu0 %v1984
        %1988 = vmatprep.subr.mxu0 0.0
        %1989 = vmatpush1.xpose.msra.mxu0 0.0
        %1990 = vmatprep.subr.mxu0 0.0
        %1991 = vmatpush1.xpose.msra.mxu0 0.0
        %1992 = vmatprep.subr.mxu0 0.0
        %1993 = vmatpush1.xpose.msra.mxu0 0.0
        %1994 = vmatprep.subr.mxu0 0.0
        %1995 = vmatpush1.xpose.msra.mxu0 0.0
        %1996 = vmatprep.subr.mxu0 0.0
        %1997 = vmatpush1.xpose.msra.mxu0 0.0
        %1998 = vmatprep.subr.mxu0 0.0
        %1999 = vmatpush1.xpose.msra.mxu0 0.0
        %2000 = vmatprep.subr.mxu0 0.0
        %2001 = vmatpush1.xpose.msra.mxu0 0.0
        %2002 = vmatprep.subr.mxu0 0.0
        %2003 = vmatpush1.xpose.msra.mxu0 0.0
        %2004 = vmatprep.subr.mxu0 0.0
        %2005 = vmatpush1.xpose.msra.mxu0 0.0
        %2006 = vmatprep.subr.mxu0 0.0
        %2007 = vmatpush1.xpose.msra.mxu0 0.0
        %2008 = vmatprep.subr.mxu0 0.0
        %2009 = vmatpush1.xpose.msra.mxu0 0.0
        %2010 = vmatprep.subr.mxu0 0.0
        %2011 = vmatpush1.xpose.msra.mxu0 0.0
        %2012 = vmatprep.subr.mxu0 0.0
        %2013 = vmatpush1.xpose.msra.mxu0 0.0
        %2014 = vmatprep.subr.mxu0 0.0
        %2015 = vmatpush1.xpose.msra.mxu0 0.0
        %2016 = vmatprep.subr.mxu0 0.0
        %2017 = vmatpush1.xpose.msra.mxu0 0.0
        %2018 = vmatprep.subr.mxu0 0.0
        %2019 = vmatpush1.xpose.msra.mxu0 0.0
        %2020 = vmatprep.subr.mxu0 0.0
        %2021 = vmatpush1.xpose.msra.mxu0 0.0
        %2022 = vmatprep.subr.mxu0 0.0
        %2023 = vmatpush1.xpose.msra.mxu0 0.0
        %2024 = vmatprep.subr.mxu0 0.0
        %2025 = vmatpush1.xpose.msra.mxu0 0.0
        %2026 = vmatprep.subr.mxu0 0.0
        %2027 = vmatpush1.xpose.msra.mxu0 0.0
        %2028 = vmatprep.subr.mxu0 0.0
        %2029 = vmatpush1.xpose.msra.mxu0 0.0
        %2030 = vmatprep.subr.mxu0 0.0
        %2031 = vmatpush1.xpose.msra.mxu0 0.0
        %2032 = vmatprep.subr.mxu0 0.0
        %2033 = vmatpush1.xpose.msra.mxu0 0.0
        %2034 = vmatprep.subr.mxu0 0.0
        %2035 = vmatpush1.xpose.msra.mxu0 0.0
        %2036 = vmatprep.subr.mxu0 0.0
        %2037 = vmatpush1.xpose.msra.mxu0 0.0
        %2038 = vmatprep.subr.mxu0 0.0
        %2039 = vmatpush1.xpose.msra.mxu0 0.0
        %2040 = vmatprep.subr.mxu0 0.0
        %2041 = vmatpush1.xpose.msra.mxu0 0.0
        %2042 = vmatprep.subr.mxu0 0.0
        %2043 = vmatpush1.xpose.msra.mxu0 0.0
        %2044 = vmatprep.subr.mxu0 0.0
        %2045 = vmatpush1.xpose.msra.mxu0 0.0
        %2046 = vmatprep.subr.mxu0 0.0
        %2047 = vmatpush1.xpose.msra.mxu0 0.0
        %2048 = vmatprep.subr.mxu0 0.0
        %2049 = vmatpush1.xpose.msra.mxu0 0.0
        %2050 = vmatprep.mubr.f32.mxu0 0.0
        %2051 = vmatmul.mubr.f32.gmra.mrb[0].mxu0 %v1982
        %v2052 = vpop.f32.mrb[0].mxu0
        %v2053 = vadd.f32 %v1070, %v2052
        %v2054 = vpop.f32.mrb[0].mxu0
        %2055 = vdwg.mxu0
        %v2056 = vsel %vm1240, %v2053, -inf
        %2057 = vmax.xlane.f32.xlu0 %v2056
        %v2058 = vpop.xlane.xlu0 %2057
        %v2059 = vsub.f32 %v2053, %v2058
        %v2060 = vmul.f32 %v2059, 1.442695
        %v2061 = vpow.pop %v2060
        %v2062 = vsel %vm1240, %v2061, 0.0
        %2063 = vadd.xlane.f32.xlu0 %v2062
        %v2064 = vpop.xlane.xlu0 %2063
        %v2065 = vrcp.pop %v2064
        %v2066 = vmul.f32 %v2061, %v2065
        %2067 = vrot.lane.b32.xlu0 %v1970, 64
        %v2068 = vpop.permute.xlu0 %2067
        %v2071 = vsel %vm1240, %v2066, 0
        %2073 = vmatprep.subr.mxu0 0.0
        %2074 = vmatpush1.msra.mxu0 %v2068
        %2075 = vmatprep.subr.mxu0 0.0
        %2076 = vmatpush1.msra.mxu0 0.0
        %2077 = vmatprep.subr.mxu0 0.0
        %2078 = vmatpush1.msra.mxu0 0.0
        %2079 = vmatprep.subr.mxu0 0.0
        %2080 = vmatpush1.msra.mxu0 0.0
        %2081 = vmatprep.subr.mxu0 0.0
        %2082 = vmatpush1.msra.mxu0 0.0
        %2083 = vmatprep.subr.mxu0 0.0
        %2084 = vmatpush1.msra.mxu0 0.0
        %2085 = vmatprep.subr.mxu0 0.0
        %2086 = vmatpush1.msra.mxu0 0.0
        %2087 = vmatprep.subr.mxu0 0.0
        %2088 = vmatpush1.msra.mxu0 0.0
        %2089 = vmatprep.subr.mxu0 0.0
        %2090 = vmatpush1.msra.mxu0 0.0
        %2091 = vmatprep.subr.mxu0 0.0
        %2092 = vmatpush1.msra.mxu0 0.0
        %2093 = vmatprep.subr.mxu0 0.0
        %2094 = vmatpush1.msra.mxu0 0.0
        %2095 = vmatprep.subr.mxu0 0.0
        %2096 = vmatpush1.msra.mxu0 0.0
        %2097 = vmatprep.subr.mxu0 0.0
        %2098 = vmatpush1.msra.mxu0 0.0
        %2099 = vmatprep.subr.mxu0 0.0
        %2100 = vmatpush1.msra.mxu0 0.0
        %2101 = vmatprep.subr.mxu0 0.0
        %2102 = vmatpush1.msra.mxu0 0.0
        %2103 = vmatprep.subr.mxu0 0.0
        %2104 = vmatpush1.msra.mxu0 0.0
        %2105 = vmatprep.subr.mxu0 0.0
        %2106 = vmatpush1.msra.mxu0 0.0
        %2107 = vmatprep.subr.mxu0 0.0
        %2108 = vmatpush1.msra.mxu0 0.0
        %2109 = vmatprep.subr.mxu0 0.0
        %2110 = vmatpush1.msra.mxu0 0.0
        %2111 = vmatprep.subr.mxu0 0.0
        %2112 = vmatpush1.msra.mxu0 0.0
        %2113 = vmatprep.subr.mxu0 0.0
        %2114 = vmatpush1.msra.mxu0 0.0
        %2115 = vmatprep.subr.mxu0 0.0
        %2116 = vmatpush1.msra.mxu0 0.0
        %2117 = vmatprep.subr.mxu0 0.0
        %2118 = vmatpush1.msra.mxu0 0.0
        %2119 = vmatprep.subr.mxu0 0.0
        %2120 = vmatpush1.msra.mxu0 0.0
        %2121 = vmatprep.subr.mxu0 0.0
        %2122 = vmatpush1.msra.mxu0 0.0
        %2123 = vmatprep.subr.mxu0 0.0
        %2124 = vmatpush1.msra.mxu0 0.0
        %2125 = vmatprep.subr.mxu0 0.0
        %2126 = vmatpush1.msra.mxu0 0.0
        %2127 = vmatprep.subr.mxu0 0.0
        %2128 = vmatpush1.msra.mxu0 0.0
        %2129 = vmatprep.subr.mxu0 0.0
        %2130 = vmatpush1.msra.mxu0 0.0
        %2131 = vmatprep.subr.mxu0 0.0
        %2132 = vmatpush1.msra.mxu0 0.0
        %2133 = vmatprep.subr.mxu0 0.0
        %2134 = vmatpush1.msra.mxu0 0.0
        %2135 = vmatprep.subr.mxu0 0.0
        %2136 = vmatpush1.msra.mxu0 0.0
        %2137 = vmatprep.mubr.f32.mxu0 0.0
        %2138 = vmatmul.mubr.f32.gmra.mrb[0].mxu0 %v2071
        %v2139 = vpop.f32.mrb[0].mxu0
        %v2140 = vadd.f32 0.0, %v2139
        %v2141 = vpop.f32.mrb[0].mxu0
        %2142 = vdwg.mxu0
        %2143 = vrot.lane.b32.xlu0 %v1973, 112
        %v2144 = vpop.permute.xlu0 %2143
        %2145 = vrot.lane.b32.xlu0 %v1970, 80
        %v2146 = vpop.permute.xlu0 %2145
        %v2147 = vsel %vm1164, %v2144, 0
        %v2149 = vsel %vm1164, %v2146, 0
        %2151 = vmatprep.subr.mxu0 0.0
        %2152 = vmatpush1.xpose.msra.mxu0 %v2149
        %2153 = vmatprep.subr.mxu0 0.0
        %2154 = vmatpush1.xpose.msra.mxu0 0.0
        %2155 = vmatprep.subr.mxu0 0.0
        %2156 = vmatpush1.xpose.msra.mxu0 0.0
        %2157 = vmatprep.subr.mxu0 0.0
        %2158 = vmatpush1.xpose.msra.mxu0 0.0
        %2159 = vmatprep.subr.mxu0 0.0
        %2160 = vmatpush1.xpose.msra.mxu0 0.0
        %2161 = vmatprep.subr.mxu0 0.0
        %2162 = vmatpush1.xpose.msra.mxu0 0.0
        %2163 = vmatprep.subr.mxu0 0.0
        %2164 = vmatpush1.xpose.msra.mxu0 0.0
        %2165 = vmatprep.subr.mxu0 0.0
        %2166 = vmatpush1.xpose.msra.mxu0 0.0
        %2167 = vmatprep.subr.mxu0 0.0
        %2168 = vmatpush1.xpose.msra.mxu0 0.0
        %2169 = vmatprep.subr.mxu0 0.0
        %2170 = vmatpush1.xpose.msra.mxu0 0.0
        %2171 = vmatprep.subr.mxu0 0.0
        %2172 = vmatpush1.xpose.msra.mxu0 0.0
        %2173 = vmatprep.subr.mxu0 0.0
        %2174 = vmatpush1.xpose.msra.mxu0 0.0
        %2175 = vmatprep.subr.mxu0 0.0
        %2176 = vmatpush1.xpose.msra.mxu0 0.0
        %2177 = vmatprep.subr.mxu0 0.0
        %2178 = vmatpush1.xpose.msra.mxu0 0.0
        %2179 = vmatprep.subr.mxu0 0.0
        %2180 = vmatpush1.xpose.msra.mxu0 0.0
        %2181 = vmatprep.subr.mxu0 0.0
        %2182 = vmatpush1.xpose.msra.mxu0 0.0
        %2183 = vmatprep.subr.mxu0 0.0
        %2184 = vmatpush1.xpose.msra.mxu0 0.0
        %2185 = vmatprep.subr.mxu0 0.0
        %2186 = vmatpush1.xpose.msra.mxu0 0.0
        %2187 = vmatprep.subr.mxu0 0.0
        %2188 = vmatpush1.xpose.msra.mxu0 0.0
        %2189 = vmatprep.subr.mxu0 0.0
        %2190 = vmatpush1.xpose.msra.mxu0 0.0
        %2191 = vmatprep.subr.mxu0 0.0
        %2192 = vmatpush1.xpose.msra.mxu0 0.0
        %2193 = vmatprep.subr.mxu0 0.0
        %2194 = vmatpush1.xpose.msra.mxu0 0.0
        %2195 = vmatprep.subr.mxu0 0.0
        %2196 = vmatpush1.xpose.msra.mxu0 0.0
        %2197 = vmatprep.subr.mxu0 0.0
        %2198 = vmatpush1.xpose.msra.mxu0 0.0
        %2199 = vmatprep.subr.mxu0 0.0
        %2200 = vmatpush1.xpose.msra.mxu0 0.0
        %2201 = vmatprep.subr.mxu0 0.0
        %2202 = vmatpush1.xpose.msra.mxu0 0.0
        %2203 = vmatprep.subr.mxu0 0.0
        %2204 = vmatpush1.xpose.msra.mxu0 0.0
        %2205 = vmatprep.subr.mxu0 0.0
        %2206 = vmatpush1.xpose.msra.mxu0 0.0
        %2207 = vmatprep.subr.mxu0 0.0
        %2208 = vmatpush1.xpose.msra.mxu0 0.0
        %2209 = vmatprep.subr.mxu0 0.0
        %2210 = vmatpush1.xpose.msra.mxu0 0.0
        %2211 = vmatprep.subr.mxu0 0.0
        %2212 = vmatpush1.xpose.msra.mxu0 0.0
        %2213 = vmatprep.subr.mxu0 0.0
        %2214 = vmatpush1.xpose.msra.mxu0 0.0
        %2215 = vmatprep.mubr.f32.mxu0 0.0
        %2216 = vmatmul.mubr.f32.gmra.mrb[0].mxu0 %v2147
        %v2217 = vpop.f32.mrb[0].mxu0
        %v2218 = vadd.f32 %v1070, %v2217
        %v2219 = vpop.f32.mrb[0].mxu0
        %2220 = vdwg.mxu0
        %v2221 = vsel %vm1240, %v2218, -inf
        %2222 = vmax.xlane.f32.xlu0 %v2221
        %v2223 = vpop.xlane.xlu0 %2222
        %v2224 = vsub.f32 %v2218, %v2223
        %v2225 = vmul.f32 %v2224, 1.442695
        %v2226 = vpow.pop %v2225
        %v2227 = vsel %vm1240, %v2226, 0.0
        %2228 = vadd.xlane.f32.xlu0 %v2227
        %v2229 = vpop.xlane.xlu0 %2228
        %v2230 = vrcp.pop %v2229
        %v2231 = vmul.f32 %v2226, %v2230
        %2232 = vrot.lane.b32.xlu0 %v1970, 48
        %v2233 = vpop.permute.xlu0 %2232
        %v2236 = vsel %vm1240, %v2231, 0
        %2238 = vmatprep.subr.mxu0 0.0
        %2239 = vmatpush1.msra.mxu0 %v2233
        %2240 = vmatprep.subr.mxu0 0.0
        %2241 = vmatpush1.msra.mxu0 0.0
        %2242 = vmatprep.subr.mxu0 0.0
        %2243 = vmatpush1.msra.mxu0 0.0
        %2244 = vmatprep.subr.mxu0 0.0
        %2245 = vmatpush1.msra.mxu0 0.0
        %2246 = vmatprep.subr.mxu0 0.0
        %2247 = vmatpush1.msra.mxu0 0.0
        %2248 = vmatprep.subr.mxu0 0.0
        %2249 = vmatpush1.msra.mxu0 0.0
        %2250 = vmatprep.subr.mxu0 0.0
        %2251 = vmatpush1.msra.mxu0 0.0
        %2252 = vmatprep.subr.mxu0 0.0
        %2253 = vmatpush1.msra.mxu0 0.0
        %2254 = vmatprep.subr.mxu0 0.0
        %2255 = vmatpush1.msra.mxu0 0.0
        %2256 = vmatprep.subr.mxu0 0.0
        %2257 = vmatpush1.msra.mxu0 0.0
        %2258 = vmatprep.subr.mxu0 0.0
        %2259 = vmatpush1.msra.mxu0 0.0
        %2260 = vmatprep.subr.mxu0 0.0
        %2261 = vmatpush1.msra.mxu0 0.0
        %2262 = vmatprep.subr.mxu0 0.0
        %2263 = vmatpush1.msra.mxu0 0.0
        %2264 = vmatprep.subr.mxu0 0.0
        %2265 = vmatpush1.msra.mxu0 0.0
        %2266 = vmatprep.subr.mxu0 0.0
        %2267 = vmatpush1.msra.mxu0 0.0
        %2268 = vmatprep.subr.mxu0 0.0
        %2269 = vmatpush1.msra.mxu0 0.0
        %2270 = vmatprep.subr.mxu0 0.0
        %2271 = vmatpush1.msra.mxu0 0.0
        %2272 = vmatprep.subr.mxu0 0.0
        %2273 = vmatpush1.msra.mxu0 0.0
        %2274 = vmatprep.subr.mxu0 0.0
        %2275 = vmatpush1.msra.mxu0 0.0
        %2276 = vmatprep.subr.mxu0 0.0
        %2277 = vmatpush1.msra.mxu0 0.0
        %2278 = vmatprep.subr.mxu0 0.0
        %2279 = vmatpush1.msra.mxu0 0.0
        %2280 = vmatprep.subr.mxu0 0.0
        %2281 = vmatpush1.msra.mxu0 0.0
        %2282 = vmatprep.subr.mxu0 0.0
        %2283 = vmatpush1.msra.mxu0 0.0
        %2284 = vmatprep.subr.mxu0 0.0
        %2285 = vmatpush1.msra.mxu0 0.0
        %2286 = vmatprep.subr.mxu0 0.0
        %2287 = vmatpush1.msra.mxu0 0.0
        %2288 = vmatprep.subr.mxu0 0.0
        %2289 = vmatpush1.msra.mxu0 0.0
        %2290 = vmatprep.subr.mxu0 0.0
        %2291 = vmatpush1.msra.mxu0 0.0
        %2292 = vmatprep.subr.mxu0 0.0
        %2293 = vmatpush1.msra.mxu0 0.0
        %2294 = vmatprep.subr.mxu0 0.0
        %2295 = vmatpush1.msra.mxu0 0.0
        %2296 = vmatprep.subr.mxu0 0.0
        %2297 = vmatpush1.msra.mxu0 0.0
        %2298 = vmatprep.subr.mxu0 0.0
        %2299 = vmatpush1.msra.mxu0 0.0
        %2300 = vmatprep.subr.mxu0 0.0
        %2301 = vmatpush1.msra.mxu0 0.0
        %2302 = vmatprep.mubr.f32.mxu0 0.0
        %2303 = vmatmul.mubr.f32.gmra.mrb[0].mxu0 %v2236
        %v2304 = vpop.f32.mrb[0].mxu0
        %v2305 = vadd.f32 0.0, %v2304
        %v2306 = vpop.f32.mrb[0].mxu0
        %2307 = vdwg.mxu0
        %v2309 = vsel %vm1164, %v2305, 0
        %2311 = vmatprep.subr.mxu0 0.0
        %2312 = vmatpush1.msra.mxu0 %v1976
        %2313 = vmatprep.subr.mxu0 0.0
        %2314 = vmatpush1.msra.mxu0 %v1977
        %2315 = vmatprep.subr.mxu0 0.0
        %2316 = vmatpush1.msra.mxu0 0.0
        %2317 = vmatprep.subr.mxu0 0.0
        %2318 = vmatpush1.msra.mxu0 0.0
        %2319 = vmatprep.subr.mxu0 0.0
        %2320 = vmatpush1.msra.mxu0 0.0
        %2321 = vmatprep.subr.mxu0 0.0
        %2322 = vmatpush1.msra.mxu0 0.0
        %2323 = vmatprep.subr.mxu0 0.0
        %2324 = vmatpush1.msra.mxu0 0.0
        %2325 = vmatprep.subr.mxu0 0.0
        %2326 = vmatpush1.msra.mxu0 0.0
        %2327 = vmatprep.subr.mxu0 0.0
        %2328 = vmatpush1.msra.mxu0 0.0
        %2329 = vmatprep.subr.mxu0 0.0
        %2330 = vmatpush1.msra.mxu0 0.0
        %2331 = vmatprep.subr.mxu0 0.0
        %2332 = vmatpush1.msra.mxu0 0.0
        %2333 = vmatprep.subr.mxu0 0.0
        %2334 = vmatpush1.msra.mxu0 0.0
        %2335 = vmatprep.subr.mxu0 0.0
        %2336 = vmatpush1.msra.mxu0 0.0
        %2337 = vmatprep.subr.mxu0 0.0
        %2338 = vmatpush1.msra.mxu0 0.0
        %2339 = vmatprep.subr.mxu0 0.0
        %2340 = vmatpush1.msra.mxu0 0.0
        %2341 = vmatprep.subr.mxu0 0.0
        %2342 = vmatpush1.msra.mxu0 0.0
        %2343 = vmatprep.subr.mxu0 0.0
        %2344 = vmatpush1.msra.mxu0 0.0
        %2345 = vmatprep.subr.mxu0 0.0
        %2346 = vmatpush1.msra.mxu0 0.0
        %2347 = vmatprep.subr.mxu0 0.0
        %2348 = vmatpush1.msra.mxu0 0.0
        %2349 = vmatprep.subr.mxu0 0.0
        %2350 = vmatpush1.msra.mxu0 0.0
        %2351 = vmatprep.subr.mxu0 0.0
        %2352 = vmatpush1.msra.mxu0 0.0
        %2353 = vmatprep.subr.mxu0 0.0
        %2354 = vmatpush1.msra.mxu0 0.0
        %2355 = vmatprep.subr.mxu0 0.0
        %2356 = vmatpush1.msra.mxu0 0.0
        %2357 = vmatprep.subr.mxu0 0.0
        %2358 = vmatpush1.msra.mxu0 0.0
        %2359 = vmatprep.subr.mxu0 0.0
        %2360 = vmatpush1.msra.mxu0 0.0
        %2361 = vmatprep.subr.mxu0 0.0
        %2362 = vmatpush1.msra.mxu0 0.0
        %2363 = vmatprep.subr.mxu0 0.0
        %2364 = vmatpush1.msra.mxu0 0.0
        %2365 = vmatprep.subr.mxu0 0.0
        %2366 = vmatpush1.msra.mxu0 0.0
        %2367 = vmatprep.subr.mxu0 0.0
        %2368 = vmatpush1.msra.mxu0 0.0
        %2369 = vmatprep.subr.mxu0 0.0
        %2370 = vmatpush1.msra.mxu0 0.0
        %2371 = vmatprep.subr.mxu0 0.0
        %2372 = vmatpush1.msra.mxu0 0.0
        %2373 = vmatprep.subr.mxu0 0.0
        %2374 = vmatpush1.msra.mxu0 0.0
        %2375 = vmatprep.mubr.f32.mxu0 0.0
        %2376 = vmatmul.mubr.f32.gmra.mrb[0].mxu0 %v2309
        %v2377 = vpop.f32.mrb[0].mxu0
        %v2378 = vadd.f32 0.0, %v2377
        %v2379 = vpop.f32.mrb[0].mxu0
        %2380 = vdwg.mxu0
        %v2382 = vsel %vm1164, %v2140, 0
        %2384 = vmatprep.subr.mxu0 0.0
        %2385 = vmatpush1.msra.mxu0 %v1974
        %2386 = vmatprep.subr.mxu0 0.0
        %2387 = vmatpush1.msra.mxu0 %v1975
        %2388 = vmatprep.subr.mxu0 0.0
        %2389 = vmatpush1.msra.mxu0 0.0
        %2390 = vmatprep.subr.mxu0 0.0
        %2391 = vmatpush1.msra.mxu0 0.0
        %2392 = vmatprep.subr.mxu0 0.0
        %2393 = vmatpush1.msra.mxu0 0.0
        %2394 = vmatprep.subr.mxu0 0.0
        %2395 = vmatpush1.msra.mxu0 0.0
        %2396 = vmatprep.subr.mxu0 0.0
        %2397 = vmatpush1.msra.mxu0 0.0
        %2398 = vmatprep.subr.mxu0 0.0
        %2399 = vmatpush1.msra.mxu0 0.0
        %2400 = vmatprep.subr.mxu0 0.0
        %2401 = vmatpush1.msra.mxu0 0.0
        %2402 = vmatprep.subr.mxu0 0.0
        %2403 = vmatpush1.msra.mxu0 0.0
        %2404 = vmatprep.subr.mxu0 0.0
        %2405 = vmatpush1.msra.mxu0 0.0
        %2406 = vmatprep.subr.mxu0 0.0
        %2407 = vmatpush1.msra.mxu0 0.0
        %2408 = vmatprep.subr.mxu0 0.0
        %2409 = vmatpush1.msra.mxu0 0.0
        %2410 = vmatprep.subr.mxu0 0.0
        %2411 = vmatpush1.msra.mxu0 0.0
        %2412 = vmatprep.subr.mxu0 0.0
        %2413 = vmatpush1.msra.mxu0 0.0
        %2414 = vmatprep.subr.mxu0 0.0
        %2415 = vmatpush1.msra.mxu0 0.0
        %2416 = vmatprep.subr.mxu0 0.0
        %2417 = vmatpush1.msra.mxu0 0.0
        %2418 = vmatprep.subr.mxu0 0.0
        %2419 = vmatpush1.msra.mxu0 0.0
        %2420 = vmatprep.subr.mxu0 0.0
        %2421 = vmatpush1.msra.mxu0 0.0
        %2422 = vmatprep.subr.mxu0 0.0
        %2423 = vmatpush1.msra.mxu0 0.0
        %2424 = vmatprep.subr.mxu0 0.0
        %2425 = vmatpush1.msra.mxu0 0.0
        %2426 = vmatprep.subr.mxu0 0.0
        %2427 = vmatpush1.msra.mxu0 0.0
        %2428 = vmatprep.subr.mxu0 0.0
        %2429 = vmatpush1.msra.mxu0 0.0
        %2430 = vmatprep.subr.mxu0 0.0
        %2431 = vmatpush1.msra.mxu0 0.0
        %2432 = vmatprep.subr.mxu0 0.0
        %2433 = vmatpush1.msra.mxu0 0.0
        %2434 = vmatprep.subr.mxu0 0.0
        %2435 = vmatpush1.msra.mxu0 0.0
        %2436 = vmatprep.subr.mxu0 0.0
        %2437 = vmatpush1.msra.mxu0 0.0
        %2438 = vmatprep.subr.mxu0 0.0
        %2439 = vmatpush1.msra.mxu0 0.0
        %2440 = vmatprep.subr.mxu0 0.0
        %2441 = vmatpush1.msra.mxu0 0.0
        %2442 = vmatprep.subr.mxu0 0.0
        %2443 = vmatpush1.msra.mxu0 0.0
        %2444 = vmatprep.subr.mxu0 0.0
        %2445 = vmatpush1.msra.mxu0 0.0
        %2446 = vmatprep.subr.mxu0 0.0
        %2447 = vmatpush1.msra.mxu0 0.0
        %2448 = vmatprep.mubr.f32.mxu0 0.0
        %2449 = vmatmul.mubr.f32.gmra.mrb[0].mxu0 %v2382
        %v2450 = vpop.f32.mrb[0].mxu0
        %v2451 = vadd.f32 %v2378, %v2450
        %v2452 = vpop.f32.mrb[0].mxu0
        %2453 = vdwg.mxu0
        %v2454 = vadd.f32 %v1888, %v2451
        %v2455 = vld [vmem:[%s19] sm:$0x1]
        %v2457 = vlaneseq
        %v2458 = vshrl.u32 %v2457, 7
        %v2459 = vsub.s32 0, %v2458
        %v2460 = vrot.slane %v2455, %v2459
        %v2462 = vadd.f32 %v2454, %v2460
        %v2463 = vld [vmem:[%s20] sm:$0x1]
        %v2464 = vld [vmem:[%s21] sm:$0x1]
        %v2465 = vsel %vm1034, %v2462, 0.0
        %2466 = vadd.xlane.f32.xlu0 %v2465
        %v2467 = vpop.xlane.xlu0 %2466
        %v2468 = vmul.f32 %v2467, %v1038
        %v2469 = vsub.f32 %v2462, %v2468
        %v2470 = vmul.f32 %v2469, %v2469
        %v2471 = vsel %vm1034, %v2470, 0.0
        %2472 = vadd.xlane.f32.xlu0 %v2471
        %v2473 = vpop.xlane.xlu0 %2472
        %v2474 = vmul.f32 %v2473, %v1038
        %v2475 = vadd.f32 %v2474, 1e-12
        %v2476 = vrsqrt.pop %v2475
        %v2477 = vmul.f32 %v2469, %v2476
        %v2479 = vlaneseq
        %v2480 = vshrl.u32 %v2479, 7
        %v2481 = vsub.s32 0, %v2480
        %v2482 = vrot.slane %v2463, %v2481
        %v2484 = vmul.f32 %v2477, %v2482
        %v2486 = vlaneseq
        %v2487 = vshrl.u32 %v2486, 7
        %v2488 = vsub.s32 0, %v2487
        %v2489 = vrot.slane %v2464, %v2488
        %v2491 = vadd.f32 %v2484, %v2489
        %v2492 = vld [vmem:[%s22] sm:$0xff]
        %v2493 = vld [vmem:[%s22 + $0x8] sm:$0xff]
        %v2494 = vld [vmem:[%s22 + $0x10] sm:$0xff]
        %v2495 = vld [vmem:[%s22 + $0x18] sm:$0xff]
        %v2496 = vld [vmem:[%s23] sm:$0x1]
        %v2498 = vlaneseq
        %v2499 = vshrl.u32 %v2498, 7
        %v2500 = vsub.s32 0, %v2499
        %v2501 = vrot.slane %v2496, %v2500
        %v2504 = vsel %vm1034, %v2491, 0
        %2506 = vmatprep.subr.mxu0 0.0
        %2507 = vmatpush1.msra.mxu0 %v2492
        %2508 = vmatprep.subr.mxu0 0.0
        %2509 = vmatpush1.msra.mxu0 %v2493
        %2510 = vmatprep.subr.mxu0 0.0
        %2511 = vmatpush1.msra.mxu0 %v2494
        %2512 = vmatprep.subr.mxu0 0.0
        %2513 = vmatpush1.msra.mxu0 %v2495
        %2514 = vmatprep.subr.mxu0 0.0
        %2515 = vmatpush1.msra.mxu0 0.0
        %2516 = vmatprep.subr.mxu0 0.0
        %2517 = vmatpush1.msra.mxu0 0.0
        %2518 = vmatprep.subr.mxu0 0.0
        %2519 = vmatpush1.msra.mxu0 0.0
        %2520 = vmatprep.subr.mxu0 0.0
        %2521 = vmatpush1.msra.mxu0 0.0
        %2522 = vmatprep.subr.mxu0 0.0
        %2523 = vmatpush1.msra.mxu0 0.0
        %2524 = vmatprep.subr.mxu0 0.0
        %2525 = vmatpush1.msra.mxu0 0.0
        %2526 = vmatprep.subr.mxu0 0.0
        %2527 = vmatpush1.msra.mxu0 0.0
        %2528 = vmatprep.subr.mxu0 0.0
        %2529 = vmatpush1.msra.mxu0 0.0
        %2530 = vmatprep.subr.mxu0 0.0
        %2531 = vmatpush1.msra.mxu0 0.0
        %2532 = vmatprep.subr.mxu0 0.0
        %2533 = vmatpush1.msra.mxu0 0.0
        %2534 = vmatprep.subr.mxu0 0.0
        %2535 = vmatpush1.msra.mxu0 0.0
        %2536 = vmatprep.subr.mxu0 0.0
        %2537 = vmatpush1.msra.mxu0 0.0
        %2538 = vmatprep.subr.mxu0 0.0
        %2539 = vmatpush1.msra.mxu0 0.0
        %2540 = vmatprep.subr.mxu0 0.0
        %2541 = vmatpush1.msra.mxu0 0.0
        %2542 = vmatprep.subr.mxu0 0.0
        %2543 = vmatpush1.msra.mxu0 0.0
        %2544 = vmatprep.subr.mxu0 0.0
        %2545 = vmatpush1.msra.mxu0 0.0
        %2546 = vmatprep.subr.mxu0 0.0
        %2547 = vmatpush1.msra.mxu0 0.0
        %2548 = vmatprep.subr.mxu0 0.0
        %2549 = vmatpush1.msra.mxu0 0.0
        %2550 = vmatprep.subr.mxu0 0.0
        %2551 = vmatpush1.msra.mxu0 0.0
        %2552 = vmatprep.subr.mxu0 0.0
        %2553 = vmatpush1.msra.mxu0 0.0
        %2554 = vmatprep.subr.mxu0 0.0
        %2555 = vmatpush1.msra.mxu0 0.0
        %2556 = vmatprep.subr.mxu0 0.0
        %2557 = vmatpush1.msra.mxu0 0.0
        %2558 = vmatprep.subr.mxu0 0.0
        %2559 = vmatpush1.msra.mxu0 0.0
        %2560 = vmatprep.subr.mxu0 0.0
        %2561 = vmatpush1.msra.mxu0 0.0
        %2562 = vmatprep.subr.mxu0 0.0
        %2563 = vmatpush1.msra.mxu0 0.0
        %2564 = vmatprep.subr.mxu0 0.0
        %2565 = vmatpush1.msra.mxu0 0.0
        %2566 = vmatprep.subr.mxu0 0.0
        %2567 = vmatpush1.msra.mxu0 0.0
        %2568 = vmatprep.subr.mxu0 0.0
        %2569 = vmatpush1.msra.mxu0 0.0
        %2570 = vmatprep.mubr.f32.mxu0 0.0
        %2571 = vmatmul.mubr.f32.gmra.mrb[0].mxu0 %v2504
        %v2572 = vpop.f32.mrb[0].mxu0
        %v2573 = vadd.f32 %v2501, %v2572
        %v2574 = vpop.f32.mrb[0].mxu0
        %2575 = vdwg.mxu0
        %v2576 = vmul.f32 %v2573, 0.5
        %v2577 = vmul.f32 %v2573, 0.044715
        %v2578 = vmul.f32 %v2577, %v2573
        %v2579 = vmul.f32 %v2578, %v2573
        %v2580 = vadd.f32 %v2573, %v2579
        %v2581 = vmul.f32 %v2580, 0.7978846
        %v2582 = vtanh.pop %v2581
        %v2583 = vadd.f32 %v2582, 1.0
        %v2584 = vmul.f32 %v2576, %v2583
        %v2585 = vld [vmem:[%s24] sm:$0xff]
        %v2586 = vld [vmem:[%s24 + $0x8] sm:$0xff]
        %v2587 = vld [vmem:[%s24 + $0x10] sm:$0xff]
        %v2588 = vld [vmem:[%s24 + $0x18] sm:$0xff]
        %v2589 = vld [vmem:[%s24 + $0x20] sm:$0xff]
        %v2590 = vld [vmem:[%s24 + $0x28] sm:$0xff]
        %v2591 = vld [vmem:[%s24 + $0x30] sm:$0xff]
        %v2592 = vld [vmem:[%s24 + $0x38] sm:$0xff]
        %v2593 = vld [vmem:[%s25] sm:$0x1]
        %v2595 = vlaneseq
        %v2596 = vshrl.u32 %v2595, 7
        %v2597 = vsub.s32 0, %v2596
        %v2598 = vrot.slane %v2593, %v2597
        %v2601 = vsel %vm1785, %v2584, 0
        %2603 = vmatprep.subr.mxu0 0.0
        %2604 = vmatpush1.msra.mxu0 %v2585
        %2605 = vmatprep.subr.mxu0 0.0
        %2606 = vmatpush1.msra.mxu0 %v2586
        %2607 = vmatprep.subr.mxu0 0.0
        %2608 = vmatpush1.msra.mxu0 %v2587
        %2609 = vmatprep.subr.mxu0 0.0
        %2610 = vmatpush1.msra.mxu0 %v2588
        %2611 = vmatprep.subr.mxu0 0.0
        %2612 = vmatpush1.msra.mxu0 %v2589
        %2613 = vmatprep.subr.mxu0 0.0
        %2614 = vmatpush1.msra.mxu0 %v2590
        %2615 = vmatprep.subr.mxu0 0.0
        %2616 = vmatpush1.msra.mxu0 %v2591
        %2617 = vmatprep.subr.mxu0 0.0
        %2618 = vmatpush1.msra.mxu0 %v2592
        %2619 = vmatprep.subr.mxu0 0.0
        %2620 = vmatpush1.msra.mxu0 0.0
        %2621 = vmatprep.subr.mxu0 0.0
        %2622 = vmatpush1.msra.mxu0 0.0
        %2623 = vmatprep.subr.mxu0 0.0
        %2624 = vmatpush1.msra.mxu0 0.0
        %2625 = vmatprep.subr.mxu0 0.0
        %2626 = vmatpush1.msra.mxu0 0.0
        %2627 = vmatprep.subr.mxu0 0.0
        %2628 = vmatpush1.msra.mxu0 0.0
        %2629 = vmatprep.subr.mxu0 0.0
        %2630 = vmatpush1.msra.mxu0 0.0
        %2631 = vmatprep.subr.mxu0 0.0
        %2632 = vmatpush1.msra.mxu0 0.0
        %2633 = vmatprep.subr.mxu0 0.0
        %2634 = vmatpush1.msra.mxu0 0.0
        %2635 = vmatprep.subr.mxu0 0.0
        %2636 = vmatpush1.msra.mxu0 0.0
        %2637 = vmatprep.subr.mxu0 0.0
        %2638 = vmatpush1.msra.mxu0 0.0
        %2639 = vmatprep.subr.mxu0 0.0
        %2640 = vmatpush1.msra.mxu0 0.0
        %2641 = vmatprep.subr.mxu0 0.0
        %2642 = vmatpush1.msra.mxu0 0.0
        %2643 = vmatprep.subr.mxu0 0.0
        %2644 = vmatpush1.msra.mxu0 0.0
        %2645 = vmatprep.subr.mxu0 0.0
        %2646 = vmatpush1.msra.mxu0 0.0
        %2647 = vmatprep.subr.mxu0 0.0
        %2648 = vmatpush1.msra.mxu0 0.0
        %2649 = vmatprep.subr.mxu0 0.0
        %2650 = vmatpush1.msra.mxu0 0.0
        %2651 = vmatprep.subr.mxu0 0.0
        %2652 = vmatpush1.msra.mxu0 0.0
        %2653 = vmatprep.subr.mxu0 0.0
        %2654 = vmatpush1.msra.mxu0 0.0
        %2655 = vmatprep.subr.mxu0 0.0
        %2656 = vmatpush1.msra.mxu0 0.0
        %2657 = vmatprep.subr.mxu0 0.0
        %2658 = vmatpush1.msra.mxu0 0.0
        %2659 = vmatprep.subr.mxu0 0.0
        %2660 = vmatpush1.msra.mxu0 0.0
        %2661 = vmatprep.subr.mxu0 0.0
        %2662 = vmatpush1.msra.mxu0 0.0
        %2663 = vmatprep.subr.mxu0 0.0
        %2664 = vmatpush1.msra.mxu0 0.0
        %2665 = vmatprep.subr.mxu0 0.0
        %2666 = vmatpush1.msra.mxu0 0.0
        %2667 = vmatprep.mubr.f32.mxu0 0.0
        %2668 = vmatmul.mubr.f32.gmra.mrb[0].mxu0 %v2601
        %v2669 = vpop.f32.mrb[0].mxu0
        %v2670 = vadd.f32 %v2598, %v2669
        %v2671 = vpop.f32.mrb[0].mxu0
        %2672 = vdwg.mxu0
        %v2673 = vadd.f32 %v2491, %v2670
        %v2674 = vld [vmem:[%s26] sm:$0x1]
        %v2675 = vld [vmem:[%s27] sm:$0x1]
        %v2676 = vsel %vm1034, %v2673, 0.0
        %2677 = vadd.xlane.f32.xlu0 %v2676
        %v2678 = vpop.xlane.xlu0 %2677
        %v2679 = vmul.f32 %v2678, %v1038
        %v2680 = vsub.f32 %v2673, %v2679
        %v2681 = vmul.f32 %v2680, %v2680
        %v2682 = vsel %vm1034, %v2681, 0.0
        %2683 = vadd.xlane.f32.xlu0 %v2682
        %v2684 = vpop.xlane.xlu0 %2683
        %v2685 = vmul.f32 %v2684, %v1038
        %v2686 = vadd.f32 %v2685, 1e-12
        %v2687 = vrsqrt.pop %v2686
        %v2688 = vmul.f32 %v2680, %v2687
        %v2690 = vlaneseq
        %v2691 = vshrl.u32 %v2690, 7
        %v2692 = vsub.s32 0, %v2691
        %v2693 = vrot.slane %v2674, %v2692
        %v2695 = vmul.f32 %v2688, %v2693
        %v2697 = vlaneseq
        %v2698 = vshrl.u32 %v2697, 7
        %v2699 = vsub.s32 0, %v2698
        %v2700 = vrot.slane %v2675, %v2699
        %v2702 = vadd.f32 %v2695, %v2700
        %vm2703 = vcmask 258052
        %2704 = vst.msk [vmem:[%s1030 - $0x4] sm:$0x10] %vm2703, %v2702
        %2706 = vrot.lane.b32.xlu0 %v2702, 32
        %v2707 = vpop.permute.xlu0 %2706
        %vm2709 = vcmask 521477
        %2710 = vst.msk [vmem:[%s1030 - $0x5] sm:$0x20] %vm2709, %v2707
        %2711 = vrot.lane.b32.xlu0 %v2702, 64
        %v2712 = vpop.permute.xlu0 %2711
        %vm2714 = vcmask 784902
        %2715 = vst.msk [vmem:[%s1030 - $0x6] sm:$0x40] %vm2714, %v2712
        %2716 = vrot.lane.b32.xlu0 %v2702, 96
        %v2717 = vpop.permute.xlu0 %2716
        %vm2719 = vcmask 1048327
        %2720 = vst.msk [vmem:[%s1030 - $0x7] sm:$0x80] %vm2719, %v2717
        %s2721 = sand.u32 %s659, 1
        %s2722 = scalar_lea.sflag [#allocation4], %s2721
        %s2723 = sand.u32 %s659, 1
        %s2724 = scalar_lea.vmem [#allocation23], %s2723
        // Predicated region
        $region185: #{tpu_custom_call.1} parent=131 // pred_check
          %p2725 = pneg %p669
        $region186: #{tpu_custom_call.1} parent=131 // pred_check_branch
          %2727 = sbr.rel (%p2725) target = $region188
        $region187: #{tpu_custom_call.1} parent=131 // pred_region
          %s2729 = ssub.s32 16, 16
          %2730 = vsyncadd %s2722, %s2729
          %s2731 = smul.addr %s53, 16
          %s2732 = scalar_lea.hbm %s28, %s2731
          %s2734 = sshll.u32 %s2724, 4
          %s2735 = int_to_ptr.vmem [resolvable:$true] %s2734
          %2737 = dma.vmem_to_hbm [thread:$0]  %s2735, 16, %s2732, %s2722
        $region188: #{tpu_custom_call.1} parent=131 // pred_fallthru
          _
      $region132: #{tpu_custom_call.1} parent=5 // pred_fallthru
        _
      %p2738 = scmp.le.s32.totalorder 2, %s48
      // Predicated region
      $region189: #{tpu_custom_call.1} parent=5 // pred_check
        %p2739 = pneg %p2738
      $region190: #{tpu_custom_call.1} parent=5 // pred_check_branch
        %2741 = sbr.rel (%p2739) target = $region192
      $region191: #{tpu_custom_call.1} parent=5 // pred_region
        %s2742 = ssub.s32 %s48, 2
        // Predicated region
        $region193: #{tpu_custom_call.1} parent=191 // pred_check
          %p2743 = pneg %p675
        $region194: #{tpu_custom_call.1} parent=191 // pred_check_branch
          %2745 = sbr.rel (%p2743) target = $region196
        $region195: #{tpu_custom_call.1} parent=191 // pred_region
          %s2746 = sand.u32 %s660, 1
          %s2747 = scalar_lea.sflag [#allocation4], %s2746
          %s2748 = sand.u32 %s660, 1
          %s2749 = scalar_lea.vmem [#allocation23], %s2748
          %2750 = dma.done %s2747, 16
        $region196: #{tpu_custom_call.1} parent=191 // pred_fallthru
          _
      $region192: #{tpu_custom_call.1} parent=5 // pred_fallthru
        _
    $region6: #{tpu_custom_call.1} parent=1 // loop_footer
      %s52 = sadd.s32 1, %s48
    $region7: #{tpu_custom_call.1} parent=1 // loop_footer_branch
      %47 = sbr.rel target = $region3
    $region8: #{tpu_custom_call.1} parent=1 // loop_exit
      _
    %2751 = vsyncpa [#allocation3], 1
    %s2752 = scalar_lea.sflag [#allocation3], 1
    %2753 = vsyncpa %s2752, 1
    %2754 = vsyncpa [#allocation6], 1
    %s2755 = scalar_lea.sflag [#allocation6], 1
    %2756 = vsyncpa %s2755, 1
    %2757 = vsyncpa [#allocation9], 1
    %2758 = vsyncpa [#allocation12], 1
    %2759 = vsyncpa [#allocation15], 1
    %2760 = vsyncpa [#allocation18], 1
    %2761 = vsyncpa [#allocation21], 1
    %2762 = vsyncpa [#allocation4], 1
    %s2763 = scalar_lea.sflag [#allocation4], 1
    %2764 = vsyncpa %s2763, 1

</llo_original>
